<compile_context>
chip_gen: v7x
topology: tpu7x:2x2x1
jax: 0.10.0
libtpu: 0.0.40
codegen_flags: <defaults>
</compile_context>

<pallas_src>
import functools

import jax
import jax.numpy as jnp
from jax.experimental import pallas as pl
from jax.experimental.pallas import tpu as pltpu

NEG_SLOPE = 0.01            # nn.LeakyReLU default
BN_EPS = 1e-5               # nn.BatchNorm2d default

_FUSED_VMEM_BUDGET = 16 * 1024 * 1024   # resident-y fused path gate (v7x-safe)
_VMEM_CAP = 32 * 1024 * 1024


def _round_up(x, mult):
    return ((x + mult - 1) // mult) * mult


def _vmem_limit(need):
    return int(min(max(need, 4 << 20), _VMEM_CAP))


def _apply_act(y, act):
    if act == "relu":
        return jnp.maximum(y, 0.0)
    if act == "leaky":
        return jnp.where(y >= 0.0, y, NEG_SLOPE * y)
    return y


# ----------------------------------------------------------------------------
# Pallas kernel A: fully fused Conv (matmul) + BN batch-stats + act + residual
# (single grid step; everything resident in VMEM)
# ----------------------------------------------------------------------------
def _fused_conv_kernel(*refs, m, use_bn, add_bias, act, has_res):
    it = iter(refs)
    wt_ref = next(it)                      # (Cout, K)  bf16
    at_ref = next(it)                      # (K, Mp)    bf16
    b_ref = next(it) if add_bias else None  # (Cout, 1)  f32
    if use_bn:
        g_ref = next(it)                   # (Cout, 1)  f32
        bt_ref = next(it)                  # (Cout, 1)  f32
    res_ref = next(it) if has_res else None  # (Cout, Mp)
    o_ref = next(it)                       # (Cout, Mp)

    y = jnp.dot(wt_ref[...], at_ref[...], preferred_element_type=jnp.float32)
    if add_bias:
        y = y + b_ref[...]
    if use_bn:
        mp = y.shape[1]
        if mp != m:   # mask zero-padded columns out of the statistics
            col = jax.lax.broadcasted_iota(jnp.int32, (1, mp), 1)
            yv = jnp.where(col < m, y, 0.0)
        else:
            yv = y
        inv_m = 1.0 / m
        mean = jnp.sum(yv, axis=1, keepdims=True) * inv_m
        var = jnp.maximum(jnp.sum(yv * yv, axis=1, keepdims=True) * inv_m
                          - mean * mean, 0.0)
        scale = g_ref[...] * jax.lax.rsqrt(var + BN_EPS)
        y = (y - mean) * scale + bt_ref[...]
    y = _apply_act(y, act)
    if has_res:
        y = y + res_ref[...].astype(jnp.float32)
    o_ref[...] = y.astype(o_ref.dtype)


def _fused_conv_call(wt, at, b, gamma, beta, res, *, m, act, out_dtype, add_bias):
    cout, k = wt.shape
    _, mp = at.shape
    use_bn = gamma is not None
    has_res = res is not None

    inputs = [wt, at]
    in_specs = [pl.BlockSpec((cout, k), lambda i: (0, 0)),
                pl.BlockSpec((k, mp), lambda i: (0, 0))]
    if add_bias:
        inputs.append(b)
        in_specs.append(pl.BlockSpec((cout, 1), lambda i: (0, 0)))
    if use_bn:
        inputs += [gamma, beta]
        in_specs += [pl.BlockSpec((cout, 1), lambda i: (0, 0)),
                     pl.BlockSpec((cout, 1), lambda i: (0, 0))]
    if has_res:
        inputs.append(res)
        in_specs.append(pl.BlockSpec((cout, mp), lambda i: (0, 0)))

    in_bytes = sum(int(a.size) * a.dtype.itemsize for a in inputs)
    out_bytes = cout * mp * jnp.dtype(out_dtype).itemsize
    need = 2 * (in_bytes + out_bytes) + cout * mp * 4 + (2 << 20)

    return pl.pallas_call(
        functools.partial(_fused_conv_kernel, m=m, use_bn=use_bn,
                          add_bias=add_bias, act=act, has_res=has_res),
        out_shape=jax.ShapeDtypeStruct((cout, mp), out_dtype),
        grid=(1,),
        in_specs=in_specs,
        out_specs=pl.BlockSpec((cout, mp), lambda i: (0, 0)),
        compiler_params=pltpu.CompilerParams(
            dimension_semantics=("arbitrary",),
            vmem_limit_bytes=_vmem_limit(need)),
        cost_estimate=pl.CostEstimate(
            flops=2 * cout * k * mp,
            transcendentals=cout if use_bn else 0,
            bytes_accessed=in_bytes + out_bytes),
    )(*inputs)


# ----------------------------------------------------------------------------
# Pallas kernels B: tiled fallback for shapes whose y does not fit VMEM
# (matmul emits per-tile partial stats; tiny reduction done in JAX)
# ----------------------------------------------------------------------------
def _matmul_stats_kernel(wt_ref, at_ref, y_ref, s1_ref, s2_ref):
    @pl.when(pl.program_id(0) == 0)
    def _():
        s1_ref[...] = jnp.zeros_like(s1_ref)
        s2_ref[...] = jnp.zeros_like(s2_ref)
    y = jnp.dot(wt_ref[...], at_ref[...], preferred_element_type=jnp.float32)
    y_ref[...] = y
    s1_ref[...] += jnp.sum(y, axis=1, keepdims=True)
    s2_ref[...] += jnp.sum(y * y, axis=1, keepdims=True)


def _matmul_epilogue_kernel(*refs, add_bias, act, has_res):
    it = iter(refs)
    wt_ref = next(it)
    at_ref = next(it)
    b_ref = next(it) if add_bias else None
    res_ref = next(it) if has_res else None
    o_ref = next(it)
    y = jnp.dot(wt_ref[...], at_ref[...], preferred_element_type=jnp.float32)
    if add_bias:
        y = y + b_ref[...]
    y = _apply_act(y, act)
    if has_res:
        y = y + res_ref[...].astype(jnp.float32)
    o_ref[...] = y.astype(o_ref.dtype)


def _bn_act_res_kernel(*refs, act, has_res):
    it = iter(refs)
    y_ref = next(it)
    sc_ref = next(it)
    sh_ref = next(it)
    res_ref = next(it) if has_res else None
    o_ref = next(it)
    y = y_ref[...] * sc_ref[...] + sh_ref[...]
    y = _apply_act(y, act)
    if has_res:
        y = y + res_ref[...].astype(jnp.float32)
    o_ref[...] = y.astype(o_ref.dtype)


def _tiled_conv_path(wt, a, b, gamma, beta, res_flat, *, m, act, out_dtype, add_bias):
    cout, k = wt.shape
    # Largest practical tile (v6e/v5e: amortize per-step overhead); tm=512 gives
    # >= 2 tiles on anything big enough to land here (engages both v7x TCs).
    tm = 512 if m > 512 else _round_up(m, 128)
    mp = _round_up(m, tm)
    if mp != m:
        a = jnp.pad(a, ((0, 0), (0, mp - m)))
        if res_flat is not None:
            res_flat = jnp.pad(res_flat, ((0, 0), (0, mp - m)))
    n_tiles = mp // tm
    use_bn = gamma is not None
    has_res = res_flat is not None
    tile_need = 2 * (cout * k * 2 + k * tm * 2 + 2 * cout * tm * 4) + (2 << 20)
    vmem = _vmem_limit(tile_need)

    if not use_bn:
        inputs = [wt, a]
        in_specs = [pl.BlockSpec((cout, k), lambda i: (0, 0)),
                    pl.BlockSpec((k, tm), lambda i: (0, i))]
        if add_bias:
            inputs.append(b)
            in_specs.append(pl.BlockSpec((cout, 1), lambda i: (0, 0)))
        if has_res:
            inputs.append(res_flat)
            in_specs.append(pl.BlockSpec((cout, tm), lambda i: (0, i)))
        return pl.pallas_call(
            functools.partial(_matmul_epilogue_kernel, add_bias=add_bias,
                              act=act, has_res=has_res),
            out_shape=jax.ShapeDtypeStruct((cout, mp), out_dtype),
            grid=(n_tiles,),
            in_specs=in_specs,
            out_specs=pl.BlockSpec((cout, tm), lambda i: (0, i)),
            compiler_params=pltpu.CompilerParams(
                dimension_semantics=("parallel",), vmem_limit_bytes=vmem),
        )(*inputs)

    # BN path: kernel 1 -> y (f32) + per-channel partial sums / sumsqs
    y, s1, s2 = pl.pallas_call(
        _matmul_stats_kernel,
        out_shape=(jax.ShapeDtypeStruct((cout, mp), jnp.float32),
                   jax.ShapeDtypeStruct((cout, 1), jnp.float32),
                   jax.ShapeDtypeStruct((cout, 1), jnp.float32)),
        grid=(n_tiles,),
        in_specs=[pl.BlockSpec((cout, k), lambda i: (0, 0)),
                  pl.BlockSpec((k, tm), lambda i: (0, i))],
        out_specs=(pl.BlockSpec((cout, tm), lambda i: (0, i)),
                   pl.BlockSpec((cout, 1), lambda i: (0, 0)),
                   pl.BlockSpec((cout, 1), lambda i: (0, 0))),
        compiler_params=pltpu.CompilerParams(
            dimension_semantics=("arbitrary",), vmem_limit_bytes=vmem),
    )(wt, a)

    inv_m = 1.0 / m
    mean = s1 * inv_m
    var = jnp.maximum(s2 * inv_m - mean * mean, 0.0)
    scale = gamma * jax.lax.rsqrt(var + BN_EPS)
    shift = beta - mean * scale

    inputs = [y, scale, shift]
    in_specs = [pl.BlockSpec((cout, tm), lambda i: (0, i)),
                pl.BlockSpec((cout, 1), lambda i: (0, 0)),
                pl.BlockSpec((cout, 1), lambda i: (0, 0))]
    if has_res:
        inputs.append(res_flat)
        in_specs.append(pl.BlockSpec((cout, tm), lambda i: (0, i)))
    return pl.pallas_call(
        functools.partial(_bn_act_res_kernel, act=act, has_res=has_res),
        out_shape=jax.ShapeDtypeStruct((cout, mp), out_dtype),
        grid=(n_tiles,),
        in_specs=in_specs,
        out_specs=pl.BlockSpec((cout, tm), lambda i: (0, i)),
        compiler_params=pltpu.CompilerParams(
            dimension_semantics=("parallel",), vmem_limit_bytes=vmem),
    )(*inputs)


# ----------------------------------------------------------------------------
# JAX glue: transposed im2col (channels-first), PixelShuffle
# ----------------------------------------------------------------------------
def _im2col_t(x, kh, kw, stride, pad):
    """x: (Cin, N, H, W) -> patches (KH*KW*Cin, N*Ho*Wo), row order (kh, kw, cin)."""
    c, n, h, w = x.shape
    if pad:
        x = jnp.pad(x, ((0, 0), (0, 0), (pad, pad), (pad, pad)))
    hp, wp = h + 2 * pad, w + 2 * pad
    ho = (hp - kh) // stride + 1
    wo = (wp - kw) // stride + 1
    if kh == 1 and kw == 1 and stride == 1:
        a = x.reshape(c, n * ho * wo)
    else:
        slabs = []
        for i in range(kh):
            for j in range(kw):
                slabs.append(x[:, :, i:i + stride * (ho - 1) + 1:stride,
                                     j:j + stride * (wo - 1) + 1:stride])
        a = jnp.stack(slabs, axis=0).reshape(kh * kw * c, n * ho * wo)
    return a, (n, ho, wo)


def conv_bn_act(x, wt, b, gamma=None, beta=None, *, kh, kw, stride=1, pad=0,
                act="none", res=None, out_dtype=jnp.bfloat16):
    """Fused Conv2d(+bias)(+BatchNorm train-mode)(+act)(+residual). x: (Cin,N,H,W)."""
    cout, k = wt.shape
    a, (n, ho, wo) = _im2col_t(x, kh, kw, stride, pad)
    a = a.astype(jnp.bfloat16)                 # no-op when the producer wrote bf16
    m = a.shape[1]
    use_bn = gamma is not None
    add_bias = not use_bn                      # bias cancels exactly under batch-stat BN

    res_flat = None if res is None else res.reshape(cout, m)

    mp = _round_up(m, 128)
    res_bytes = 0 if res_flat is None else cout * mp * res_flat.dtype.itemsize
    in_bytes = cout * k * 2 + k * mp * 2 + 3 * cout * 4 + res_bytes
    out_bytes = cout * mp * jnp.dtype(out_dtype).itemsize
    need = 2 * (in_bytes + out_bytes) + cout * mp * 4 + (2 << 20)

    if need <= _FUSED_VMEM_BUDGET:
        if mp != m:
            a = jnp.pad(a, ((0, 0), (0, mp - m)))
            if res_flat is not None:
                res_flat = jnp.pad(res_flat, ((0, 0), (0, mp - m)))
        y = _fused_conv_call(wt, a, b, gamma, beta, res_flat, m=m, act=act,
                             out_dtype=out_dtype, add_bias=add_bias)
    else:
        y = _tiled_conv_path(wt, a, b, gamma, beta, res_flat, m=m, act=act,
                             out_dtype=out_dtype, add_bias=add_bias)
    return y[:, :m].reshape(cout, n, ho, wo)


def pixel_shuffle_cf(x, r):
    """PixelShuffle(r) in channels-first: (C*r*r, N, H, W) -> (C, N, H*r, W*r)."""
    c4, n, h, w = x.shape
    c = c4 // (r * r)
    x = x.reshape(c, r, r, n, h, w)
    x = x.transpose(0, 3, 4, 1, 5, 2)
    return x.reshape(c, n, h * r, w * r)


# ----------------------------------------------------------------------------
# Parameter init (mirrors truncated_normal_(std=1e-3), bias=0, BN gamma=1/beta=0)
# Weights are pre-transposed to (Cout, K) and pre-cast to bf16 ONCE here.
# ----------------------------------------------------------------------------
def _trunc_normal(key, shape, std=1e-3):
    return std * jax.random.truncated_normal(key, -2.0, 2.0, shape, jnp.float32)


def _conv_p(key, kh, kw, cin, cout):
    w = _trunc_normal(key, (kh, kw, cin, cout))          # row order (kh, kw, cin)
    wt = jnp.transpose(w.reshape(kh * kw * cin, cout)).astype(jnp.bfloat16)
    return {"wt": wt, "b": jnp.zeros((cout, 1), jnp.float32)}


def _bn_p(c):
    return {"gamma": jnp.ones((c, 1), jnp.float32),
            "beta": jnp.zeros((c, 1), jnp.float32)}


def init_res_block(key, ch, hh, oc):
    ks = jax.random.split(key, 11)
    h2 = hh // 2
    return {
        "l1_c1": _conv_p(ks[0], 5, 5, ch, hh), "l1_bn1": _bn_p(hh),
        "l1_c2": _conv_p(ks[1], 5, 5, hh, hh), "l1_bn2": _bn_p(hh),
        "L_c1": _conv_p(ks[2], 5, 5, h2, hh), "L_bn1": _bn_p(hh),
        "R_c1": _conv_p(ks[3], 5, 5, h2, hh), "R_bn1": _bn_p(hh),
        "R_c2": _conv_p(ks[4], 5, 5, hh, hh), "R_bn2": _bn_p(hh),
        "R_c3": _conv_p(ks[5], 5, 5, hh, hh), "R_bn3": _bn_p(hh),
        "cat_c": _conv_p(ks[6], 1, 1, 2 * hh, hh), "cat_bn": _bn_p(hh),
        "up_c1": _conv_p(ks[7], 3, 3, hh, 4 * hh),        # no BN after this conv
        "up_c2": _conv_p(ks[8], 3, 3, hh, hh), "up_bn": _bn_p(hh),
        "skip_c": _conv_p(ks[9], 1, 1, ch, oc), "skip_bn": _bn_p(oc),
        "skip2_c": _conv_p(ks[10], 1, 1, hh, oc), "skip2_bn": _bn_p(oc),
    }


def init_res_model(key, in_ch, out_ch, em_ch, res_num):
    ks = jax.random.split(key, 2 + res_num)
    return {
        "l1_c": _conv_p(ks[0], 3, 3, in_ch, em_ch), "l1_bn": _bn_p(em_ch),
        "blocks": [init_res_block(ks[2 + i], em_ch, em_ch, em_ch)
                   for i in range(res_num)],
        "out_c": _conv_p(ks[1], 3, 3, em_ch, out_ch), "out_bn": _bn_p(out_ch),
    }


# ----------------------------------------------------------------------------
# Forward pass (channels-first (C, N, H, W) internally)
# ----------------------------------------------------------------------------
def res_block_forward(p, x):
    # layer1
    h = conv_bn_act(x, **p["l1_c1"], **p["l1_bn1"], kh=5, kw=5, pad=2, act="relu")
    o1 = conv_bn_act(h, **p["l1_c2"], **p["l1_bn2"], kh=5, kw=5, pad=2, act="leaky")
    # torch.chunk(o1, 2, dim=1): channel axis is axis 0 here
    half = o1.shape[0] // 2
    o2_l_in, o2_r_in = o1[:half], o1[half:]
    # layer_L (stride-2 conv)
    o2_l = conv_bn_act(o2_l_in, **p["L_c1"], **p["L_bn1"], kh=5, kw=5,
                       stride=2, pad=2, act="leaky")
    # layer_R (stride-2 conv, then two same convs)
    r = conv_bn_act(o2_r_in, **p["R_c1"], **p["R_bn1"], kh=5, kw=5,
                    stride=2, pad=2, act="leaky")
    r = conv_bn_act(r, **p["R_c2"], **p["R_bn2"], kh=5, kw=5, pad=2, act="leaky")
    o2_r = conv_bn_act(r, **p["R_c3"], **p["R_bn3"], kh=5, kw=5, pad=2, act="leaky")
    # layer_cat (1x1 conv on channel concatenation)
    o3 = conv_bn_act(jnp.concatenate([o2_l, o2_r], axis=0),
                     **p["cat_c"], **p["cat_bn"], kh=1, kw=1, pad=0, act="leaky")
    # layer_up: conv3 (+bias, no BN/act) -> PixelShuffle(2) -> conv3 + BN; residual o1
    u = conv_bn_act(o3, **p["up_c1"], kh=3, kw=3, pad=1, act="none")
    u = pixel_shuffle_cf(u, 2)
    o4 = conv_bn_act(u, **p["up_c2"], **p["up_bn"], kh=3, kw=3, pad=1,
                     act="none", res=o1)                        # o4 = up(o3) + o1 (fused)
    # skip paths: out = skip(x) + skip2(o4)  (second add fused into skip2's epilogue)
    s1 = conv_bn_act(x, **p["skip_c"], **p["skip_bn"], kh=1, kw=1, pad=0,
                     act="none", out_dtype=jnp.float32)
    out = conv_bn_act(o4, **p["skip2_c"], **p["skip2_bn"], kh=1, kw=1, pad=0,
                      act="none", res=s1)
    return out


def res_model_forward(params, x_nchw):
    x = jnp.transpose(x_nchw, (1, 0, 2, 3))   # NCHW -> CNHW
    o = conv_bn_act(x, **params["l1_c"], **params["l1_bn"], kh=3, kw=3, pad=1,
                    act="relu")
    for bp in params["blocks"]:
        o = res_block_forward(bp, o)
    # final residual (out_channels == in_channels) fused into layer_out's epilogue
    out = conv_bn_act(o, **params["out_c"], **params["out_bn"], kh=3, kw=3, pad=1,
                      act="none", res=x, out_dtype=jnp.float32)
    return jnp.transpose(out, (1, 0, 2, 3))    # CNHW -> NCHW


# ----------------------------------------------------------------------------
if __name__ == "__main__":
    in_channels, out_channels, em_channels, res_num = 4, 4, 8, 2
    batch, spatial = 2, 16

    x = jax.random.normal(jax.random.PRNGKey(0),
                          (batch, in_channels, spatial, spatial), jnp.float32)
    params = init_res_model(jax.random.PRNGKey(42),
                            in_channels, out_channels, em_channels, res_num)

    fwd = jax.jit(res_model_forward)
    y = fwd(params, x)
    jax.block_until_ready(y)
    assert y.shape == (batch, out_channels, spatial, spatial)
    assert bool(jnp.all(jnp.isfinite(y)))
    print("KERNEL_OK")
</pallas_src>

<mosaic_0001>
module attributes {stable_mosaic.version = 11 : i64} {
  func.func @_fused_conv_kernel(%arg0: i32, %arg1: memref<8x36xbf16, #tpu.memory_space<vmem>>, %arg2: memref<36x512xbf16, #tpu.memory_space<vmem>>, %arg3: memref<8x1xf32, #tpu.memory_space<vmem>>, %arg4: memref<8x1xf32, #tpu.memory_space<vmem>>, %arg5: memref<8x512xbf16, #tpu.memory_space<vmem>>) attributes {dimension_semantics = [#tpu.dimension_semantics<arbitrary>], iteration_bounds = array<i64: 1>, scalar_prefetch = 0 : i64, scratch_operands = 0 : i64, tpu.core_type = #tpu.core_type<tc>, window_params = [{pipeline_mode = #tpu.pipeline_mode<synchronous>, transform_indices = @transform_0, window_bounds = array<i64: 8, 36>}, {pipeline_mode = #tpu.pipeline_mode<synchronous>, transform_indices = @transform_1, window_bounds = array<i64: 36, 512>}, {pipeline_mode = #tpu.pipeline_mode<synchronous>, transform_indices = @transform_2, window_bounds = array<i64: 8, 1>}, {pipeline_mode = #tpu.pipeline_mode<synchronous>, transform_indices = @transform_3, window_bounds = array<i64: 8, 1>}, {pipeline_mode = #tpu.pipeline_mode<synchronous>, transform_indices = @transform_4, window_bounds = array<i64: 8, 512>}]} {
    %c0 = arith.constant 0 : index
    %c0_0 = arith.constant 0 : index
    %0 = vector.load %arg1[%c0, %c0_0] : memref<8x36xbf16, #tpu.memory_space<vmem>>, vector<8x36xbf16>
    %c0_1 = arith.constant 0 : index
    %c0_2 = arith.constant 0 : index
    %1 = vector.load %arg2[%c0_1, %c0_2] : memref<36x512xbf16, #tpu.memory_space<vmem>>, vector<36x512xbf16>
    %cst = arith.constant dense<0.000000e+00> : vector<8x512xf32>
    %2 = tpu.matmul %0, %1, %cst {dimension_numbers = #tpu.dot_dimension_numbers<[1], [0], [0], [1], [0, 0, 1, 1], [], []>} : vector<8x36xbf16>, vector<36x512xbf16>, vector<8x512xf32> -> vector<8x512xf32>
    %cst_3 = arith.constant dense<0.000000e+00> : vector<8xf32>
    %3 = vector.multi_reduction <add>, %2, %cst_3 [1] : vector<8x512xf32> to vector<8xf32>
    %4 = vector.shape_cast %3 : vector<8xf32> to vector<8x1xf32>
    %cst_4 = arith.constant 0.001953125 : f32
    %5 = vector.broadcast %cst_4 : f32 to vector<8x1xf32>
    %6 = arith.mulf %4, %5 : vector<8x1xf32>
    %7 = arith.mulf %2, %2 : vector<8x512xf32>
    %cst_5 = arith.constant dense<0.000000e+00> : vector<8xf32>
    %8 = vector.multi_reduction <add>, %7, %cst_5 [1] : vector<8x512xf32> to vector<8xf32>
    %9 = vector.shape_cast %8 : vector<8xf32> to vector<8x1xf32>
    %cst_6 = arith.constant 0.001953125 : f32
    %10 = vector.broadcast %cst_6 : f32 to vector<8x1xf32>
    %11 = arith.mulf %9, %10 : vector<8x1xf32>
    %12 = arith.mulf %6, %6 : vector<8x1xf32>
    %13 = arith.subf %11, %12 : vector<8x1xf32>
    %cst_7 = arith.constant 0.000000e+00 : f32
    %14 = vector.broadcast %cst_7 : f32 to vector<8x1xf32>
    %15 = arith.maximumf %13, %14 : vector<8x1xf32>
    %c0_8 = arith.constant 0 : index
    %c0_9 = arith.constant 0 : index
    %16 = vector.load %arg3[%c0_8, %c0_9] : memref<8x1xf32, #tpu.memory_space<vmem>>, vector<8x1xf32>
    %cst_10 = arith.constant 9.99999974E-6 : f32
    %17 = vector.broadcast %cst_10 : f32 to vector<8x1xf32>
    %18 = arith.addf %15, %17 : vector<8x1xf32>
    %19 = math.rsqrt %18 : vector<8x1xf32>
    %20 = arith.mulf %16, %19 : vector<8x1xf32>
    %21 = vector.broadcast %6 : vector<8x1xf32> to vector<8x512xf32>
    %22 = arith.subf %2, %21 : vector<8x512xf32>
    %23 = vector.broadcast %20 : vector<8x1xf32> to vector<8x512xf32>
    %24 = arith.mulf %22, %23 : vector<8x512xf32>
    %c0_11 = arith.constant 0 : index
    %c0_12 = arith.constant 0 : index
    %25 = vector.load %arg4[%c0_11, %c0_12] : memref<8x1xf32, #tpu.memory_space<vmem>>, vector<8x1xf32>
    %26 = vector.broadcast %25 : vector<8x1xf32> to vector<8x512xf32>
    %27 = arith.addf %24, %26 : vector<8x512xf32>
    %cst_13 = arith.constant 0.000000e+00 : f32
    %28 = vector.broadcast %cst_13 : f32 to vector<8x512xf32>
    %29 = arith.maximumf %27, %28 : vector<8x512xf32>
    %30 = arith.truncf %29 : vector<8x512xf32> to vector<8x512xbf16>
    %c0_14 = arith.constant 0 : index
    %c0_15 = arith.constant 0 : index
    %31 = vector.load %arg5[%c0_14, %c0_15] : memref<8x512xbf16, #tpu.memory_space<vmem>>, vector<8x512xbf16>
    tpu.vector_store %arg5[%c0_14, %c0_15], %30 {strides = array<i32>} : memref<8x512xbf16, #tpu.memory_space<vmem>>, vector<8x512xbf16>,
    return
  }
  func.func @transform_0(%arg0: i32) -> (i32, i32) {
    %c0_i32 = arith.constant 0 : i32
    %c0_i32_0 = arith.constant 0 : i32
    %c0_i32_1 = arith.constant 0 : i32
    return %c0_i32, %c0_i32_0 : i32, i32
  }
  func.func @transform_1(%arg0: i32) -> (i32, i32) {
    %c0_i32 = arith.constant 0 : i32
    %c0_i32_0 = arith.constant 0 : i32
    %c0_i32_1 = arith.constant 0 : i32
    return %c0_i32, %c0_i32_0 : i32, i32
  }
  func.func @transform_2(%arg0: i32) -> (i32, i32) {
    %c0_i32 = arith.constant 0 : i32
    %c0_i32_0 = arith.constant 0 : i32
    %c0_i32_1 = arith.constant 0 : i32
    return %c0_i32, %c0_i32_0 : i32, i32
  }
  func.func @transform_3(%arg0: i32) -> (i32, i32) {
    %c0_i32 = arith.constant 0 : i32
    %c0_i32_0 = arith.constant 0 : i32
    %c0_i32_1 = arith.constant 0 : i32
    return %c0_i32, %c0_i32_0 : i32, i32
  }
  func.func @transform_4(%arg0: i32) -> (i32, i32) {
    %c0_i32 = arith.constant 0 : i32
    %c0_i32_0 = arith.constant 0 : i32
    %c0_i32_1 = arith.constant 0 : i32
    return %c0_i32, %c0_i32_0 : i32, i32
  }
}

module attributes {stable_mosaic.version = 11 : i64} {
  func.func @_fused_conv_kernel(%arg0: i32, %arg1: memref<8x200xbf16, #tpu.memory_space<vmem>>, %arg2: memref<200x512xbf16, #tpu.memory_space<vmem>>, %arg3: memref<8x1xf32, #tpu.memory_space<vmem>>, %arg4: memref<8x1xf32, #tpu.memory_space<vmem>>, %arg5: memref<8x512xbf16, #tpu.memory_space<vmem>>) attributes {dimension_semantics = [#tpu.dimension_semantics<arbitrary>], iteration_bounds = array<i64: 1>, scalar_prefetch = 0 : i64, scratch_operands = 0 : i64, tpu.core_type = #tpu.core_type<tc>, window_params = [{pipeline_mode = #tpu.pipeline_mode<synchronous>, transform_indices = @transform_0, window_bounds = array<i64: 8, 200>}, {pipeline_mode = #tpu.pipeline_mode<synchronous>, transform_indices = @transform_1, window_bounds = array<i64: 200, 512>}, {pipeline_mode = #tpu.pipeline_mode<synchronous>, transform_indices = @transform_2, window_bounds = array<i64: 8, 1>}, {pipeline_mode = #tpu.pipeline_mode<synchronous>, transform_indices = @transform_3, window_bounds = array<i64: 8, 1>}, {pipeline_mode = #tpu.pipeline_mode<synchronous>, transform_indices = @transform_4, window_bounds = array<i64: 8, 512>}]} {
    %c0 = arith.constant 0 : index
    %c0_0 = arith.constant 0 : index
    %0 = vector.load %arg1[%c0, %c0_0] : memref<8x200xbf16, #tpu.memory_space<vmem>>, vector<8x200xbf16>
    %c0_1 = arith.constant 0 : index
    %c0_2 = arith.constant 0 : index
    %1 = vector.load %arg2[%c0_1, %c0_2] : memref<200x512xbf16, #tpu.memory_space<vmem>>, vector<200x512xbf16>
    %cst = arith.constant dense<0.000000e+00> : vector<8x512xf32>
    %2 = tpu.matmul %0, %1, %cst {dimension_numbers = #tpu.dot_dimension_numbers<[1], [0], [0], [1], [0, 0, 1, 1], [], []>} : vector<8x200xbf16>, vector<200x512xbf16>, vector<8x512xf32> -> vector<8x512xf32>
    %cst_3 = arith.constant dense<0.000000e+00> : vector<8xf32>
    %3 = vector.multi_reduction <add>, %2, %cst_3 [1] : vector<8x512xf32> to vector<8xf32>
    %4 = vector.shape_cast %3 : vector<8xf32> to vector<8x1xf32>
    %cst_4 = arith.constant 0.001953125 : f32
    %5 = vector.broadcast %cst_4 : f32 to vector<8x1xf32>
    %6 = arith.mulf %4, %5 : vector<8x1xf32>
    %7 = arith.mulf %2, %2 : vector<8x512xf32>
    %cst_5 = arith.constant dense<0.000000e+00> : vector<8xf32>
    %8 = vector.multi_reduction <add>, %7, %cst_5 [1] : vector<8x512xf32> to vector<8xf32>
    %9 = vector.shape_cast %8 : vector<8xf32> to vector<8x1xf32>
    %cst_6 = arith.constant 0.001953125 : f32
    %10 = vector.broadcast %cst_6 : f32 to vector<8x1xf32>
    %11 = arith.mulf %9, %10 : vector<8x1xf32>
    %12 = arith.mulf %6, %6 : vector<8x1xf32>
    %13 = arith.subf %11, %12 : vector<8x1xf32>
    %cst_7 = arith.constant 0.000000e+00 : f32
    %14 = vector.broadcast %cst_7 : f32 to vector<8x1xf32>
    %15 = arith.maximumf %13, %14 : vector<8x1xf32>
    %c0_8 = arith.constant 0 : index
    %c0_9 = arith.constant 0 : index
    %16 = vector.load %arg3[%c0_8, %c0_9] : memref<8x1xf32, #tpu.memory_space<vmem>>, vector<8x1xf32>
    %cst_10 = arith.constant 9.99999974E-6 : f32
    %17 = vector.broadcast %cst_10 : f32 to vector<8x1xf32>
    %18 = arith.addf %15, %17 : vector<8x1xf32>
    %19 = math.rsqrt %18 : vector<8x1xf32>
    %20 = arith.mulf %16, %19 : vector<8x1xf32>
    %21 = vector.broadcast %6 : vector<8x1xf32> to vector<8x512xf32>
    %22 = arith.subf %2, %21 : vector<8x512xf32>
    %23 = vector.broadcast %20 : vector<8x1xf32> to vector<8x512xf32>
    %24 = arith.mulf %22, %23 : vector<8x512xf32>
    %c0_11 = arith.constant 0 : index
    %c0_12 = arith.constant 0 : index
    %25 = vector.load %arg4[%c0_11, %c0_12] : memref<8x1xf32, #tpu.memory_space<vmem>>, vector<8x1xf32>
    %26 = vector.broadcast %25 : vector<8x1xf32> to vector<8x512xf32>
    %27 = arith.addf %24, %26 : vector<8x512xf32>
    %cst_13 = arith.constant 0.000000e+00 : f32
    %28 = vector.broadcast %cst_13 : f32 to vector<8x512xf32>
    %29 = arith.maximumf %27, %28 : vector<8x512xf32>
    %30 = arith.truncf %29 : vector<8x512xf32> to vector<8x512xbf16>
    %c0_14 = arith.constant 0 : index
    %c0_15 = arith.constant 0 : index
    %31 = vector.load %arg5[%c0_14, %c0_15] : memref<8x512xbf16, #tpu.memory_space<vmem>>, vector<8x512xbf16>
    tpu.vector_store %arg5[%c0_14, %c0_15], %30 {strides = array<i32>} : memref<8x512xbf16, #tpu.memory_space<vmem>>, vector<8x512xbf16>,
    return
  }
  func.func @transform_0(%arg0: i32) -> (i32, i32) {
    %c0_i32 = arith.constant 0 : i32
    %c0_i32_0 = arith.constant 0 : i32
    %c0_i32_1 = arith.constant 0 : i32
    return %c0_i32, %c0_i32_0 : i32, i32
  }
  func.func @transform_1(%arg0: i32) -> (i32, i32) {
    %c0_i32 = arith.constant 0 : i32
    %c0_i32_0 = arith.constant 0 : i32
    %c0_i32_1 = arith.constant 0 : i32
    return %c0_i32, %c0_i32_0 : i32, i32
  }
  func.func @transform_2(%arg0: i32) -> (i32, i32) {
    %c0_i32 = arith.constant 0 : i32
    %c0_i32_0 = arith.constant 0 : i32
    %c0_i32_1 = arith.constant 0 : i32
    return %c0_i32, %c0_i32_0 : i32, i32
  }
  func.func @transform_3(%arg0: i32) -> (i32, i32) {
    %c0_i32 = arith.constant 0 : i32
    %c0_i32_0 = arith.constant 0 : i32
    %c0_i32_1 = arith.constant 0 : i32
    return %c0_i32, %c0_i32_0 : i32, i32
  }
  func.func @transform_4(%arg0: i32) -> (i32, i32) {
    %c0_i32 = arith.constant 0 : i32
    %c0_i32_0 = arith.constant 0 : i32
    %c0_i32_1 = arith.constant 0 : i32
    return %c0_i32, %c0_i32_0 : i32, i32
  }
}

module attributes {stable_mosaic.version = 11 : i64} {
  func.func @_fused_conv_kernel(%arg0: i32, %arg1: memref<8x200xbf16, #tpu.memory_space<vmem>>, %arg2: memref<200x512xbf16, #tpu.memory_space<vmem>>, %arg3: memref<8x1xf32, #tpu.memory_space<vmem>>, %arg4: memref<8x1xf32, #tpu.memory_space<vmem>>, %arg5: memref<8x512xbf16, #tpu.memory_space<vmem>>) attributes {dimension_semantics = [#tpu.dimension_semantics<arbitrary>], iteration_bounds = array<i64: 1>, scalar_prefetch = 0 : i64, scratch_operands = 0 : i64, tpu.core_type = #tpu.core_type<tc>, window_params = [{pipeline_mode = #tpu.pipeline_mode<synchronous>, transform_indices = @transform_0, window_bounds = array<i64: 8, 200>}, {pipeline_mode = #tpu.pipeline_mode<synchronous>, transform_indices = @transform_1, window_bounds = array<i64: 200, 512>}, {pipeline_mode = #tpu.pipeline_mode<synchronous>, transform_indices = @transform_2, window_bounds = array<i64: 8, 1>}, {pipeline_mode = #tpu.pipeline_mode<synchronous>, transform_indices = @transform_3, window_bounds = array<i64: 8, 1>}, {pipeline_mode = #tpu.pipeline_mode<synchronous>, transform_indices = @transform_4, window_bounds = array<i64: 8, 512>}]} {
    %c0 = arith.constant 0 : index
    %c0_0 = arith.constant 0 : index
    %0 = vector.load %arg1[%c0, %c0_0] : memref<8x200xbf16, #tpu.memory_space<vmem>>, vector<8x200xbf16>
    %c0_1 = arith.constant 0 : index
    %c0_2 = arith.constant 0 : index
    %1 = vector.load %arg2[%c0_1, %c0_2] : memref<200x512xbf16, #tpu.memory_space<vmem>>, vector<200x512xbf16>
    %cst = arith.constant dense<0.000000e+00> : vector<8x512xf32>
    %2 = tpu.matmul %0, %1, %cst {dimension_numbers = #tpu.dot_dimension_numbers<[1], [0], [0], [1], [0, 0, 1, 1], [], []>} : vector<8x200xbf16>, vector<200x512xbf16>, vector<8x512xf32> -> vector<8x512xf32>
    %cst_3 = arith.constant dense<0.000000e+00> : vector<8xf32>
    %3 = vector.multi_reduction <add>, %2, %cst_3 [1] : vector<8x512xf32> to vector<8xf32>
    %4 = vector.shape_cast %3 : vector<8xf32> to vector<8x1xf32>
    %cst_4 = arith.constant 0.001953125 : f32
    %5 = vector.broadcast %cst_4 : f32 to vector<8x1xf32>
    %6 = arith.mulf %4, %5 : vector<8x1xf32>
    %7 = arith.mulf %2, %2 : vector<8x512xf32>
    %cst_5 = arith.constant dense<0.000000e+00> : vector<8xf32>
    %8 = vector.multi_reduction <add>, %7, %cst_5 [1] : vector<8x512xf32> to vector<8xf32>
    %9 = vector.shape_cast %8 : vector<8xf32> to vector<8x1xf32>
    %cst_6 = arith.constant 0.001953125 : f32
    %10 = vector.broadcast %cst_6 : f32 to vector<8x1xf32>
    %11 = arith.mulf %9, %10 : vector<8x1xf32>
    %12 = arith.mulf %6, %6 : vector<8x1xf32>
    %13 = arith.subf %11, %12 : vector<8x1xf32>
    %cst_7 = arith.constant 0.000000e+00 : f32
    %14 = vector.broadcast %cst_7 : f32 to vector<8x1xf32>
    %15 = arith.maximumf %13, %14 : vector<8x1xf32>
    %c0_8 = arith.constant 0 : index
    %c0_9 = arith.constant 0 : index
    %16 = vector.load %arg3[%c0_8, %c0_9] : memref<8x1xf32, #tpu.memory_space<vmem>>, vector<8x1xf32>
    %cst_10 = arith.constant 9.99999974E-6 : f32
    %17 = vector.broadcast %cst_10 : f32 to vector<8x1xf32>
    %18 = arith.addf %15, %17 : vector<8x1xf32>
    %19 = math.rsqrt %18 : vector<8x1xf32>
    %20 = arith.mulf %16, %19 : vector<8x1xf32>
    %21 = vector.broadcast %6 : vector<8x1xf32> to vector<8x512xf32>
    %22 = arith.subf %2, %21 : vector<8x512xf32>
    %23 = vector.broadcast %20 : vector<8x1xf32> to vector<8x512xf32>
    %24 = arith.mulf %22, %23 : vector<8x512xf32>
    %c0_11 = arith.constant 0 : index
    %c0_12 = arith.constant 0 : index
    %25 = vector.load %arg4[%c0_11, %c0_12] : memref<8x1xf32, #tpu.memory_space<vmem>>, vector<8x1xf32>
    %26 = vector.broadcast %25 : vector<8x1xf32> to vector<8x512xf32>
    %27 = arith.addf %24, %26 : vector<8x512xf32>
    %cst_13 = arith.constant 0.000000e+00 : f32
    %28 = vector.broadcast %cst_13 : f32 to vector<8x512xf32>
    %29 = arith.cmpf oge, %27, %28 : vector<8x512xf32>
    %cst_14 = arith.constant 0.00999999977 : f32
    %30 = vector.broadcast %cst_14 : f32 to vector<8x512xf32>
    %31 = arith.mulf %30, %27 : vector<8x512xf32>
    %32 = arith.select %29, %27, %31 : vector<8x512xi1>, vector<8x512xf32>
    %33 = arith.truncf %32 : vector<8x512xf32> to vector<8x512xbf16>
    %c0_15 = arith.constant 0 : index
    %c0_16 = arith.constant 0 : index
    %34 = vector.load %arg5[%c0_15, %c0_16] : memref<8x512xbf16, #tpu.memory_space<vmem>>, vector<8x512xbf16>
    tpu.vector_store %arg5[%c0_15, %c0_16], %33 {strides = array<i32>} : memref<8x512xbf16, #tpu.memory_space<vmem>>, vector<8x512xbf16>,
    return
  }
  func.func @transform_0(%arg0: i32) -> (i32, i32) {
    %c0_i32 = arith.constant 0 : i32
    %c0_i32_0 = arith.constant 0 : i32
    %c0_i32_1 = arith.constant 0 : i32
    return %c0_i32, %c0_i32_0 : i32, i32
  }
  func.func @transform_1(%arg0: i32) -> (i32, i32) {
    %c0_i32 = arith.constant 0 : i32
    %c0_i32_0 = arith.constant 0 : i32
    %c0_i32_1 = arith.constant 0 : i32
    return %c0_i32, %c0_i32_0 : i32, i32
  }
  func.func @transform_2(%arg0: i32) -> (i32, i32) {
    %c0_i32 = arith.constant 0 : i32
    %c0_i32_0 = arith.constant 0 : i32
    %c0_i32_1 = arith.constant 0 : i32
    return %c0_i32, %c0_i32_0 : i32, i32
  }
  func.func @transform_3(%arg0: i32) -> (i32, i32) {
    %c0_i32 = arith.constant 0 : i32
    %c0_i32_0 = arith.constant 0 : i32
    %c0_i32_1 = arith.constant 0 : i32
    return %c0_i32, %c0_i32_0 : i32, i32
  }
  func.func @transform_4(%arg0: i32) -> (i32, i32) {
    %c0_i32 = arith.constant 0 : i32
    %c0_i32_0 = arith.constant 0 : i32
    %c0_i32_1 = arith.constant 0 : i32
    return %c0_i32, %c0_i32_0 : i32, i32
  }
}

module attributes {stable_mosaic.version = 11 : i64} {
  func.func @_fused_conv_kernel(%arg0: i32, %arg1: memref<8x100xbf16, #tpu.memory_space<vmem>>, %arg2: memref<100x128xbf16, #tpu.memory_space<vmem>>, %arg3: memref<8x1xf32, #tpu.memory_space<vmem>>, %arg4: memref<8x1xf32, #tpu.memory_space<vmem>>, %arg5: memref<8x128xbf16, #tpu.memory_space<vmem>>) attributes {dimension_semantics = [#tpu.dimension_semantics<arbitrary>], iteration_bounds = array<i64: 1>, scalar_prefetch = 0 : i64, scratch_operands = 0 : i64, tpu.core_type = #tpu.core_type<tc>, window_params = [{pipeline_mode = #tpu.pipeline_mode<synchronous>, transform_indices = @transform_0, window_bounds = array<i64: 8, 100>}, {pipeline_mode = #tpu.pipeline_mode<synchronous>, transform_indices = @transform_1, window_bounds = array<i64: 100, 128>}, {pipeline_mode = #tpu.pipeline_mode<synchronous>, transform_indices = @transform_2, window_bounds = array<i64: 8, 1>}, {pipeline_mode = #tpu.pipeline_mode<synchronous>, transform_indices = @transform_3, window_bounds = array<i64: 8, 1>}, {pipeline_mode = #tpu.pipeline_mode<synchronous>, transform_indices = @transform_4, window_bounds = array<i64: 8, 128>}]} {
    %c0 = arith.constant 0 : index
    %c0_0 = arith.constant 0 : index
    %0 = vector.load %arg1[%c0, %c0_0] : memref<8x100xbf16, #tpu.memory_space<vmem>>, vector<8x100xbf16>
    %c0_1 = arith.constant 0 : index
    %c0_2 = arith.constant 0 : index
    %1 = vector.load %arg2[%c0_1, %c0_2] : memref<100x128xbf16, #tpu.memory_space<vmem>>, vector<100x128xbf16>
    %cst = arith.constant dense<0.000000e+00> : vector<8x128xf32>
    %2 = tpu.matmul %0, %1, %cst {dimension_numbers = #tpu.dot_dimension_numbers<[1], [0], [0], [1], [0, 0, 1, 1], [], []>} : vector<8x100xbf16>, vector<100x128xbf16>, vector<8x128xf32> -> vector<8x128xf32>
    %cst_3 = arith.constant dense<0.000000e+00> : vector<8xf32>
    %3 = vector.multi_reduction <add>, %2, %cst_3 [1] : vector<8x128xf32> to vector<8xf32>
    %4 = vector.shape_cast %3 : vector<8xf32> to vector<8x1xf32>
    %cst_4 = arith.constant 7.812500e-03 : f32
    %5 = vector.broadcast %cst_4 : f32 to vector<8x1xf32>
    %6 = arith.mulf %4, %5 : vector<8x1xf32>
    %7 = arith.mulf %2, %2 : vector<8x128xf32>
    %cst_5 = arith.constant dense<0.000000e+00> : vector<8xf32>
    %8 = vector.multi_reduction <add>, %7, %cst_5 [1] : vector<8x128xf32> to vector<8xf32>
    %9 = vector.shape_cast %8 : vector<8xf32> to vector<8x1xf32>
    %cst_6 = arith.constant 7.812500e-03 : f32
    %10 = vector.broadcast %cst_6 : f32 to vector<8x1xf32>
    %11 = arith.mulf %9, %10 : vector<8x1xf32>
    %12 = arith.mulf %6, %6 : vector<8x1xf32>
    %13 = arith.subf %11, %12 : vector<8x1xf32>
    %cst_7 = arith.constant 0.000000e+00 : f32
    %14 = vector.broadcast %cst_7 : f32 to vector<8x1xf32>
    %15 = arith.maximumf %13, %14 : vector<8x1xf32>
    %c0_8 = arith.constant 0 : index
    %c0_9 = arith.constant 0 : index
    %16 = vector.load %arg3[%c0_8, %c0_9] : memref<8x1xf32, #tpu.memory_space<vmem>>, vector<8x1xf32>
    %cst_10 = arith.constant 9.99999974E-6 : f32
    %17 = vector.broadcast %cst_10 : f32 to vector<8x1xf32>
    %18 = arith.addf %15, %17 : vector<8x1xf32>
    %19 = math.rsqrt %18 : vector<8x1xf32>
    %20 = arith.mulf %16, %19 : vector<8x1xf32>
    %21 = vector.broadcast %6 : vector<8x1xf32> to vector<8x128xf32>
    %22 = arith.subf %2, %21 : vector<8x128xf32>
    %23 = vector.broadcast %20 : vector<8x1xf32> to vector<8x128xf32>
    %24 = arith.mulf %22, %23 : vector<8x128xf32>
    %c0_11 = arith.constant 0 : index
    %c0_12 = arith.constant 0 : index
    %25 = vector.load %arg4[%c0_11, %c0_12] : memref<8x1xf32, #tpu.memory_space<vmem>>, vector<8x1xf32>
    %26 = vector.broadcast %25 : vector<8x1xf32> to vector<8x128xf32>
    %27 = arith.addf %24, %26 : vector<8x128xf32>
    %cst_13 = arith.constant 0.000000e+00 : f32
    %28 = vector.broadcast %cst_13 : f32 to vector<8x128xf32>
    %29 = arith.cmpf oge, %27, %28 : vector<8x128xf32>
    %cst_14 = arith.constant 0.00999999977 : f32
    %30 = vector.broadcast %cst_14 : f32 to vector<8x128xf32>
    %31 = arith.mulf %30, %27 : vector<8x128xf32>
    %32 = arith.select %29, %27, %31 : vector<8x128xi1>, vector<8x128xf32>
    %33 = arith.truncf %32 : vector<8x128xf32> to vector<8x128xbf16>
    %c0_15 = arith.constant 0 : index
    %c0_16 = arith.constant 0 : index
    %34 = vector.load %arg5[%c0_15, %c0_16] : memref<8x128xbf16, #tpu.memory_space<vmem>>, vector<8x128xbf16>
    tpu.vector_store %arg5[%c0_15, %c0_16], %33 {strides = array<i32>} : memref<8x128xbf16, #tpu.memory_space<vmem>>, vector<8x128xbf16>,
    return
  }
  func.func @transform_0(%arg0: i32) -> (i32, i32) {
    %c0_i32 = arith.constant 0 : i32
    %c0_i32_0 = arith.constant 0 : i32
    %c0_i32_1 = arith.constant 0 : i32
    return %c0_i32, %c0_i32_0 : i32, i32
  }
  func.func @transform_1(%arg0: i32) -> (i32, i32) {
    %c0_i32 = arith.constant 0 : i32
    %c0_i32_0 = arith.constant 0 : i32
    %c0_i32_1 = arith.constant 0 : i32
    return %c0_i32, %c0_i32_0 : i32, i32
  }
  func.func @transform_2(%arg0: i32) -> (i32, i32) {
    %c0_i32 = arith.constant 0 : i32
    %c0_i32_0 = arith.constant 0 : i32
    %c0_i32_1 = arith.constant 0 : i32
    return %c0_i32, %c0_i32_0 : i32, i32
  }
  func.func @transform_3(%arg0: i32) -> (i32, i32) {
    %c0_i32 = arith.constant 0 : i32
    %c0_i32_0 = arith.constant 0 : i32
    %c0_i32_1 = arith.constant 0 : i32
    return %c0_i32, %c0_i32_0 : i32, i32
  }
  func.func @transform_4(%arg0: i32) -> (i32, i32) {
    %c0_i32 = arith.constant 0 : i32
    %c0_i32_0 = arith.constant 0 : i32
    %c0_i32_1 = arith.constant 0 : i32
    return %c0_i32, %c0_i32_0 : i32, i32
  }
}

module attributes {stable_mosaic.version = 11 : i64} {
  func.func @_fused_conv_kernel(%arg0: i32, %arg1: memref<8x200xbf16, #tpu.memory_space<vmem>>, %arg2: memref<200x128xbf16, #tpu.memory_space<vmem>>, %arg3: memref<8x1xf32, #tpu.memory_space<vmem>>, %arg4: memref<8x1xf32, #tpu.memory_space<vmem>>, %arg5: memref<8x128xbf16, #tpu.memory_space<vmem>>) attributes {dimension_semantics = [#tpu.dimension_semantics<arbitrary>], iteration_bounds = array<i64: 1>, scalar_prefetch = 0 : i64, scratch_operands = 0 : i64, tpu.core_type = #tpu.core_type<tc>, window_params = [{pipeline_mode = #tpu.pipeline_mode<synchronous>, transform_indices = @transform_0, window_bounds = array<i64: 8, 200>}, {pipeline_mode = #tpu.pipeline_mode<synchronous>, transform_indices = @transform_1, window_bounds = array<i64: 200, 128>}, {pipeline_mode = #tpu.pipeline_mode<synchronous>, transform_indices = @transform_2, window_bounds = array<i64: 8, 1>}, {pipeline_mode = #tpu.pipeline_mode<synchronous>, transform_indices = @transform_3, window_bounds = array<i64: 8, 1>}, {pipeline_mode = #tpu.pipeline_mode<synchronous>, transform_indices = @transform_4, window_bounds = array<i64: 8, 128>}]} {
    %c0 = arith.constant 0 : index
    %c0_0 = arith.constant 0 : index
    %0 = vector.load %arg1[%c0, %c0_0] : memref<8x200xbf16, #tpu.memory_space<vmem>>, vector<8x200xbf16>
    %c0_1 = arith.constant 0 : index
    %c0_2 = arith.constant 0 : index
    %1 = vector.load %arg2[%c0_1, %c0_2] : memref<200x128xbf16, #tpu.memory_space<vmem>>, vector<200x128xbf16>
    %cst = arith.constant dense<0.000000e+00> : vector<8x128xf32>
    %2 = tpu.matmul %0, %1, %cst {dimension_numbers = #tpu.dot_dimension_numbers<[1], [0], [0], [1], [0, 0, 1, 1], [], []>} : vector<8x200xbf16>, vector<200x128xbf16>, vector<8x128xf32> -> vector<8x128xf32>
    %cst_3 = arith.constant dense<0.000000e+00> : vector<8xf32>
    %3 = vector.multi_reduction <add>, %2, %cst_3 [1] : vector<8x128xf32> to vector<8xf32>
    %4 = vector.shape_cast %3 : vector<8xf32> to vector<8x1xf32>
    %cst_4 = arith.constant 7.812500e-03 : f32
    %5 = vector.broadcast %cst_4 : f32 to vector<8x1xf32>
    %6 = arith.mulf %4, %5 : vector<8x1xf32>
    %7 = arith.mulf %2, %2 : vector<8x128xf32>
    %cst_5 = arith.constant dense<0.000000e+00> : vector<8xf32>
    %8 = vector.multi_reduction <add>, %7, %cst_5 [1] : vector<8x128xf32> to vector<8xf32>
    %9 = vector.shape_cast %8 : vector<8xf32> to vector<8x1xf32>
    %cst_6 = arith.constant 7.812500e-03 : f32
    %10 = vector.broadcast %cst_6 : f32 to vector<8x1xf32>
    %11 = arith.mulf %9, %10 : vector<8x1xf32>
    %12 = arith.mulf %6, %6 : vector<8x1xf32>
    %13 = arith.subf %11, %12 : vector<8x1xf32>
    %cst_7 = arith.constant 0.000000e+00 : f32
    %14 = vector.broadcast %cst_7 : f32 to vector<8x1xf32>
    %15 = arith.maximumf %13, %14 : vector<8x1xf32>
    %c0_8 = arith.constant 0 : index
    %c0_9 = arith.constant 0 : index
    %16 = vector.load %arg3[%c0_8, %c0_9] : memref<8x1xf32, #tpu.memory_space<vmem>>, vector<8x1xf32>
    %cst_10 = arith.constant 9.99999974E-6 : f32
    %17 = vector.broadcast %cst_10 : f32 to vector<8x1xf32>
    %18 = arith.addf %15, %17 : vector<8x1xf32>
    %19 = math.rsqrt %18 : vector<8x1xf32>
    %20 = arith.mulf %16, %19 : vector<8x1xf32>
    %21 = vector.broadcast %6 : vector<8x1xf32> to vector<8x128xf32>
    %22 = arith.subf %2, %21 : vector<8x128xf32>
    %23 = vector.broadcast %20 : vector<8x1xf32> to vector<8x128xf32>
    %24 = arith.mulf %22, %23 : vector<8x128xf32>
    %c0_11 = arith.constant 0 : index
    %c0_12 = arith.constant 0 : index
    %25 = vector.load %arg4[%c0_11, %c0_12] : memref<8x1xf32, #tpu.memory_space<vmem>>, vector<8x1xf32>
    %26 = vector.broadcast %25 : vector<8x1xf32> to vector<8x128xf32>
    %27 = arith.addf %24, %26 : vector<8x128xf32>
    %cst_13 = arith.constant 0.000000e+00 : f32
    %28 = vector.broadcast %cst_13 : f32 to vector<8x128xf32>
    %29 = arith.cmpf oge, %27, %28 : vector<8x128xf32>
    %cst_14 = arith.constant 0.00999999977 : f32
    %30 = vector.broadcast %cst_14 : f32 to vector<8x128xf32>
    %31 = arith.mulf %30, %27 : vector<8x128xf32>
    %32 = arith.select %29, %27, %31 : vector<8x128xi1>, vector<8x128xf32>
    %33 = arith.truncf %32 : vector<8x128xf32> to vector<8x128xbf16>
    %c0_15 = arith.constant 0 : index
    %c0_16 = arith.constant 0 : index
    %34 = vector.load %arg5[%c0_15, %c0_16] : memref<8x128xbf16, #tpu.memory_space<vmem>>, vector<8x128xbf16>
    tpu.vector_store %arg5[%c0_15, %c0_16], %33 {strides = array<i32>} : memref<8x128xbf16, #tpu.memory_space<vmem>>, vector<8x128xbf16>,
    return
  }
  func.func @transform_0(%arg0: i32) -> (i32, i32) {
    %c0_i32 = arith.constant 0 : i32
    %c0_i32_0 = arith.constant 0 : i32
    %c0_i32_1 = arith.constant 0 : i32
    return %c0_i32, %c0_i32_0 : i32, i32
  }
  func.func @transform_1(%arg0: i32) -> (i32, i32) {
    %c0_i32 = arith.constant 0 : i32
    %c0_i32_0 = arith.constant 0 : i32
    %c0_i32_1 = arith.constant 0 : i32
    return %c0_i32, %c0_i32_0 : i32, i32
  }
  func.func @transform_2(%arg0: i32) -> (i32, i32) {
    %c0_i32 = arith.constant 0 : i32
    %c0_i32_0 = arith.constant 0 : i32
    %c0_i32_1 = arith.constant 0 : i32
    return %c0_i32, %c0_i32_0 : i32, i32
  }
  func.func @transform_3(%arg0: i32) -> (i32, i32) {
    %c0_i32 = arith.constant 0 : i32
    %c0_i32_0 = arith.constant 0 : i32
    %c0_i32_1 = arith.constant 0 : i32
    return %c0_i32, %c0_i32_0 : i32, i32
  }
  func.func @transform_4(%arg0: i32) -> (i32, i32) {
    %c0_i32 = arith.constant 0 : i32
    %c0_i32_0 = arith.constant 0 : i32
    %c0_i32_1 = arith.constant 0 : i32
    return %c0_i32, %c0_i32_0 : i32, i32
  }
}

module attributes {stable_mosaic.version = 11 : i64} {
  func.func @_fused_conv_kernel(%arg0: i32, %arg1: memref<8x16xbf16, #tpu.memory_space<vmem>>, %arg2: memref<16x128xbf16, #tpu.memory_space<vmem>>, %arg3: memref<8x1xf32, #tpu.memory_space<vmem>>, %arg4: memref<8x1xf32, #tpu.memory_space<vmem>>, %arg5: memref<8x128xbf16, #tpu.memory_space<vmem>>) attributes {dimension_semantics = [#tpu.dimension_semantics<arbitrary>], iteration_bounds = array<i64: 1>, scalar_prefetch = 0 : i64, scratch_operands = 0 : i64, tpu.core_type = #tpu.core_type<tc>, window_params = [{pipeline_mode = #tpu.pipeline_mode<synchronous>, transform_indices = @transform_0, window_bounds = array<i64: 8, 16>}, {pipeline_mode = #tpu.pipeline_mode<synchronous>, transform_indices = @transform_1, window_bounds = array<i64: 16, 128>}, {pipeline_mode = #tpu.pipeline_mode<synchronous>, transform_indices = @transform_2, window_bounds = array<i64: 8, 1>}, {pipeline_mode = #tpu.pipeline_mode<synchronous>, transform_indices = @transform_3, window_bounds = array<i64: 8, 1>}, {pipeline_mode = #tpu.pipeline_mode<synchronous>, transform_indices = @transform_4, window_bounds = array<i64: 8, 128>}]} {
    %c0 = arith.constant 0 : index
    %c0_0 = arith.constant 0 : index
    %0 = vector.load %arg1[%c0, %c0_0] : memref<8x16xbf16, #tpu.memory_space<vmem>>, vector<8x16xbf16>
    %c0_1 = arith.constant 0 : index
    %c0_2 = arith.constant 0 : index
    %1 = vector.load %arg2[%c0_1, %c0_2] : memref<16x128xbf16, #tpu.memory_space<vmem>>, vector<16x128xbf16>
    %cst = arith.constant dense<0.000000e+00> : vector<8x128xf32>
    %2 = tpu.matmul %0, %1, %cst {dimension_numbers = #tpu.dot_dimension_numbers<[1], [0], [0], [1], [0, 0, 1, 1], [], []>} : vector<8x16xbf16>, vector<16x128xbf16>, vector<8x128xf32> -> vector<8x128xf32>
    %cst_3 = arith.constant dense<0.000000e+00> : vector<8xf32>
    %3 = vector.multi_reduction <add>, %2, %cst_3 [1] : vector<8x128xf32> to vector<8xf32>
    %4 = vector.shape_cast %3 : vector<8xf32> to vector<8x1xf32>
    %cst_4 = arith.constant 7.812500e-03 : f32
    %5 = vector.broadcast %cst_4 : f32 to vector<8x1xf32>
    %6 = arith.mulf %4, %5 : vector<8x1xf32>
    %7 = arith.mulf %2, %2 : vector<8x128xf32>
    %cst_5 = arith.constant dense<0.000000e+00> : vector<8xf32>
    %8 = vector.multi_reduction <add>, %7, %cst_5 [1] : vector<8x128xf32> to vector<8xf32>
    %9 = vector.shape_cast %8 : vector<8xf32> to vector<8x1xf32>
    %cst_6 = arith.constant 7.812500e-03 : f32
    %10 = vector.broadcast %cst_6 : f32 to vector<8x1xf32>
    %11 = arith.mulf %9, %10 : vector<8x1xf32>
    %12 = arith.mulf %6, %6 : vector<8x1xf32>
    %13 = arith.subf %11, %12 : vector<8x1xf32>
    %cst_7 = arith.constant 0.000000e+00 : f32
    %14 = vector.broadcast %cst_7 : f32 to vector<8x1xf32>
    %15 = arith.maximumf %13, %14 : vector<8x1xf32>
    %c0_8 = arith.constant 0 : index
    %c0_9 = arith.constant 0 : index
    %16 = vector.load %arg3[%c0_8, %c0_9] : memref<8x1xf32, #tpu.memory_space<vmem>>, vector<8x1xf32>
    %cst_10 = arith.constant 9.99999974E-6 : f32
    %17 = vector.broadcast %cst_10 : f32 to vector<8x1xf32>
    %18 = arith.addf %15, %17 : vector<8x1xf32>
    %19 = math.rsqrt %18 : vector<8x1xf32>
    %20 = arith.mulf %16, %19 : vector<8x1xf32>
    %21 = vector.broadcast %6 : vector<8x1xf32> to vector<8x128xf32>
    %22 = arith.subf %2, %21 : vector<8x128xf32>
    %23 = vector.broadcast %20 : vector<8x1xf32> to vector<8x128xf32>
    %24 = arith.mulf %22, %23 : vector<8x128xf32>
    %c0_11 = arith.constant 0 : index
    %c0_12 = arith.constant 0 : index
    %25 = vector.load %arg4[%c0_11, %c0_12] : memref<8x1xf32, #tpu.memory_space<vmem>>, vector<8x1xf32>
    %26 = vector.broadcast %25 : vector<8x1xf32> to vector<8x128xf32>
    %27 = arith.addf %24, %26 : vector<8x128xf32>
    %cst_13 = arith.constant 0.000000e+00 : f32
    %28 = vector.broadcast %cst_13 : f32 to vector<8x128xf32>
    %29 = arith.cmpf oge, %27, %28 : vector<8x128xf32>
    %cst_14 = arith.constant 0.00999999977 : f32
    %30 = vector.broadcast %cst_14 : f32 to vector<8x128xf32>
    %31 = arith.mulf %30, %27 : vector<8x128xf32>
    %32 = arith.select %29, %27, %31 : vector<8x128xi1>, vector<8x128xf32>
    %33 = arith.truncf %32 : vector<8x128xf32> to vector<8x128xbf16>
    %c0_15 = arith.constant 0 : index
    %c0_16 = arith.constant 0 : index
    %34 = vector.load %arg5[%c0_15, %c0_16] : memref<8x128xbf16, #tpu.memory_space<vmem>>, vector<8x128xbf16>
    tpu.vector_store %arg5[%c0_15, %c0_16], %33 {strides = array<i32>} : memref<8x128xbf16, #tpu.memory_space<vmem>>, vector<8x128xbf16>,
    return
  }
  func.func @transform_0(%arg0: i32) -> (i32, i32) {
    %c0_i32 = arith.constant 0 : i32
    %c0_i32_0 = arith.constant 0 : i32
    %c0_i32_1 = arith.constant 0 : i32
    return %c0_i32, %c0_i32_0 : i32, i32
  }
  func.func @transform_1(%arg0: i32) -> (i32, i32) {
    %c0_i32 = arith.constant 0 : i32
    %c0_i32_0 = arith.constant 0 : i32
    %c0_i32_1 = arith.constant 0 : i32
    return %c0_i32, %c0_i32_0 : i32, i32
  }
  func.func @transform_2(%arg0: i32) -> (i32, i32) {
    %c0_i32 = arith.constant 0 : i32
    %c0_i32_0 = arith.constant 0 : i32
    %c0_i32_1 = arith.constant 0 : i32
    return %c0_i32, %c0_i32_0 : i32, i32
  }
  func.func @transform_3(%arg0: i32) -> (i32, i32) {
    %c0_i32 = arith.constant 0 : i32
    %c0_i32_0 = arith.constant 0 : i32
    %c0_i32_1 = arith.constant 0 : i32
    return %c0_i32, %c0_i32_0 : i32, i32
  }
  func.func @transform_4(%arg0: i32) -> (i32, i32) {
    %c0_i32 = arith.constant 0 : i32
    %c0_i32_0 = arith.constant 0 : i32
    %c0_i32_1 = arith.constant 0 : i32
    return %c0_i32, %c0_i32_0 : i32, i32
  }
}

module attributes {stable_mosaic.version = 11 : i64} {
  func.func @_fused_conv_kernel(%arg0: i32, %arg1: memref<32x72xbf16, #tpu.memory_space<vmem>>, %arg2: memref<72x128xbf16, #tpu.memory_space<vmem>>, %arg3: memref<32x1xf32, #tpu.memory_space<vmem>>, %arg4: memref<32x128xbf16, #tpu.memory_space<vmem>>) attributes {dimension_semantics = [#tpu.dimension_semantics<arbitrary>], iteration_bounds = array<i64: 1>, scalar_prefetch = 0 : i64, scratch_operands = 0 : i64, tpu.core_type = #tpu.core_type<tc>, window_params = [{pipeline_mode = #tpu.pipeline_mode<synchronous>, transform_indices = @transform_0, window_bounds = array<i64: 32, 72>}, {pipeline_mode = #tpu.pipeline_mode<synchronous>, transform_indices = @transform_1, window_bounds = array<i64: 72, 128>}, {pipeline_mode = #tpu.pipeline_mode<synchronous>, transform_indices = @transform_2, window_bounds = array<i64: 32, 1>}, {pipeline_mode = #tpu.pipeline_mode<synchronous>, transform_indices = @transform_3, window_bounds = array<i64: 32, 128>}]} {
    %c0 = arith.constant 0 : index
    %c0_0 = arith.constant 0 : index
    %0 = vector.load %arg1[%c0, %c0_0] : memref<32x72xbf16, #tpu.memory_space<vmem>>, vector<32x72xbf16>
    %c0_1 = arith.constant 0 : index
    %c0_2 = arith.constant 0 : index
    %1 = vector.load %arg2[%c0_1, %c0_2] : memref<72x128xbf16, #tpu.memory_space<vmem>>, vector<72x128xbf16>
    %cst = arith.constant dense<0.000000e+00> : vector<32x128xf32>
    %2 = tpu.matmul %0, %1, %cst {dimension_numbers = #tpu.dot_dimension_numbers<[1], [0], [0], [1], [0, 0, 1, 1], [], []>} : vector<32x72xbf16>, vector<72x128xbf16>, vector<32x128xf32> -> vector<32x128xf32>
    %c0_3 = arith.constant 0 : index
    %c0_4 = arith.constant 0 : index
    %3 = vector.load %arg3[%c0_3, %c0_4] : memref<32x1xf32, #tpu.memory_space<vmem>>, vector<32x1xf32>
    %4 = vector.broadcast %3 : vector<32x1xf32> to vector<32x128xf32>
    %5 = arith.addf %2, %4 : vector<32x128xf32>
    %6 = arith.truncf %5 : vector<32x128xf32> to vector<32x128xbf16>
    %c0_5 = arith.constant 0 : index
    %c0_6 = arith.constant 0 : index
    %7 = vector.load %arg4[%c0_5, %c0_6] : memref<32x128xbf16, #tpu.memory_space<vmem>>, vector<32x128xbf16>
    tpu.vector_store %arg4[%c0_5, %c0_6], %6 {strides = array<i32>} : memref<32x128xbf16, #tpu.memory_space<vmem>>, vector<32x128xbf16>,
    return
  }
  func.func @transform_0(%arg0: i32) -> (i32, i32) {
    %c0_i32 = arith.constant 0 : i32
    %c0_i32_0 = arith.constant 0 : i32
    %c0_i32_1 = arith.constant 0 : i32
    return %c0_i32, %c0_i32_0 : i32, i32
  }
  func.func @transform_1(%arg0: i32) -> (i32, i32) {
    %c0_i32 = arith.constant 0 : i32
    %c0_i32_0 = arith.constant 0 : i32
    %c0_i32_1 = arith.constant 0 : i32
    return %c0_i32, %c0_i32_0 : i32, i32
  }
  func.func @transform_2(%arg0: i32) -> (i32, i32) {
    %c0_i32 = arith.constant 0 : i32
    %c0_i32_0 = arith.constant 0 : i32
    %c0_i32_1 = arith.constant 0 : i32
    return %c0_i32, %c0_i32_0 : i32, i32
  }
  func.func @transform_3(%arg0: i32) -> (i32, i32) {
    %c0_i32 = arith.constant 0 : i32
    %c0_i32_0 = arith.constant 0 : i32
    %c0_i32_1 = arith.constant 0 : i32
    return %c0_i32, %c0_i32_0 : i32, i32
  }
}

module attributes {stable_mosaic.version = 11 : i64} {
  func.func @_fused_conv_kernel(%arg0: i32, %arg1: memref<8x72xbf16, #tpu.memory_space<vmem>>, %arg2: memref<72x512xbf16, #tpu.memory_space<vmem>>, %arg3: memref<8x1xf32, #tpu.memory_space<vmem>>, %arg4: memref<8x1xf32, #tpu.memory_space<vmem>>, %arg5: memref<8x512xbf16, #tpu.memory_space<vmem>>, %arg6: memref<8x512xbf16, #tpu.memory_space<vmem>>) attributes {dimension_semantics = [#tpu.dimension_semantics<arbitrary>], iteration_bounds = array<i64: 1>, scalar_prefetch = 0 : i64, scratch_operands = 0 : i64, tpu.core_type = #tpu.core_type<tc>, window_params = [{pipeline_mode = #tpu.pipeline_mode<synchronous>, transform_indices = @transform_0, window_bounds = array<i64: 8, 72>}, {pipeline_mode = #tpu.pipeline_mode<synchronous>, transform_indices = @transform_1, window_bounds = array<i64: 72, 512>}, {pipeline_mode = #tpu.pipeline_mode<synchronous>, transform_indices = @transform_2, window_bounds = array<i64: 8, 1>}, {pipeline_mode = #tpu.pipeline_mode<synchronous>, transform_indices = @transform_3, window_bounds = array<i64: 8, 1>}, {pipeline_mode = #tpu.pipeline_mode<synchronous>, transform_indices = @transform_4, window_bounds = array<i64: 8, 512>}, {pipeline_mode = #tpu.pipeline_mode<synchronous>, transform_indices = @transform_5, window_bounds = array<i64: 8, 512>}]} {
    %c0 = arith.constant 0 : index
    %c0_0 = arith.constant 0 : index
    %0 = vector.load %arg1[%c0, %c0_0] : memref<8x72xbf16, #tpu.memory_space<vmem>>, vector<8x72xbf16>
    %c0_1 = arith.constant 0 : index
    %c0_2 = arith.constant 0 : index
    %1 = vector.load %arg2[%c0_1, %c0_2] : memref<72x512xbf16, #tpu.memory_space<vmem>>, vector<72x512xbf16>
    %cst = arith.constant dense<0.000000e+00> : vector<8x512xf32>
    %2 = tpu.matmul %0, %1, %cst {dimension_numbers = #tpu.dot_dimension_numbers<[1], [0], [0], [1], [0, 0, 1, 1], [], []>} : vector<8x72xbf16>, vector<72x512xbf16>, vector<8x512xf32> -> vector<8x512xf32>
    %cst_3 = arith.constant dense<0.000000e+00> : vector<8xf32>
    %3 = vector.multi_reduction <add>, %2, %cst_3 [1] : vector<8x512xf32> to vector<8xf32>
    %4 = vector.shape_cast %3 : vector<8xf32> to vector<8x1xf32>
    %cst_4 = arith.constant 0.001953125 : f32
    %5 = vector.broadcast %cst_4 : f32 to vector<8x1xf32>
    %6 = arith.mulf %4, %5 : vector<8x1xf32>
    %7 = arith.mulf %2, %2 : vector<8x512xf32>
    %cst_5 = arith.constant dense<0.000000e+00> : vector<8xf32>
    %8 = vector.multi_reduction <add>, %7, %cst_5 [1] : vector<8x512xf32> to vector<8xf32>
    %9 = vector.shape_cast %8 : vector<8xf32> to vector<8x1xf32>
    %cst_6 = arith.constant 0.001953125 : f32
    %10 = vector.broadcast %cst_6 : f32 to vector<8x1xf32>
    %11 = arith.mulf %9, %10 : vector<8x1xf32>
    %12 = arith.mulf %6, %6 : vector<8x1xf32>
    %13 = arith.subf %11, %12 : vector<8x1xf32>
    %cst_7 = arith.constant 0.000000e+00 : f32
    %14 = vector.broadcast %cst_7 : f32 to vector<8x1xf32>
    %15 = arith.maximumf %13, %14 : vector<8x1xf32>
    %c0_8 = arith.constant 0 : index
    %c0_9 = arith.constant 0 : index
    %16 = vector.load %arg3[%c0_8, %c0_9] : memref<8x1xf32, #tpu.memory_space<vmem>>, vector<8x1xf32>
    %cst_10 = arith.constant 9.99999974E-6 : f32
    %17 = vector.broadcast %cst_10 : f32 to vector<8x1xf32>
    %18 = arith.addf %15, %17 : vector<8x1xf32>
    %19 = math.rsqrt %18 : vector<8x1xf32>
    %20 = arith.mulf %16, %19 : vector<8x1xf32>
    %21 = vector.broadcast %6 : vector<8x1xf32> to vector<8x512xf32>
    %22 = arith.subf %2, %21 : vector<8x512xf32>
    %23 = vector.broadcast %20 : vector<8x1xf32> to vector<8x512xf32>
    %24 = arith.mulf %22, %23 : vector<8x512xf32>
    %c0_11 = arith.constant 0 : index
    %c0_12 = arith.constant 0 : index
    %25 = vector.load %arg4[%c0_11, %c0_12] : memref<8x1xf32, #tpu.memory_space<vmem>>, vector<8x1xf32>
    %26 = vector.broadcast %25 : vector<8x1xf32> to vector<8x512xf32>
    %27 = arith.addf %24, %26 : vector<8x512xf32>
    %c0_13 = arith.constant 0 : index
    %c0_14 = arith.constant 0 : index
    %28 = vector.load %arg5[%c0_13, %c0_14] : memref<8x512xbf16, #tpu.memory_space<vmem>>, vector<8x512xbf16>
    %29 = arith.extf %28 : vector<8x512xbf16> to vector<8x512xf32>
    %30 = arith.addf %27, %29 : vector<8x512xf32>
    %31 = arith.truncf %30 : vector<8x512xf32> to vector<8x512xbf16>
    %c0_15 = arith.constant 0 : index
    %c0_16 = arith.constant 0 : index
    %32 = vector.load %arg6[%c0_15, %c0_16] : memref<8x512xbf16, #tpu.memory_space<vmem>>, vector<8x512xbf16>
    tpu.vector_store %arg6[%c0_15, %c0_16], %31 {strides = array<i32>} : memref<8x512xbf16, #tpu.memory_space<vmem>>, vector<8x512xbf16>,
    return
  }
  func.func @transform_0(%arg0: i32) -> (i32, i32) {
    %c0_i32 = arith.constant 0 : i32
    %c0_i32_0 = arith.constant 0 : i32
    %c0_i32_1 = arith.constant 0 : i32
    return %c0_i32, %c0_i32_0 : i32, i32
  }
  func.func @transform_1(%arg0: i32) -> (i32, i32) {
    %c0_i32 = arith.constant 0 : i32
    %c0_i32_0 = arith.constant 0 : i32
    %c0_i32_1 = arith.constant 0 : i32
    return %c0_i32, %c0_i32_0 : i32, i32
  }
  func.func @transform_2(%arg0: i32) -> (i32, i32) {
    %c0_i32 = arith.constant 0 : i32
    %c0_i32_0 = arith.constant 0 : i32
    %c0_i32_1 = arith.constant 0 : i32
    return %c0_i32, %c0_i32_0 : i32, i32
  }
  func.func @transform_3(%arg0: i32) -> (i32, i32) {
    %c0_i32 = arith.constant 0 : i32
    %c0_i32_0 = arith.constant 0 : i32
    %c0_i32_1 = arith.constant 0 : i32
    return %c0_i32, %c0_i32_0 : i32, i32
  }
  func.func @transform_4(%arg0: i32) -> (i32, i32) {
    %c0_i32 = arith.constant 0 : i32
    %c0_i32_0 = arith.constant 0 : i32
    %c0_i32_1 = arith.constant 0 : i32
    return %c0_i32, %c0_i32_0 : i32, i32
  }
  func.func @transform_5(%arg0: i32) -> (i32, i32) {
    %c0_i32 = arith.constant 0 : i32
    %c0_i32_0 = arith.constant 0 : i32
    %c0_i32_1 = arith.constant 0 : i32
    return %c0_i32, %c0_i32_0 : i32, i32
  }
}

module attributes {stable_mosaic.version = 11 : i64} {
  func.func @_fused_conv_kernel(%arg0: i32, %arg1: memref<8x8xbf16, #tpu.memory_space<vmem>>, %arg2: memref<8x512xbf16, #tpu.memory_space<vmem>>, %arg3: memref<8x1xf32, #tpu.memory_space<vmem>>, %arg4: memref<8x1xf32, #tpu.memory_space<vmem>>, %arg5: memref<8x512xf32, #tpu.memory_space<vmem>>, %arg6: memref<8x512xbf16, #tpu.memory_space<vmem>>) attributes {dimension_semantics = [#tpu.dimension_semantics<arbitrary>], iteration_bounds = array<i64: 1>, scalar_prefetch = 0 : i64, scratch_operands = 0 : i64, tpu.core_type = #tpu.core_type<tc>, window_params = [{pipeline_mode = #tpu.pipeline_mode<synchronous>, transform_indices = @transform_0, window_bounds = array<i64: 8, 8>}, {pipeline_mode = #tpu.pipeline_mode<synchronous>, transform_indices = @transform_1, window_bounds = array<i64: 8, 512>}, {pipeline_mode = #tpu.pipeline_mode<synchronous>, transform_indices = @transform_2, window_bounds = array<i64: 8, 1>}, {pipeline_mode = #tpu.pipeline_mode<synchronous>, transform_indices = @transform_3, window_bounds = array<i64: 8, 1>}, {pipeline_mode = #tpu.pipeline_mode<synchronous>, transform_indices = @transform_4, window_bounds = array<i64: 8, 512>}, {pipeline_mode = #tpu.pipeline_mode<synchronous>, transform_indices = @transform_5, window_bounds = array<i64: 8, 512>}]} {
    %c0 = arith.constant 0 : index
    %c0_0 = arith.constant 0 : index
    %0 = vector.load %arg1[%c0, %c0_0] : memref<8x8xbf16, #tpu.memory_space<vmem>>, vector<8x8xbf16>
    %c0_1 = arith.constant 0 : index
    %c0_2 = arith.constant 0 : index
    %1 = vector.load %arg2[%c0_1, %c0_2] : memref<8x512xbf16, #tpu.memory_space<vmem>>, vector<8x512xbf16>
    %cst = arith.constant dense<0.000000e+00> : vector<8x512xf32>
    %2 = tpu.matmul %0, %1, %cst {dimension_numbers = #tpu.dot_dimension_numbers<[1], [0], [0], [1], [0, 0, 1, 1], [], []>} : vector<8x8xbf16>, vector<8x512xbf16>, vector<8x512xf32> -> vector<8x512xf32>
    %cst_3 = arith.constant dense<0.000000e+00> : vector<8xf32>
    %3 = vector.multi_reduction <add>, %2, %cst_3 [1] : vector<8x512xf32> to vector<8xf32>
    %4 = vector.shape_cast %3 : vector<8xf32> to vector<8x1xf32>
    %cst_4 = arith.constant 0.001953125 : f32
    %5 = vector.broadcast %cst_4 : f32 to vector<8x1xf32>
    %6 = arith.mulf %4, %5 : vector<8x1xf32>
    %7 = arith.mulf %2, %2 : vector<8x512xf32>
    %cst_5 = arith.constant dense<0.000000e+00> : vector<8xf32>
    %8 = vector.multi_reduction <add>, %7, %cst_5 [1] : vector<8x512xf32> to vector<8xf32>
    %9 = vector.shape_cast %8 : vector<8xf32> to vector<8x1xf32>
    %cst_6 = arith.constant 0.001953125 : f32
    %10 = vector.broadcast %cst_6 : f32 to vector<8x1xf32>
    %11 = arith.mulf %9, %10 : vector<8x1xf32>
    %12 = arith.mulf %6, %6 : vector<8x1xf32>
    %13 = arith.subf %11, %12 : vector<8x1xf32>
    %cst_7 = arith.constant 0.000000e+00 : f32
    %14 = vector.broadcast %cst_7 : f32 to vector<8x1xf32>
    %15 = arith.maximumf %13, %14 : vector<8x1xf32>
    %c0_8 = arith.constant 0 : index
    %c0_9 = arith.constant 0 : index
    %16 = vector.load %arg3[%c0_8, %c0_9] : memref<8x1xf32, #tpu.memory_space<vmem>>, vector<8x1xf32>
    %cst_10 = arith.constant 9.99999974E-6 : f32
    %17 = vector.broadcast %cst_10 : f32 to vector<8x1xf32>
    %18 = arith.addf %15, %17 : vector<8x1xf32>
    %19 = math.rsqrt %18 : vector<8x1xf32>
    %20 = arith.mulf %16, %19 : vector<8x1xf32>
    %21 = vector.broadcast %6 : vector<8x1xf32> to vector<8x512xf32>
    %22 = arith.subf %2, %21 : vector<8x512xf32>
    %23 = vector.broadcast %20 : vector<8x1xf32> to vector<8x512xf32>
    %24 = arith.mulf %22, %23 : vector<8x512xf32>
    %c0_11 = arith.constant 0 : index
    %c0_12 = arith.constant 0 : index
    %25 = vector.load %arg4[%c0_11, %c0_12] : memref<8x1xf32, #tpu.memory_space<vmem>>, vector<8x1xf32>
    %26 = vector.broadcast %25 : vector<8x1xf32> to vector<8x512xf32>
    %27 = arith.addf %24, %26 : vector<8x512xf32>
    %c0_13 = arith.constant 0 : index
    %c0_14 = arith.constant 0 : index
    %28 = vector.load %arg5[%c0_13, %c0_14] : memref<8x512xf32, #tpu.memory_space<vmem>>, vector<8x512xf32>
    %29 = arith.addf %27, %28 : vector<8x512xf32>
    %30 = arith.truncf %29 : vector<8x512xf32> to vector<8x512xbf16>
    %c0_15 = arith.constant 0 : index
    %c0_16 = arith.constant 0 : index
    %31 = vector.load %arg6[%c0_15, %c0_16] : memref<8x512xbf16, #tpu.memory_space<vmem>>, vector<8x512xbf16>
    tpu.vector_store %arg6[%c0_15, %c0_16], %30 {strides = array<i32>} : memref<8x512xbf16, #tpu.memory_space<vmem>>, vector<8x512xbf16>,
    return
  }
  func.func @transform_0(%arg0: i32) -> (i32, i32) {
    %c0_i32 = arith.constant 0 : i32
    %c0_i32_0 = arith.constant 0 : i32
    %c0_i32_1 = arith.constant 0 : i32
    return %c0_i32, %c0_i32_0 : i32, i32
  }
  func.func @transform_1(%arg0: i32) -> (i32, i32) {
    %c0_i32 = arith.constant 0 : i32
    %c0_i32_0 = arith.constant 0 : i32
    %c0_i32_1 = arith.constant 0 : i32
    return %c0_i32, %c0_i32_0 : i32, i32
  }
  func.func @transform_2(%arg0: i32) -> (i32, i32) {
    %c0_i32 = arith.constant 0 : i32
    %c0_i32_0 = arith.constant 0 : i32
    %c0_i32_1 = arith.constant 0 : i32
    return %c0_i32, %c0_i32_0 : i32, i32
  }
  func.func @transform_3(%arg0: i32) -> (i32, i32) {
    %c0_i32 = arith.constant 0 : i32
    %c0_i32_0 = arith.constant 0 : i32
    %c0_i32_1 = arith.constant 0 : i32
    return %c0_i32, %c0_i32_0 : i32, i32
  }
  func.func @transform_4(%arg0: i32) -> (i32, i32) {
    %c0_i32 = arith.constant 0 : i32
    %c0_i32_0 = arith.constant 0 : i32
    %c0_i32_1 = arith.constant 0 : i32
    return %c0_i32, %c0_i32_0 : i32, i32
  }
  func.func @transform_5(%arg0: i32) -> (i32, i32) {
    %c0_i32 = arith.constant 0 : i32
    %c0_i32_0 = arith.constant 0 : i32
    %c0_i32_1 = arith.constant 0 : i32
    return %c0_i32, %c0_i32_0 : i32, i32
  }
}

module attributes {stable_mosaic.version = 11 : i64} {
  func.func @_fused_conv_kernel(%arg0: i32, %arg1: memref<8x8xbf16, #tpu.memory_space<vmem>>, %arg2: memref<8x512xbf16, #tpu.memory_space<vmem>>, %arg3: memref<8x1xf32, #tpu.memory_space<vmem>>, %arg4: memref<8x1xf32, #tpu.memory_space<vmem>>, %arg5: memref<8x512xf32, #tpu.memory_space<vmem>>) attributes {dimension_semantics = [#tpu.dimension_semantics<arbitrary>], iteration_bounds = array<i64: 1>, scalar_prefetch = 0 : i64, scratch_operands = 0 : i64, tpu.core_type = #tpu.core_type<tc>, window_params = [{pipeline_mode = #tpu.pipeline_mode<synchronous>, transform_indices = @transform_0, window_bounds = array<i64: 8, 8>}, {pipeline_mode = #tpu.pipeline_mode<synchronous>, transform_indices = @transform_1, window_bounds = array<i64: 8, 512>}, {pipeline_mode = #tpu.pipeline_mode<synchronous>, transform_indices = @transform_2, window_bounds = array<i64: 8, 1>}, {pipeline_mode = #tpu.pipeline_mode<synchronous>, transform_indices = @transform_3, window_bounds = array<i64: 8, 1>}, {pipeline_mode = #tpu.pipeline_mode<synchronous>, transform_indices = @transform_4, window_bounds = array<i64: 8, 512>}]} {
    %c0 = arith.constant 0 : index
    %c0_0 = arith.constant 0 : index
    %0 = vector.load %arg1[%c0, %c0_0] : memref<8x8xbf16, #tpu.memory_space<vmem>>, vector<8x8xbf16>
    %c0_1 = arith.constant 0 : index
    %c0_2 = arith.constant 0 : index
    %1 = vector.load %arg2[%c0_1, %c0_2] : memref<8x512xbf16, #tpu.memory_space<vmem>>, vector<8x512xbf16>
    %cst = arith.constant dense<0.000000e+00> : vector<8x512xf32>
    %2 = tpu.matmul %0, %1, %cst {dimension_numbers = #tpu.dot_dimension_numbers<[1], [0], [0], [1], [0, 0, 1, 1], [], []>} : vector<8x8xbf16>, vector<8x512xbf16>, vector<8x512xf32> -> vector<8x512xf32>
    %cst_3 = arith.constant dense<0.000000e+00> : vector<8xf32>
    %3 = vector.multi_reduction <add>, %2, %cst_3 [1] : vector<8x512xf32> to vector<8xf32>
    %4 = vector.shape_cast %3 : vector<8xf32> to vector<8x1xf32>
    %cst_4 = arith.constant 0.001953125 : f32
    %5 = vector.broadcast %cst_4 : f32 to vector<8x1xf32>
    %6 = arith.mulf %4, %5 : vector<8x1xf32>
    %7 = arith.mulf %2, %2 : vector<8x512xf32>
    %cst_5 = arith.constant dense<0.000000e+00> : vector<8xf32>
    %8 = vector.multi_reduction <add>, %7, %cst_5 [1] : vector<8x512xf32> to vector<8xf32>
    %9 = vector.shape_cast %8 : vector<8xf32> to vector<8x1xf32>
    %cst_6 = arith.constant 0.001953125 : f32
    %10 = vector.broadcast %cst_6 : f32 to vector<8x1xf32>
    %11 = arith.mulf %9, %10 : vector<8x1xf32>
    %12 = arith.mulf %6, %6 : vector<8x1xf32>
    %13 = arith.subf %11, %12 : vector<8x1xf32>
    %cst_7 = arith.constant 0.000000e+00 : f32
    %14 = vector.broadcast %cst_7 : f32 to vector<8x1xf32>
    %15 = arith.maximumf %13, %14 : vector<8x1xf32>
    %c0_8 = arith.constant 0 : index
    %c0_9 = arith.constant 0 : index
    %16 = vector.load %arg3[%c0_8, %c0_9] : memref<8x1xf32, #tpu.memory_space<vmem>>, vector<8x1xf32>
    %cst_10 = arith.constant 9.99999974E-6 : f32
    %17 = vector.broadcast %cst_10 : f32 to vector<8x1xf32>
    %18 = arith.addf %15, %17 : vector<8x1xf32>
    %19 = math.rsqrt %18 : vector<8x1xf32>
    %20 = arith.mulf %16, %19 : vector<8x1xf32>
    %21 = vector.broadcast %6 : vector<8x1xf32> to vector<8x512xf32>
    %22 = arith.subf %2, %21 : vector<8x512xf32>
    %23 = vector.broadcast %20 : vector<8x1xf32> to vector<8x512xf32>
    %24 = arith.mulf %22, %23 : vector<8x512xf32>
    %c0_11 = arith.constant 0 : index
    %c0_12 = arith.constant 0 : index
    %25 = vector.load %arg4[%c0_11, %c0_12] : memref<8x1xf32, #tpu.memory_space<vmem>>, vector<8x1xf32>
    %26 = vector.broadcast %25 : vector<8x1xf32> to vector<8x512xf32>
    %27 = arith.addf %24, %26 : vector<8x512xf32>
    %c0_13 = arith.constant 0 : index
    %c0_14 = arith.constant 0 : index
    %28 = vector.load %arg5[%c0_13, %c0_14] : memref<8x512xf32, #tpu.memory_space<vmem>>, vector<8x512xf32>
    tpu.vector_store %arg5[%c0_13, %c0_14], %27 {strides = array<i32>} : memref<8x512xf32, #tpu.memory_space<vmem>>, vector<8x512xf32>,
    return
  }
  func.func @transform_0(%arg0: i32) -> (i32, i32) {
    %c0_i32 = arith.constant 0 : i32
    %c0_i32_0 = arith.constant 0 : i32
    %c0_i32_1 = arith.constant 0 : i32
    return %c0_i32, %c0_i32_0 : i32, i32
  }
  func.func @transform_1(%arg0: i32) -> (i32, i32) {
    %c0_i32 = arith.constant 0 : i32
    %c0_i32_0 = arith.constant 0 : i32
    %c0_i32_1 = arith.constant 0 : i32
    return %c0_i32, %c0_i32_0 : i32, i32
  }
  func.func @transform_2(%arg0: i32) -> (i32, i32) {
    %c0_i32 = arith.constant 0 : i32
    %c0_i32_0 = arith.constant 0 : i32
    %c0_i32_1 = arith.constant 0 : i32
    return %c0_i32, %c0_i32_0 : i32, i32
  }
  func.func @transform_3(%arg0: i32) -> (i32, i32) {
    %c0_i32 = arith.constant 0 : i32
    %c0_i32_0 = arith.constant 0 : i32
    %c0_i32_1 = arith.constant 0 : i32
    return %c0_i32, %c0_i32_0 : i32, i32
  }
  func.func @transform_4(%arg0: i32) -> (i32, i32) {
    %c0_i32 = arith.constant 0 : i32
    %c0_i32_0 = arith.constant 0 : i32
    %c0_i32_1 = arith.constant 0 : i32
    return %c0_i32, %c0_i32_0 : i32, i32
  }
}

module attributes {stable_mosaic.version = 11 : i64} {
  func.func @_fused_conv_kernel(%arg0: i32, %arg1: memref<4x72xbf16, #tpu.memory_space<vmem>>, %arg2: memref<72x512xbf16, #tpu.memory_space<vmem>>, %arg3: memref<4x1xf32, #tpu.memory_space<vmem>>, %arg4: memref<4x1xf32, #tpu.memory_space<vmem>>, %arg5: memref<4x512xf32, #tpu.memory_space<vmem>>, %arg6: memref<4x512xf32, #tpu.memory_space<vmem>>) attributes {dimension_semantics = [#tpu.dimension_semantics<arbitrary>], iteration_bounds = array<i64: 1>, scalar_prefetch = 0 : i64, scratch_operands = 0 : i64, tpu.core_type = #tpu.core_type<tc>, window_params = [{pipeline_mode = #tpu.pipeline_mode<synchronous>, transform_indices = @transform_0, window_bounds = array<i64: 4, 72>}, {pipeline_mode = #tpu.pipeline_mode<synchronous>, transform_indices = @transform_1, window_bounds = array<i64: 72, 512>}, {pipeline_mode = #tpu.pipeline_mode<synchronous>, transform_indices = @transform_2, window_bounds = array<i64: 4, 1>}, {pipeline_mode = #tpu.pipeline_mode<synchronous>, transform_indices = @transform_3, window_bounds = array<i64: 4, 1>}, {pipeline_mode = #tpu.pipeline_mode<synchronous>, transform_indices = @transform_4, window_bounds = array<i64: 4, 512>}, {pipeline_mode = #tpu.pipeline_mode<synchronous>, transform_indices = @transform_5, window_bounds = array<i64: 4, 512>}]} {
    %c0 = arith.constant 0 : index
    %c0_0 = arith.constant 0 : index
    %0 = vector.load %arg1[%c0, %c0_0] : memref<4x72xbf16, #tpu.memory_space<vmem>>, vector<4x72xbf16>
    %c0_1 = arith.constant 0 : index
    %c0_2 = arith.constant 0 : index
    %1 = vector.load %arg2[%c0_1, %c0_2] : memref<72x512xbf16, #tpu.memory_space<vmem>>, vector<72x512xbf16>
    %cst = arith.constant dense<0.000000e+00> : vector<4x512xf32>
    %2 = tpu.matmul %0, %1, %cst {dimension_numbers = #tpu.dot_dimension_numbers<[1], [0], [0], [1], [0, 0, 1, 1], [], []>} : vector<4x72xbf16>, vector<72x512xbf16>, vector<4x512xf32> -> vector<4x512xf32>
    %cst_3 = arith.constant dense<0.000000e+00> : vector<4xf32>
    %3 = vector.multi_reduction <add>, %2, %cst_3 [1] : vector<4x512xf32> to vector<4xf32>
    %4 = vector.shape_cast %3 : vector<4xf32> to vector<4x1xf32>
    %cst_4 = arith.constant 0.001953125 : f32
    %5 = vector.broadcast %cst_4 : f32 to vector<4x1xf32>
    %6 = arith.mulf %4, %5 : vector<4x1xf32>
    %7 = arith.mulf %2, %2 : vector<4x512xf32>
    %cst_5 = arith.constant dense<0.000000e+00> : vector<4xf32>
    %8 = vector.multi_reduction <add>, %7, %cst_5 [1] : vector<4x512xf32> to vector<4xf32>
    %9 = vector.shape_cast %8 : vector<4xf32> to vector<4x1xf32>
    %cst_6 = arith.constant 0.001953125 : f32
    %10 = vector.broadcast %cst_6 : f32 to vector<4x1xf32>
    %11 = arith.mulf %9, %10 : vector<4x1xf32>
    %12 = arith.mulf %6, %6 : vector<4x1xf32>
    %13 = arith.subf %11, %12 : vector<4x1xf32>
    %cst_7 = arith.constant 0.000000e+00 : f32
    %14 = vector.broadcast %cst_7 : f32 to vector<4x1xf32>
    %15 = arith.maximumf %13, %14 : vector<4x1xf32>
    %c0_8 = arith.constant 0 : index
    %c0_9 = arith.constant 0 : index
    %16 = vector.load %arg3[%c0_8, %c0_9] : memref<4x1xf32, #tpu.memory_space<vmem>>, vector<4x1xf32>
    %cst_10 = arith.constant 9.99999974E-6 : f32
    %17 = vector.broadcast %cst_10 : f32 to vector<4x1xf32>
    %18 = arith.addf %15, %17 : vector<4x1xf32>
    %19 = math.rsqrt %18 : vector<4x1xf32>
    %20 = arith.mulf %16, %19 : vector<4x1xf32>
    %21 = vector.broadcast %6 : vector<4x1xf32> to vector<4x512xf32>
    %22 = arith.subf %2, %21 : vector<4x512xf32>
    %23 = vector.broadcast %20 : vector<4x1xf32> to vector<4x512xf32>
    %24 = arith.mulf %22, %23 : vector<4x512xf32>
    %c0_11 = arith.constant 0 : index
    %c0_12 = arith.constant 0 : index
    %25 = vector.load %arg4[%c0_11, %c0_12] : memref<4x1xf32, #tpu.memory_space<vmem>>, vector<4x1xf32>
    %26 = vector.broadcast %25 : vector<4x1xf32> to vector<4x512xf32>
    %27 = arith.addf %24, %26 : vector<4x512xf32>
    %c0_13 = arith.constant 0 : index
    %c0_14 = arith.constant 0 : index
    %28 = vector.load %arg5[%c0_13, %c0_14] : memref<4x512xf32, #tpu.memory_space<vmem>>, vector<4x512xf32>
    %29 = arith.addf %27, %28 : vector<4x512xf32>
    %c0_15 = arith.constant 0 : index
    %c0_16 = arith.constant 0 : index
    %30 = vector.load %arg6[%c0_15, %c0_16] : memref<4x512xf32, #tpu.memory_space<vmem>>, vector<4x512xf32>
    tpu.vector_store %arg6[%c0_15, %c0_16], %29 {strides = array<i32>} : memref<4x512xf32, #tpu.memory_space<vmem>>, vector<4x512xf32>,
    return
  }
  func.func @transform_0(%arg0: i32) -> (i32, i32) {
    %c0_i32 = arith.constant 0 : i32
    %c0_i32_0 = arith.constant 0 : i32
    %c0_i32_1 = arith.constant 0 : i32
    return %c0_i32, %c0_i32_0 : i32, i32
  }
  func.func @transform_1(%arg0: i32) -> (i32, i32) {
    %c0_i32 = arith.constant 0 : i32
    %c0_i32_0 = arith.constant 0 : i32
    %c0_i32_1 = arith.constant 0 : i32
    return %c0_i32, %c0_i32_0 : i32, i32
  }
  func.func @transform_2(%arg0: i32) -> (i32, i32) {
    %c0_i32 = arith.constant 0 : i32
    %c0_i32_0 = arith.constant 0 : i32
    %c0_i32_1 = arith.constant 0 : i32
    return %c0_i32, %c0_i32_0 : i32, i32
  }
  func.func @transform_3(%arg0: i32) -> (i32, i32) {
    %c0_i32 = arith.constant 0 : i32
    %c0_i32_0 = arith.constant 0 : i32
    %c0_i32_1 = arith.constant 0 : i32
    return %c0_i32, %c0_i32_0 : i32, i32
  }
  func.func @transform_4(%arg0: i32) -> (i32, i32) {
    %c0_i32 = arith.constant 0 : i32
    %c0_i32_0 = arith.constant 0 : i32
    %c0_i32_1 = arith.constant 0 : i32
    return %c0_i32, %c0_i32_0 : i32, i32
  }
  func.func @transform_5(%arg0: i32) -> (i32, i32) {
    %c0_i32 = arith.constant 0 : i32
    %c0_i32_0 = arith.constant 0 : i32
    %c0_i32_1 = arith.constant 0 : i32
    return %c0_i32, %c0_i32_0 : i32, i32
  }
}

</mosaic_0001>

<llo_original>
// kernel: res_model_forward.24
$region0: #{res_model_forward.24}
  #allocation0 [shape = 'u32[]', space=smem, size = 0x4, offset = 0x4, fixed_abs, tag = 'smem constant byte address 0x4 - core index']
  #allocation1 [shape = 'u32[144,128]{1,0:T(1,128)}', space=vmem, size = 0x12000, scoped, tag = 'internal scratch']
  %s0 = inlined_call_operand.vmem [shape: bf16[8,36], index: 0, kind: input, shape index: {}]
  %s1 = inlined_call_operand.vmem [shape: bf16[36,512], index: 1, kind: input, shape index: {}]
  %s2 = inlined_call_operand.vmem [shape: f32[8,1], index: 2, kind: input, shape index: {}]
  %s3 = inlined_call_operand.vmem [shape: f32[8,1], index: 3, kind: input, shape index: {}]
  %s4 = inlined_call_operand.vmem [shape: bf16[8,512], index: 4, kind: output, shape index: {}]
  %s5 = sld [smem:[#allocation0]]
  $region26: #{res_model_forward.24} parent=0
    _
  %s7 = ssub.s32 1, %s5
  %s8 = scalar_select 0, %s7, %s5
  // Predicated region
  $region2: #{res_model_forward.24} parent=0 // pred_check
    _
  $region3: #{res_model_forward.24} parent=0 // pred_check_branch
    %10 = sbr.rel (0) target = $region5
  $region4: #{res_model_forward.24} parent=0 // pred_region
    _
  $region5: #{res_model_forward.24} parent=0 // pred_fallthru
    _
  // Predicated region
  $region6: #{res_model_forward.24} parent=0 // pred_check
    _
  $region7: #{res_model_forward.24} parent=0 // pred_check_branch
    %12 = sbr.rel (0) target = $region9
  $region8: #{res_model_forward.24} parent=0 // pred_region
    _
  $region9: #{res_model_forward.24} parent=0 // pred_fallthru
    _
  // Predicated region
  $region10: #{res_model_forward.24} parent=0 // pred_check
    _
  $region11: #{res_model_forward.24} parent=0 // pred_check_branch
    %14 = sbr.rel (0) target = $region13
  $region12: #{res_model_forward.24} parent=0 // pred_region
    _
  $region13: #{res_model_forward.24} parent=0 // pred_fallthru
    _
  // Predicated region
  $region14: #{res_model_forward.24} parent=0 // pred_check
    _
  $region15: #{res_model_forward.24} parent=0 // pred_check_branch
    %16 = sbr.rel (0) target = $region17
  $region16: #{res_model_forward.24} parent=0 // pred_region
    _
  $region17: #{res_model_forward.24} parent=0 // pred_fallthru
    _
  %v18 = vld [vmem:[%s0] sm:$0xf]
  %v19 = vld [vmem:[%s1] sm:$0xff]
  %v20 = vld [vmem:[%s1 + $0x8] sm:$0xff]
  %v21 = vld [vmem:[%s1 + $0x10] sm:$0xff]
  %v22 = vld [vmem:[%s1 + $0x18] sm:$0xff]
  %v23 = vld [vmem:[%s1 + $0x20] sm:$0xff]
  %v24 = vld [vmem:[%s1 + $0x28] sm:$0xff]
  %v25 = vld [vmem:[%s1 + $0x30] sm:$0xff]
  %v26 = vld [vmem:[%s1 + $0x38] sm:$0xff]
  %v27 = vld [vmem:[%s1 + $0x40] sm:$0x33]
  %v28 = vld [vmem:[%s1 + $0x48] sm:$0x33]
  %v39 = vunpack.c.l.b16 %v19
  %v40 = vunpack.c.h.b16 %v19
  %v41 = vunpack.c.l.b16 %v20
  %v42 = vunpack.c.h.b16 %v20
  %v43 = vunpack.c.l.b16 %v21
  %v44 = vunpack.c.h.b16 %v21
  %v45 = vunpack.c.l.b16 %v22
  %v46 = vunpack.c.h.b16 %v22
  %v47 = vunpack.c.l.b16 %v23
  %v48 = vunpack.c.h.b16 %v23
  %v49 = vunpack.c.l.b16 %v24
  %v50 = vunpack.c.h.b16 %v24
  %v51 = vunpack.c.l.b16 %v25
  %v52 = vunpack.c.h.b16 %v25
  %v53 = vunpack.c.l.b16 %v26
  %v54 = vunpack.c.h.b16 %v26
  %v55 = vunpack.c.l.b16 %v27
  %v56 = vunpack.c.h.b16 %v27
  %v57 = vunpack.c.l.b16 %v28
  %v58 = vunpack.c.h.b16 %v28
  %v59 = vpack.c.b16 %v43, %v39
  %v60 = vpack.c.b16 %v44, %v40
  %v61 = vpack.c.b16 %v45, %v41
  %v62 = vpack.c.b16 %v46, %v42
  %v63 = vpack.c.b16 %v51, %v47
  %v64 = vpack.c.b16 %v52, %v48
  %v65 = vpack.c.b16 %v53, %v49
  %v66 = vpack.c.b16 %v54, %v50
  %v67 = vpack.c.b16 %v55, %v55
  %v68 = vpack.c.b16 %v56, %v56
  %v69 = vpack.c.b16 %v57, %v57
  %v70 = vpack.c.b16 %v58, %v58
  %vm79 = vcmask 293888
  %v81 = vsel %vm79, %v18, 0
  %vm83 = vcmask 1041408
  %v85 = vsel %vm83, %v67, 0
  %v88 = vsel %vm83, %v68, 0
  %v91 = vsel %vm83, %v69, 0
  %v94 = vsel %vm83, %v70, 0
  %96 = vmatprep.subr.bf16.mxu0 %v60
  %97 = vmatpush1.bf16.msra.mxu0 %v59
  %98 = vmatprep.subr.bf16.mxu0 %v64
  %99 = vmatpush1.bf16.msra.mxu0 %v63
  %100 = vmatprep.subr.bf16.mxu0 %v88
  %101 = vmatpush1.bf16.msra.mxu0 %v85
  %102 = vmatprep.subr.bf16.mxu0 0
  %103 = vmatpush1.bf16.msra.mxu0 0
  %104 = vmatprep.subr.bf16.mxu0 0
  %105 = vmatpush1.bf16.msra.mxu0 0
  %106 = vmatprep.subr.bf16.mxu0 0
  %107 = vmatpush1.bf16.msra.mxu0 0
  %108 = vmatprep.subr.bf16.mxu0 0
  %109 = vmatpush1.bf16.msra.mxu0 0
  %110 = vmatprep.subr.bf16.mxu0 0
  %111 = vmatpush1.bf16.msra.mxu0 0
  %112 = vmatprep.subr.bf16.mxu0 0
  %113 = vmatpush1.bf16.msra.mxu0 0
  %114 = vmatprep.subr.bf16.mxu0 0
  %115 = vmatpush1.bf16.msra.mxu0 0
  %116 = vmatprep.subr.bf16.mxu0 0
  %117 = vmatpush1.bf16.msra.mxu0 0
  %118 = vmatprep.subr.bf16.mxu0 0
  %119 = vmatpush1.bf16.msra.mxu0 0
  %120 = vmatprep.subr.bf16.mxu0 0
  %121 = vmatpush1.bf16.msra.mxu0 0
  %122 = vmatprep.subr.bf16.mxu0 0
  %123 = vmatpush1.bf16.msra.mxu0 0
  %124 = vmatprep.subr.bf16.mxu0 0
  %125 = vmatpush1.bf16.msra.mxu0 0
  %126 = vmatprep.subr.bf16.mxu0 0
  %127 = vmatpush1.bf16.msra.mxu0 0
  %128 = vmatprep.mubr.bf16.mxu0 0
  %129 = vmatmul.mubr.bf16.gmra.mrb[0].mxu0 %v81
  %v130 = vpop.f32.mrb[0].mxu0
  %v131 = vadd.f32 0.0, %v130
  %v132 = vpop.f32.mrb[0].mxu0
  %v133 = vadd.f32 0.0, %v132
  %v134 = vpop.f32.mrb[0].mxu0
  %v135 = vpop.f32.mrb[0].mxu0
  %136 = vdwg.mxu0
  %137 = vmatprep.subr.bf16.mxu0 %v62
  %138 = vmatpush1.bf16.msra.mxu0 %v61
  %139 = vmatprep.subr.bf16.mxu0 %v66
  %140 = vmatpush1.bf16.msra.mxu0 %v65
  %141 = vmatprep.subr.bf16.mxu0 %v94
  %142 = vmatpush1.bf16.msra.mxu0 %v91
  %143 = vmatprep.subr.bf16.mxu0 0
  %144 = vmatpush1.bf16.msra.mxu0 0
  %145 = vmatprep.subr.bf16.mxu0 0
  %146 = vmatpush1.bf16.msra.mxu0 0
  %147 = vmatprep.subr.bf16.mxu0 0
  %148 = vmatpush1.bf16.msra.mxu0 0
  %149 = vmatprep.subr.bf16.mxu0 0
  %150 = vmatpush1.bf16.msra.mxu0 0
  %151 = vmatprep.subr.bf16.mxu0 0
  %152 = vmatpush1.bf16.msra.mxu0 0
  %153 = vmatprep.subr.bf16.mxu0 0
  %154 = vmatpush1.bf16.msra.mxu0 0
  %155 = vmatprep.subr.bf16.mxu0 0
  %156 = vmatpush1.bf16.msra.mxu0 0
  %157 = vmatprep.subr.bf16.mxu0 0
  %158 = vmatpush1.bf16.msra.mxu0 0
  %159 = vmatprep.subr.bf16.mxu0 0
  %160 = vmatpush1.bf16.msra.mxu0 0
  %161 = vmatprep.subr.bf16.mxu0 0
  %162 = vmatpush1.bf16.msra.mxu0 0
  %163 = vmatprep.subr.bf16.mxu0 0
  %164 = vmatpush1.bf16.msra.mxu0 0
  %165 = vmatprep.subr.bf16.mxu0 0
  %166 = vmatpush1.bf16.msra.mxu0 0
  %167 = vmatprep.subr.bf16.mxu0 0
  %168 = vmatpush1.bf16.msra.mxu0 0
  %169 = vmatprep.mubr.bf16.mxu0 0
  %170 = vmatmul.mubr.bf16.gmra.mrb[0].mxu0 %v81
  %v171 = vpop.f32.mrb[0].mxu0
  %v172 = vadd.f32 0.0, %v171
  %v173 = vpop.f32.mrb[0].mxu0
  %v174 = vadd.f32 0.0, %v173
  %v175 = vpop.f32.mrb[0].mxu0
  %v176 = vpop.f32.mrb[0].mxu0
  %177 = vdwg.mxu0
  %v178 = vadd.f32 %v131, %v133
  %v179 = vadd.f32 %v178, %v172
  %v180 = vadd.f32 %v179, %v174
  %181 = vadd.xlane.f32.xlu0 %v180
  %v182 = vpop.xlane.xlu0 %181
  %v183 = vmul.f32 %v182, 0.001953125
  %v184 = vmul.f32 %v131, %v131
  %v185 = vmul.f32 %v133, %v133
  %v186 = vmul.f32 %v172, %v172
  %v187 = vmul.f32 %v174, %v174
  %v188 = vadd.f32 %v184, %v185
  %v189 = vadd.f32 %v188, %v186
  %v190 = vadd.f32 %v189, %v187
  %191 = vadd.xlane.f32.xlu0 %v190
  %v192 = vpop.xlane.xlu0 %191
  %v193 = vmul.f32 %v192, 0.001953125
  %v194 = vmul.f32 %v183, %v183
  %v195 = vsub.f32 %v193, %v194
  %v196 = vmax.f32 %v195, 0.0
  %v197 = vld [vmem:[%s2] sm:$0xff]
  %v198 = vadd.f32 %v196, 1e-05
  %v199 = vrsqrt.pop %v198
  %v200 = vmul.f32 %v197, %v199
  %v201 = vsub.f32 %v131, %v183
  %v202 = vsub.f32 %v133, %v183
  %v203 = vsub.f32 %v172, %v183
  %v204 = vsub.f32 %v174, %v183
  %206 = vset.pattern.permute.xlu0 0
  %207 = vperm.xlu0 %206, %v200
  %v208 = vpop.permute.xlu0 %207
  %v210 = vmul.f32 %v201, %v208
  %v211 = vmul.f32 %v202, %v208
  %v212 = vmul.f32 %v203, %v208
  %v213 = vmul.f32 %v204, %v208
  %v214 = vld [vmem:[%s3] sm:$0xff]
  %216 = vset.pattern.permute.xlu0 0
  %217 = vperm.xlu0 %216, %v214
  %v218 = vpop.permute.xlu0 %217
  %v220 = vadd.f32 %v210, %v218
  %v221 = vadd.f32 %v211, %v218
  %v222 = vadd.f32 %v212, %v218
  %v223 = vadd.f32 %v213, %v218
  %v224 = vmax.f32 %v220, 0.0
  %v225 = vmax.f32 %v221, 0.0
  %v226 = vmax.f32 %v222, 0.0
  %v227 = vmax.f32 %v223, 0.0
  %v228 = vpack.c.bf16 %v224, %v224
  %v229 = vpack.c.bf16 %v225, %v225
  %v230 = vpack.c.bf16 %v226, %v226
  %v231 = vpack.c.bf16 %v227, %v227
  %v236 = vunpack.c.l.b16 %v228
  %v237 = vunpack.c.l.b16 %v229
  %v238 = vunpack.c.l.b16 %v230
  %v239 = vunpack.c.l.b16 %v231
  %v240 = vpack.c.b16 %v237, %v236
  %v241 = vpack.c.b16 %v239, %v238
  %244 = vst [vmem:[%s4] sm:$0xff] %v240
  %245 = vst [vmem:[%s4 + $0x8] sm:$0xff] %v241
  // Predicated region
  $region18: #{res_model_forward.24} parent=0 // pred_check
    _
  $region19: #{res_model_forward.24} parent=0 // pred_check_branch
    %247 = sbr.rel (0) target = $region21
  $region20: #{res_model_forward.24} parent=0 // pred_region
    _
  $region21: #{res_model_forward.24} parent=0 // pred_fallthru
    _
  // Predicated region
  $region22: #{res_model_forward.24} parent=0 // pred_check
    _
  $region23: #{res_model_forward.24} parent=0 // pred_check_branch
    %249 = sbr.rel (0) target = $region25
  $region24: #{res_model_forward.24} parent=0 // pred_region
    _
  $region25: #{res_model_forward.24} parent=0 // pred_fallthru
    _

// kernel: res_model_forward.25
$region0: #{res_model_forward.25}
  #allocation0 [shape = 'u32[]', space=smem, size = 0x4, offset = 0x4, fixed_abs, tag = 'smem constant byte address 0x4 - core index']
  #allocation1 [shape = 'u32[144,128]{1,0:T(1,128)}', space=vmem, size = 0x12000, scoped, tag = 'internal scratch']
  %s0 = inlined_call_operand.vmem [shape: bf16[8,200], index: 0, kind: input, shape index: {}]
  %s1 = inlined_call_operand.vmem [shape: bf16[200,512], index: 1, kind: input, shape index: {}]
  %s2 = inlined_call_operand.vmem [shape: f32[8,1], index: 2, kind: input, shape index: {}]
  %s3 = inlined_call_operand.vmem [shape: f32[8,1], index: 3, kind: input, shape index: {}]
  %s4 = inlined_call_operand.vmem [shape: bf16[8,512], index: 4, kind: output, shape index: {}]
  %s5 = sld [smem:[#allocation0]]
  $region26: #{res_model_forward.25} parent=0
    _
  %s7 = ssub.s32 1, %s5
  %s8 = scalar_select 0, %s7, %s5
  // Predicated region
  $region2: #{res_model_forward.25} parent=0 // pred_check
    _
  $region3: #{res_model_forward.25} parent=0 // pred_check_branch
    %10 = sbr.rel (0) target = $region5
  $region4: #{res_model_forward.25} parent=0 // pred_region
    _
  $region5: #{res_model_forward.25} parent=0 // pred_fallthru
    _
  // Predicated region
  $region6: #{res_model_forward.25} parent=0 // pred_check
    _
  $region7: #{res_model_forward.25} parent=0 // pred_check_branch
    %12 = sbr.rel (0) target = $region9
  $region8: #{res_model_forward.25} parent=0 // pred_region
    _
  $region9: #{res_model_forward.25} parent=0 // pred_fallthru
    _
  // Predicated region
  $region10: #{res_model_forward.25} parent=0 // pred_check
    _
  $region11: #{res_model_forward.25} parent=0 // pred_check_branch
    %14 = sbr.rel (0) target = $region13
  $region12: #{res_model_forward.25} parent=0 // pred_region
    _
  $region13: #{res_model_forward.25} parent=0 // pred_fallthru
    _
  // Predicated region
  $region14: #{res_model_forward.25} parent=0 // pred_check
    _
  $region15: #{res_model_forward.25} parent=0 // pred_check_branch
    %16 = sbr.rel (0) target = $region17
  $region16: #{res_model_forward.25} parent=0 // pred_region
    _
  $region17: #{res_model_forward.25} parent=0 // pred_fallthru
    _
  %v18 = vld [vmem:[%s0] sm:$0xff]
  %v19 = vld [vmem:[%s1] sm:$0xff]
  %v20 = vld [vmem:[%s1 + $0x8] sm:$0xff]
  %v21 = vld [vmem:[%s1 + $0x10] sm:$0xff]
  %v22 = vld [vmem:[%s1 + $0x18] sm:$0xff]
  %v23 = vld [vmem:[%s1 + $0x20] sm:$0xff]
  %v24 = vld [vmem:[%s1 + $0x28] sm:$0xff]
  %v25 = vld [vmem:[%s1 + $0x30] sm:$0xff]
  %v26 = vld [vmem:[%s1 + $0x38] sm:$0xff]
  %v27 = vld [vmem:[%s1 + $0x40] sm:$0xff]
  %v28 = vld [vmem:[%s1 + $0x48] sm:$0xff]
  %v29 = vld [vmem:[%s1 + $0x50] sm:$0xff]
  %v30 = vld [vmem:[%s1 + $0x58] sm:$0xff]
  %v31 = vld [vmem:[%s1 + $0x60] sm:$0xff]
  %v32 = vld [vmem:[%s1 + $0x68] sm:$0xff]
  %v33 = vld [vmem:[%s1 + $0x70] sm:$0xff]
  %v34 = vld [vmem:[%s1 + $0x78] sm:$0xff]
  %v35 = vld [vmem:[%s1 + $0x80] sm:$0xff]
  %v36 = vld [vmem:[%s1 + $0x88] sm:$0xff]
  %v37 = vld [vmem:[%s1 + $0x90] sm:$0xff]
  %v38 = vld [vmem:[%s1 + $0x98] sm:$0xff]
  %v39 = vld [vmem:[%s1 + $0xa0] sm:$0xff]
  %v40 = vld [vmem:[%s1 + $0xa8] sm:$0xff]
  %v41 = vld [vmem:[%s1 + $0xb0] sm:$0xff]
  %v42 = vld [vmem:[%s1 + $0xb8] sm:$0xff]
  %v43 = vld [vmem:[%s1 + $0xc0] sm:$0xff]
  %v44 = vld [vmem:[%s1 + $0xc8] sm:$0xff]
  %v45 = vld [vmem:[%s1 + $0xd0] sm:$0xff]
  %v46 = vld [vmem:[%s1 + $0xd8] sm:$0xff]
  %v47 = vld [vmem:[%s1 + $0xe0] sm:$0xff]
  %v48 = vld [vmem:[%s1 + $0xe8] sm:$0xff]
  %v49 = vld [vmem:[%s1 + $0xf0] sm:$0xff]
  %v50 = vld [vmem:[%s1 + $0xf8] sm:$0xff]
  %v51 = vld [vmem:[%s1 + $0x100] sm:$0xff]
  %v52 = vld [vmem:[%s1 + $0x108] sm:$0xff]
  %v53 = vld [vmem:[%s1 + $0x110] sm:$0xff]
  %v54 = vld [vmem:[%s1 + $0x118] sm:$0xff]
  %v55 = vld [vmem:[%s1 + $0x120] sm:$0xff]
  %v56 = vld [vmem:[%s1 + $0x128] sm:$0xff]
  %v57 = vld [vmem:[%s1 + $0x130] sm:$0xff]
  %v58 = vld [vmem:[%s1 + $0x138] sm:$0xff]
  %v59 = vld [vmem:[%s1 + $0x140] sm:$0xff]
  %v60 = vld [vmem:[%s1 + $0x148] sm:$0xff]
  %v61 = vld [vmem:[%s1 + $0x150] sm:$0xff]
  %v62 = vld [vmem:[%s1 + $0x158] sm:$0xff]
  %v63 = vld [vmem:[%s1 + $0x160] sm:$0xff]
  %v64 = vld [vmem:[%s1 + $0x168] sm:$0xff]
  %v65 = vld [vmem:[%s1 + $0x170] sm:$0xff]
  %v66 = vld [vmem:[%s1 + $0x178] sm:$0xff]
  %v67 = vld [vmem:[%s1 + $0x180] sm:$0xff]
  %v68 = vld [vmem:[%s1 + $0x188] sm:$0xff]
  %v70 = vunpack.c.l.b16 %v18
  %v71 = vunpack.c.h.b16 %v18
  %v72 = vpack.c.b16 %v70, %v70
  %v73 = vpack.c.b16 %v71, %v71
  %v125 = vunpack.c.l.b16 %v19
  %v126 = vunpack.c.h.b16 %v19
  %v127 = vunpack.c.l.b16 %v20
  %v128 = vunpack.c.h.b16 %v20
  %v129 = vunpack.c.l.b16 %v21
  %v130 = vunpack.c.h.b16 %v21
  %v131 = vunpack.c.l.b16 %v22
  %v132 = vunpack.c.h.b16 %v22
  %v133 = vunpack.c.l.b16 %v23
  %v134 = vunpack.c.h.b16 %v23
  %v135 = vunpack.c.l.b16 %v24
  %v136 = vunpack.c.h.b16 %v24
  %v137 = vunpack.c.l.b16 %v25
  %v138 = vunpack.c.h.b16 %v25
  %v139 = vunpack.c.l.b16 %v26
  %v140 = vunpack.c.h.b16 %v26
  %v141 = vunpack.c.l.b16 %v27
  %v142 = vunpack.c.h.b16 %v27
  %v143 = vunpack.c.l.b16 %v28
  %v144 = vunpack.c.h.b16 %v28
  %v145 = vunpack.c.l.b16 %v29
  %v146 = vunpack.c.h.b16 %v29
  %v147 = vunpack.c.l.b16 %v30
  %v148 = vunpack.c.h.b16 %v30
  %v149 = vunpack.c.l.b16 %v31
  %v150 = vunpack.c.h.b16 %v31
  %v151 = vunpack.c.l.b16 %v32
  %v152 = vunpack.c.h.b16 %v32
  %v153 = vunpack.c.l.b16 %v33
  %v154 = vunpack.c.h.b16 %v33
  %v155 = vunpack.c.l.b16 %v34
  %v156 = vunpack.c.h.b16 %v34
  %v157 = vunpack.c.l.b16 %v35
  %v158 = vunpack.c.h.b16 %v35
  %v159 = vunpack.c.l.b16 %v36
  %v160 = vunpack.c.h.b16 %v36
  %v161 = vunpack.c.l.b16 %v37
  %v162 = vunpack.c.h.b16 %v37
  %v163 = vunpack.c.l.b16 %v38
  %v164 = vunpack.c.h.b16 %v38
  %v165 = vunpack.c.l.b16 %v39
  %v166 = vunpack.c.h.b16 %v39
  %v167 = vunpack.c.l.b16 %v40
  %v168 = vunpack.c.h.b16 %v40
  %v169 = vunpack.c.l.b16 %v41
  %v170 = vunpack.c.h.b16 %v41
  %v171 = vunpack.c.l.b16 %v42
  %v172 = vunpack.c.h.b16 %v42
  %v173 = vunpack.c.l.b16 %v43
  %v174 = vunpack.c.h.b16 %v43
  %v175 = vunpack.c.l.b16 %v44
  %v176 = vunpack.c.h.b16 %v44
  %v177 = vunpack.c.l.b16 %v45
  %v178 = vunpack.c.h.b16 %v45
  %v179 = vunpack.c.l.b16 %v46
  %v180 = vunpack.c.h.b16 %v46
  %v181 = vunpack.c.l.b16 %v47
  %v182 = vunpack.c.h.b16 %v47
  %v183 = vunpack.c.l.b16 %v48
  %v184 = vunpack.c.h.b16 %v48
  %v185 = vunpack.c.l.b16 %v49
  %v186 = vunpack.c.h.b16 %v49
  %v187 = vunpack.c.l.b16 %v50
  %v188 = vunpack.c.h.b16 %v50
  %v189 = vunpack.c.l.b16 %v51
  %v190 = vunpack.c.h.b16 %v51
  %v191 = vunpack.c.l.b16 %v52
  %v192 = vunpack.c.h.b16 %v52
  %v193 = vunpack.c.l.b16 %v53
  %v194 = vunpack.c.h.b16 %v53
  %v195 = vunpack.c.l.b16 %v54
  %v196 = vunpack.c.h.b16 %v54
  %v197 = vunpack.c.l.b16 %v55
  %v198 = vunpack.c.h.b16 %v55
  %v199 = vunpack.c.l.b16 %v56
  %v200 = vunpack.c.h.b16 %v56
  %v201 = vunpack.c.l.b16 %v57
  %v202 = vunpack.c.h.b16 %v57
  %v203 = vunpack.c.l.b16 %v58
  %v204 = vunpack.c.h.b16 %v58
  %v205 = vunpack.c.l.b16 %v59
  %v206 = vunpack.c.h.b16 %v59
  %v207 = vunpack.c.l.b16 %v60
  %v208 = vunpack.c.h.b16 %v60
  %v209 = vunpack.c.l.b16 %v61
  %v210 = vunpack.c.h.b16 %v61
  %v211 = vunpack.c.l.b16 %v62
  %v212 = vunpack.c.h.b16 %v62
  %v213 = vunpack.c.l.b16 %v63
  %v214 = vunpack.c.h.b16 %v63
  %v215 = vunpack.c.l.b16 %v64
  %v216 = vunpack.c.h.b16 %v64
  %v217 = vunpack.c.l.b16 %v65
  %v218 = vunpack.c.h.b16 %v65
  %v219 = vunpack.c.l.b16 %v66
  %v220 = vunpack.c.h.b16 %v66
  %v221 = vunpack.c.l.b16 %v67
  %v222 = vunpack.c.h.b16 %v67
  %v223 = vunpack.c.l.b16 %v68
  %v224 = vunpack.c.h.b16 %v68
  %v225 = vpack.c.b16 %v129, %v125
  %v226 = vpack.c.b16 %v130, %v126
  %v227 = vpack.c.b16 %v131, %v127
  %v228 = vpack.c.b16 %v132, %v128
  %v229 = vpack.c.b16 %v137, %v133
  %v230 = vpack.c.b16 %v138, %v134
  %v231 = vpack.c.b16 %v139, %v135
  %v232 = vpack.c.b16 %v140, %v136
  %v233 = vpack.c.b16 %v145, %v141
  %v234 = vpack.c.b16 %v146, %v142
  %v235 = vpack.c.b16 %v147, %v143
  %v236 = vpack.c.b16 %v148, %v144
  %v237 = vpack.c.b16 %v153, %v149
  %v238 = vpack.c.b16 %v154, %v150
  %v239 = vpack.c.b16 %v155, %v151
  %v240 = vpack.c.b16 %v156, %v152
  %v241 = vpack.c.b16 %v161, %v157
  %v242 = vpack.c.b16 %v162, %v158
  %v243 = vpack.c.b16 %v163, %v159
  %v244 = vpack.c.b16 %v164, %v160
  %v245 = vpack.c.b16 %v169, %v165
  %v246 = vpack.c.b16 %v170, %v166
  %v247 = vpack.c.b16 %v171, %v167
  %v248 = vpack.c.b16 %v172, %v168
  %v249 = vpack.c.b16 %v177, %v173
  %v250 = vpack.c.b16 %v178, %v174
  %v251 = vpack.c.b16 %v179, %v175
  %v252 = vpack.c.b16 %v180, %v176
  %v253 = vpack.c.b16 %v185, %v181
  %v254 = vpack.c.b16 %v186, %v182
  %v255 = vpack.c.b16 %v187, %v183
  %v256 = vpack.c.b16 %v188, %v184
  %v257 = vpack.c.b16 %v193, %v189
  %v258 = vpack.c.b16 %v194, %v190
  %v259 = vpack.c.b16 %v195, %v191
  %v260 = vpack.c.b16 %v196, %v192
  %v261 = vpack.c.b16 %v201, %v197
  %v262 = vpack.c.b16 %v202, %v198
  %v263 = vpack.c.b16 %v203, %v199
  %v264 = vpack.c.b16 %v204, %v200
  %v265 = vpack.c.b16 %v209, %v205
  %v266 = vpack.c.b16 %v210, %v206
  %v267 = vpack.c.b16 %v211, %v207
  %v268 = vpack.c.b16 %v212, %v208
  %v269 = vpack.c.b16 %v217, %v213
  %v270 = vpack.c.b16 %v218, %v214
  %v271 = vpack.c.b16 %v219, %v215
  %v272 = vpack.c.b16 %v220, %v216
  %v273 = vpack.c.b16 %v221, %v221
  %v274 = vpack.c.b16 %v222, %v222
  %v275 = vpack.c.b16 %v223, %v223
  %v276 = vpack.c.b16 %v224, %v224
  %vm325 = vcmask 588800
  %v327 = vsel %vm325, %v73, 0
  %vm329 = vcmask 1043456
  %v331 = vsel %vm329, %v273, 0
  %v334 = vsel %vm329, %v274, 0
  %v337 = vsel %vm329, %v275, 0
  %v340 = vsel %vm329, %v276, 0
  %342 = vmatprep.subr.bf16.mxu0 %v226
  %343 = vmatpush1.bf16.msra.mxu0 %v225
  %344 = vmatprep.subr.bf16.mxu0 %v230
  %345 = vmatpush1.bf16.msra.mxu0 %v229
  %346 = vmatprep.subr.bf16.mxu0 %v234
  %347 = vmatpush1.bf16.msra.mxu0 %v233
  %348 = vmatprep.subr.bf16.mxu0 %v238
  %349 = vmatpush1.bf16.msra.mxu0 %v237
  %350 = vmatprep.subr.bf16.mxu0 %v242
  %351 = vmatpush1.bf16.msra.mxu0 %v241
  %352 = vmatprep.subr.bf16.mxu0 %v246
  %353 = vmatpush1.bf16.msra.mxu0 %v245
  %354 = vmatprep.subr.bf16.mxu0 %v250
  %355 = vmatpush1.bf16.msra.mxu0 %v249
  %356 = vmatprep.subr.bf16.mxu0 %v254
  %357 = vmatpush1.bf16.msra.mxu0 %v253
  %358 = vmatprep.subr.bf16.mxu0 %v258
  %359 = vmatpush1.bf16.msra.mxu0 %v257
  %360 = vmatprep.subr.bf16.mxu0 %v262
  %361 = vmatpush1.bf16.msra.mxu0 %v261
  %362 = vmatprep.subr.bf16.mxu0 %v266
  %363 = vmatpush1.bf16.msra.mxu0 %v265
  %364 = vmatprep.subr.bf16.mxu0 %v270
  %365 = vmatpush1.bf16.msra.mxu0 %v269
  %366 = vmatprep.subr.bf16.mxu0 %v334
  %367 = vmatpush1.bf16.msra.mxu0 %v331
  %368 = vmatprep.subr.bf16.mxu0 0
  %369 = vmatpush1.bf16.msra.mxu0 0
  %370 = vmatprep.subr.bf16.mxu0 0
  %371 = vmatpush1.bf16.msra.mxu0 0
  %372 = vmatprep.subr.bf16.mxu0 0
  %373 = vmatpush1.bf16.msra.mxu0 0
  %374 = vmatprep.mubr.bf16.mxu0 %v327
  %375 = vmatmul.mubr.bf16.gmra.mrb[0].mxu0 %v72
  %v376 = vpop.f32.mrb[0].mxu0
  %v377 = vadd.f32 0.0, %v376
  %v378 = vpop.f32.mrb[0].mxu0
  %v379 = vadd.f32 0.0, %v378
  %v380 = vpop.f32.mrb[0].mxu0
  %v381 = vpop.f32.mrb[0].mxu0
  %382 = vdwg.mxu0
  %383 = vmatprep.subr.bf16.mxu0 %v228
  %384 = vmatpush1.bf16.msra.mxu0 %v227
  %385 = vmatprep.subr.bf16.mxu0 %v232
  %386 = vmatpush1.bf16.msra.mxu0 %v231
  %387 = vmatprep.subr.bf16.mxu0 %v236
  %388 = vmatpush1.bf16.msra.mxu0 %v235
  %389 = vmatprep.subr.bf16.mxu0 %v240
  %390 = vmatpush1.bf16.msra.mxu0 %v239
  %391 = vmatprep.subr.bf16.mxu0 %v244
  %392 = vmatpush1.bf16.msra.mxu0 %v243
  %393 = vmatprep.subr.bf16.mxu0 %v248
  %394 = vmatpush1.bf16.msra.mxu0 %v247
  %395 = vmatprep.subr.bf16.mxu0 %v252
  %396 = vmatpush1.bf16.msra.mxu0 %v251
  %397 = vmatprep.subr.bf16.mxu0 %v256
  %398 = vmatpush1.bf16.msra.mxu0 %v255
  %399 = vmatprep.subr.bf16.mxu0 %v260
  %400 = vmatpush1.bf16.msra.mxu0 %v259
  %401 = vmatprep.subr.bf16.mxu0 %v264
  %402 = vmatpush1.bf16.msra.mxu0 %v263
  %403 = vmatprep.subr.bf16.mxu0 %v268
  %404 = vmatpush1.bf16.msra.mxu0 %v267
  %405 = vmatprep.subr.bf16.mxu0 %v272
  %406 = vmatpush1.bf16.msra.mxu0 %v271
  %407 = vmatprep.subr.bf16.mxu0 %v340
  %408 = vmatpush1.bf16.msra.mxu0 %v337
  %409 = vmatprep.subr.bf16.mxu0 0
  %410 = vmatpush1.bf16.msra.mxu0 0
  %411 = vmatprep.subr.bf16.mxu0 0
  %412 = vmatpush1.bf16.msra.mxu0 0
  %413 = vmatprep.subr.bf16.mxu0 0
  %414 = vmatpush1.bf16.msra.mxu0 0
  %415 = vmatprep.mubr.bf16.mxu0 %v327
  %416 = vmatmul.mubr.bf16.gmra.mrb[0].mxu0 %v72
  %v417 = vpop.f32.mrb[0].mxu0
  %v418 = vadd.f32 0.0, %v417
  %v419 = vpop.f32.mrb[0].mxu0
  %v420 = vadd.f32 0.0, %v419
  %v421 = vpop.f32.mrb[0].mxu0
  %v422 = vpop.f32.mrb[0].mxu0
  %423 = vdwg.mxu0
  %v424 = vadd.f32 %v377, %v379
  %v425 = vadd.f32 %v424, %v418
  %v426 = vadd.f32 %v425, %v420
  %427 = vadd.xlane.f32.xlu0 %v426
  %v428 = vpop.xlane.xlu0 %427
  %v429 = vmul.f32 %v428, 0.001953125
  %v430 = vmul.f32 %v377, %v377
  %v431 = vmul.f32 %v379, %v379
  %v432 = vmul.f32 %v418, %v418
  %v433 = vmul.f32 %v420, %v420
  %v434 = vadd.f32 %v430, %v431
  %v435 = vadd.f32 %v434, %v432
  %v436 = vadd.f32 %v435, %v433
  %437 = vadd.xlane.f32.xlu0 %v436
  %v438 = vpop.xlane.xlu0 %437
  %v439 = vmul.f32 %v438, 0.001953125
  %v440 = vmul.f32 %v429, %v429
  %v441 = vsub.f32 %v439, %v440
  %v442 = vmax.f32 %v441, 0.0
  %v443 = vld [vmem:[%s2] sm:$0xff]
  %v444 = vadd.f32 %v442, 1e-05
  %v445 = vrsqrt.pop %v444
  %v446 = vmul.f32 %v443, %v445
  %v447 = vsub.f32 %v377, %v429
  %v448 = vsub.f32 %v379, %v429
  %v449 = vsub.f32 %v418, %v429
  %v450 = vsub.f32 %v420, %v429
  %452 = vset.pattern.permute.xlu0 0
  %453 = vperm.xlu0 %452, %v446
  %v454 = vpop.permute.xlu0 %453
  %v456 = vmul.f32 %v447, %v454
  %v457 = vmul.f32 %v448, %v454
  %v458 = vmul.f32 %v449, %v454
  %v459 = vmul.f32 %v450, %v454
  %v460 = vld [vmem:[%s3] sm:$0xff]
  %462 = vset.pattern.permute.xlu0 0
  %463 = vperm.xlu0 %462, %v460
  %v464 = vpop.permute.xlu0 %463
  %v466 = vadd.f32 %v456, %v464
  %v467 = vadd.f32 %v457, %v464
  %v468 = vadd.f32 %v458, %v464
  %v469 = vadd.f32 %v459, %v464
  %v470 = vmax.f32 %v466, 0.0
  %v471 = vmax.f32 %v467, 0.0
  %v472 = vmax.f32 %v468, 0.0
  %v473 = vmax.f32 %v469, 0.0
  %v474 = vpack.c.bf16 %v470, %v470
  %v475 = vpack.c.bf16 %v471, %v471
  %v476 = vpack.c.bf16 %v472, %v472
  %v477 = vpack.c.bf16 %v473, %v473
  %v482 = vunpack.c.l.b16 %v474
  %v483 = vunpack.c.l.b16 %v475
  %v484 = vunpack.c.l.b16 %v476
  %v485 = vunpack.c.l.b16 %v477
  %v486 = vpack.c.b16 %v483, %v482
  %v487 = vpack.c.b16 %v485, %v484
  %490 = vst [vmem:[%s4] sm:$0xff] %v486
  %491 = vst [vmem:[%s4 + $0x8] sm:$0xff] %v487
  // Predicated region
  $region18: #{res_model_forward.25} parent=0 // pred_check
    _
  $region19: #{res_model_forward.25} parent=0 // pred_check_branch
    %493 = sbr.rel (0) target = $region21
  $region20: #{res_model_forward.25} parent=0 // pred_region
    _
  $region21: #{res_model_forward.25} parent=0 // pred_fallthru
    _
  // Predicated region
  $region22: #{res_model_forward.25} parent=0 // pred_check
    _
  $region23: #{res_model_forward.25} parent=0 // pred_check_branch
    %495 = sbr.rel (0) target = $region25
  $region24: #{res_model_forward.25} parent=0 // pred_region
    _
  $region25: #{res_model_forward.25} parent=0 // pred_fallthru
    _

// kernel: res_model_forward.26
$region0: #{res_model_forward.26}
  #allocation0 [shape = 'u32[]', space=smem, size = 0x4, offset = 0x4, fixed_abs, tag = 'smem constant byte address 0x4 - core index']
  #allocation1 [shape = 'u32[144,128]{1,0:T(1,128)}', space=vmem, size = 0x12000, scoped, tag = 'internal scratch']
  %s0 = inlined_call_operand.vmem [shape: bf16[8,200], index: 0, kind: input, shape index: {}]
  %s1 = inlined_call_operand.vmem [shape: bf16[200,512], index: 1, kind: input, shape index: {}]
  %s2 = inlined_call_operand.vmem [shape: f32[8,1], index: 2, kind: input, shape index: {}]
  %s3 = inlined_call_operand.vmem [shape: f32[8,1], index: 3, kind: input, shape index: {}]
  %s4 = inlined_call_operand.vmem [shape: bf16[8,512], index: 4, kind: output, shape index: {}]
  %s5 = sld [smem:[#allocation0]]
  $region26: #{res_model_forward.26} parent=0
    _
  %s7 = ssub.s32 1, %s5
  %s8 = scalar_select 0, %s7, %s5
  // Predicated region
  $region2: #{res_model_forward.26} parent=0 // pred_check
    _
  $region3: #{res_model_forward.26} parent=0 // pred_check_branch
    %10 = sbr.rel (0) target = $region5
  $region4: #{res_model_forward.26} parent=0 // pred_region
    _
  $region5: #{res_model_forward.26} parent=0 // pred_fallthru
    _
  // Predicated region
  $region6: #{res_model_forward.26} parent=0 // pred_check
    _
  $region7: #{res_model_forward.26} parent=0 // pred_check_branch
    %12 = sbr.rel (0) target = $region9
  $region8: #{res_model_forward.26} parent=0 // pred_region
    _
  $region9: #{res_model_forward.26} parent=0 // pred_fallthru
    _
  // Predicated region
  $region10: #{res_model_forward.26} parent=0 // pred_check
    _
  $region11: #{res_model_forward.26} parent=0 // pred_check_branch
    %14 = sbr.rel (0) target = $region13
  $region12: #{res_model_forward.26} parent=0 // pred_region
    _
  $region13: #{res_model_forward.26} parent=0 // pred_fallthru
    _
  // Predicated region
  $region14: #{res_model_forward.26} parent=0 // pred_check
    _
  $region15: #{res_model_forward.26} parent=0 // pred_check_branch
    %16 = sbr.rel (0) target = $region17
  $region16: #{res_model_forward.26} parent=0 // pred_region
    _
  $region17: #{res_model_forward.26} parent=0 // pred_fallthru
    _
  %v18 = vld [vmem:[%s0] sm:$0xff]
  %v19 = vld [vmem:[%s1] sm:$0xff]
  %v20 = vld [vmem:[%s1 + $0x8] sm:$0xff]
  %v21 = vld [vmem:[%s1 + $0x10] sm:$0xff]
  %v22 = vld [vmem:[%s1 + $0x18] sm:$0xff]
  %v23 = vld [vmem:[%s1 + $0x20] sm:$0xff]
  %v24 = vld [vmem:[%s1 + $0x28] sm:$0xff]
  %v25 = vld [vmem:[%s1 + $0x30] sm:$0xff]
  %v26 = vld [vmem:[%s1 + $0x38] sm:$0xff]
  %v27 = vld [vmem:[%s1 + $0x40] sm:$0xff]
  %v28 = vld [vmem:[%s1 + $0x48] sm:$0xff]
  %v29 = vld [vmem:[%s1 + $0x50] sm:$0xff]
  %v30 = vld [vmem:[%s1 + $0x58] sm:$0xff]
  %v31 = vld [vmem:[%s1 + $0x60] sm:$0xff]
  %v32 = vld [vmem:[%s1 + $0x68] sm:$0xff]
  %v33 = vld [vmem:[%s1 + $0x70] sm:$0xff]
  %v34 = vld [vmem:[%s1 + $0x78] sm:$0xff]
  %v35 = vld [vmem:[%s1 + $0x80] sm:$0xff]
  %v36 = vld [vmem:[%s1 + $0x88] sm:$0xff]
  %v37 = vld [vmem:[%s1 + $0x90] sm:$0xff]
  %v38 = vld [vmem:[%s1 + $0x98] sm:$0xff]
  %v39 = vld [vmem:[%s1 + $0xa0] sm:$0xff]
  %v40 = vld [vmem:[%s1 + $0xa8] sm:$0xff]
  %v41 = vld [vmem:[%s1 + $0xb0] sm:$0xff]
  %v42 = vld [vmem:[%s1 + $0xb8] sm:$0xff]
  %v43 = vld [vmem:[%s1 + $0xc0] sm:$0xff]
  %v44 = vld [vmem:[%s1 + $0xc8] sm:$0xff]
  %v45 = vld [vmem:[%s1 + $0xd0] sm:$0xff]
  %v46 = vld [vmem:[%s1 + $0xd8] sm:$0xff]
  %v47 = vld [vmem:[%s1 + $0xe0] sm:$0xff]
  %v48 = vld [vmem:[%s1 + $0xe8] sm:$0xff]
  %v49 = vld [vmem:[%s1 + $0xf0] sm:$0xff]
  %v50 = vld [vmem:[%s1 + $0xf8] sm:$0xff]
  %v51 = vld [vmem:[%s1 + $0x100] sm:$0xff]
  %v52 = vld [vmem:[%s1 + $0x108] sm:$0xff]
  %v53 = vld [vmem:[%s1 + $0x110] sm:$0xff]
  %v54 = vld [vmem:[%s1 + $0x118] sm:$0xff]
  %v55 = vld [vmem:[%s1 + $0x120] sm:$0xff]
  %v56 = vld [vmem:[%s1 + $0x128] sm:$0xff]
  %v57 = vld [vmem:[%s1 + $0x130] sm:$0xff]
  %v58 = vld [vmem:[%s1 + $0x138] sm:$0xff]
  %v59 = vld [vmem:[%s1 + $0x140] sm:$0xff]
  %v60 = vld [vmem:[%s1 + $0x148] sm:$0xff]
  %v61 = vld [vmem:[%s1 + $0x150] sm:$0xff]
  %v62 = vld [vmem:[%s1 + $0x158] sm:$0xff]
  %v63 = vld [vmem:[%s1 + $0x160] sm:$0xff]
  %v64 = vld [vmem:[%s1 + $0x168] sm:$0xff]
  %v65 = vld [vmem:[%s1 + $0x170] sm:$0xff]
  %v66 = vld [vmem:[%s1 + $0x178] sm:$0xff]
  %v67 = vld [vmem:[%s1 + $0x180] sm:$0xff]
  %v68 = vld [vmem:[%s1 + $0x188] sm:$0xff]
  %v70 = vunpack.c.l.b16 %v18
  %v71 = vunpack.c.h.b16 %v18
  %v72 = vpack.c.b16 %v70, %v70
  %v73 = vpack.c.b16 %v71, %v71
  %v125 = vunpack.c.l.b16 %v19
  %v126 = vunpack.c.h.b16 %v19
  %v127 = vunpack.c.l.b16 %v20
  %v128 = vunpack.c.h.b16 %v20
  %v129 = vunpack.c.l.b16 %v21
  %v130 = vunpack.c.h.b16 %v21
  %v131 = vunpack.c.l.b16 %v22
  %v132 = vunpack.c.h.b16 %v22
  %v133 = vunpack.c.l.b16 %v23
  %v134 = vunpack.c.h.b16 %v23
  %v135 = vunpack.c.l.b16 %v24
  %v136 = vunpack.c.h.b16 %v24
  %v137 = vunpack.c.l.b16 %v25
  %v138 = vunpack.c.h.b16 %v25
  %v139 = vunpack.c.l.b16 %v26
  %v140 = vunpack.c.h.b16 %v26
  %v141 = vunpack.c.l.b16 %v27
  %v142 = vunpack.c.h.b16 %v27
  %v143 = vunpack.c.l.b16 %v28
  %v144 = vunpack.c.h.b16 %v28
  %v145 = vunpack.c.l.b16 %v29
  %v146 = vunpack.c.h.b16 %v29
  %v147 = vunpack.c.l.b16 %v30
  %v148 = vunpack.c.h.b16 %v30
  %v149 = vunpack.c.l.b16 %v31
  %v150 = vunpack.c.h.b16 %v31
  %v151 = vunpack.c.l.b16 %v32
  %v152 = vunpack.c.h.b16 %v32
  %v153 = vunpack.c.l.b16 %v33
  %v154 = vunpack.c.h.b16 %v33
  %v155 = vunpack.c.l.b16 %v34
  %v156 = vunpack.c.h.b16 %v34
  %v157 = vunpack.c.l.b16 %v35
  %v158 = vunpack.c.h.b16 %v35
  %v159 = vunpack.c.l.b16 %v36
  %v160 = vunpack.c.h.b16 %v36
  %v161 = vunpack.c.l.b16 %v37
  %v162 = vunpack.c.h.b16 %v37
  %v163 = vunpack.c.l.b16 %v38
  %v164 = vunpack.c.h.b16 %v38
  %v165 = vunpack.c.l.b16 %v39
  %v166 = vunpack.c.h.b16 %v39
  %v167 = vunpack.c.l.b16 %v40
  %v168 = vunpack.c.h.b16 %v40
  %v169 = vunpack.c.l.b16 %v41
  %v170 = vunpack.c.h.b16 %v41
  %v171 = vunpack.c.l.b16 %v42
  %v172 = vunpack.c.h.b16 %v42
  %v173 = vunpack.c.l.b16 %v43
  %v174 = vunpack.c.h.b16 %v43
  %v175 = vunpack.c.l.b16 %v44
  %v176 = vunpack.c.h.b16 %v44
  %v177 = vunpack.c.l.b16 %v45
  %v178 = vunpack.c.h.b16 %v45
  %v179 = vunpack.c.l.b16 %v46
  %v180 = vunpack.c.h.b16 %v46
  %v181 = vunpack.c.l.b16 %v47
  %v182 = vunpack.c.h.b16 %v47
  %v183 = vunpack.c.l.b16 %v48
  %v184 = vunpack.c.h.b16 %v48
  %v185 = vunpack.c.l.b16 %v49
  %v186 = vunpack.c.h.b16 %v49
  %v187 = vunpack.c.l.b16 %v50
  %v188 = vunpack.c.h.b16 %v50
  %v189 = vunpack.c.l.b16 %v51
  %v190 = vunpack.c.h.b16 %v51
  %v191 = vunpack.c.l.b16 %v52
  %v192 = vunpack.c.h.b16 %v52
  %v193 = vunpack.c.l.b16 %v53
  %v194 = vunpack.c.h.b16 %v53
  %v195 = vunpack.c.l.b16 %v54
  %v196 = vunpack.c.h.b16 %v54
  %v197 = vunpack.c.l.b16 %v55
  %v198 = vunpack.c.h.b16 %v55
  %v199 = vunpack.c.l.b16 %v56
  %v200 = vunpack.c.h.b16 %v56
  %v201 = vunpack.c.l.b16 %v57
  %v202 = vunpack.c.h.b16 %v57
  %v203 = vunpack.c.l.b16 %v58
  %v204 = vunpack.c.h.b16 %v58
  %v205 = vunpack.c.l.b16 %v59
  %v206 = vunpack.c.h.b16 %v59
  %v207 = vunpack.c.l.b16 %v60
  %v208 = vunpack.c.h.b16 %v60
  %v209 = vunpack.c.l.b16 %v61
  %v210 = vunpack.c.h.b16 %v61
  %v211 = vunpack.c.l.b16 %v62
  %v212 = vunpack.c.h.b16 %v62
  %v213 = vunpack.c.l.b16 %v63
  %v214 = vunpack.c.h.b16 %v63
  %v215 = vunpack.c.l.b16 %v64
  %v216 = vunpack.c.h.b16 %v64
  %v217 = vunpack.c.l.b16 %v65
  %v218 = vunpack.c.h.b16 %v65
  %v219 = vunpack.c.l.b16 %v66
  %v220 = vunpack.c.h.b16 %v66
  %v221 = vunpack.c.l.b16 %v67
  %v222 = vunpack.c.h.b16 %v67
  %v223 = vunpack.c.l.b16 %v68
  %v224 = vunpack.c.h.b16 %v68
  %v225 = vpack.c.b16 %v129, %v125
  %v226 = vpack.c.b16 %v130, %v126
  %v227 = vpack.c.b16 %v131, %v127
  %v228 = vpack.c.b16 %v132, %v128
  %v229 = vpack.c.b16 %v137, %v133
  %v230 = vpack.c.b16 %v138, %v134
  %v231 = vpack.c.b16 %v139, %v135
  %v232 = vpack.c.b16 %v140, %v136
  %v233 = vpack.c.b16 %v145, %v141
  %v234 = vpack.c.b16 %v146, %v142
  %v235 = vpack.c.b16 %v147, %v143
  %v236 = vpack.c.b16 %v148, %v144
  %v237 = vpack.c.b16 %v153, %v149
  %v238 = vpack.c.b16 %v154, %v150
  %v239 = vpack.c.b16 %v155, %v151
  %v240 = vpack.c.b16 %v156, %v152
  %v241 = vpack.c.b16 %v161, %v157
  %v242 = vpack.c.b16 %v162, %v158
  %v243 = vpack.c.b16 %v163, %v159
  %v244 = vpack.c.b16 %v164, %v160
  %v245 = vpack.c.b16 %v169, %v165
  %v246 = vpack.c.b16 %v170, %v166
  %v247 = vpack.c.b16 %v171, %v167
  %v248 = vpack.c.b16 %v172, %v168
  %v249 = vpack.c.b16 %v177, %v173
  %v250 = vpack.c.b16 %v178, %v174
  %v251 = vpack.c.b16 %v179, %v175
  %v252 = vpack.c.b16 %v180, %v176
  %v253 = vpack.c.b16 %v185, %v181
  %v254 = vpack.c.b16 %v186, %v182
  %v255 = vpack.c.b16 %v187, %v183
  %v256 = vpack.c.b16 %v188, %v184
  %v257 = vpack.c.b16 %v193, %v189
  %v258 = vpack.c.b16 %v194, %v190
  %v259 = vpack.c.b16 %v195, %v191
  %v260 = vpack.c.b16 %v196, %v192
  %v261 = vpack.c.b16 %v201, %v197
  %v262 = vpack.c.b16 %v202, %v198
  %v263 = vpack.c.b16 %v203, %v199
  %v264 = vpack.c.b16 %v204, %v200
  %v265 = vpack.c.b16 %v209, %v205
  %v266 = vpack.c.b16 %v210, %v206
  %v267 = vpack.c.b16 %v211, %v207
  %v268 = vpack.c.b16 %v212, %v208
  %v269 = vpack.c.b16 %v217, %v213
  %v270 = vpack.c.b16 %v218, %v214
  %v271 = vpack.c.b16 %v219, %v215
  %v272 = vpack.c.b16 %v220, %v216
  %v273 = vpack.c.b16 %v221, %v221
  %v274 = vpack.c.b16 %v222, %v222
  %v275 = vpack.c.b16 %v223, %v223
  %v276 = vpack.c.b16 %v224, %v224
  %vm325 = vcmask 588800
  %v327 = vsel %vm325, %v73, 0
  %vm329 = vcmask 1043456
  %v331 = vsel %vm329, %v273, 0
  %v334 = vsel %vm329, %v274, 0
  %v337 = vsel %vm329, %v275, 0
  %v340 = vsel %vm329, %v276, 0
  %342 = vmatprep.subr.bf16.mxu0 %v226
  %343 = vmatpush1.bf16.msra.mxu0 %v225
  %344 = vmatprep.subr.bf16.mxu0 %v230
  %345 = vmatpush1.bf16.msra.mxu0 %v229
  %346 = vmatprep.subr.bf16.mxu0 %v234
  %347 = vmatpush1.bf16.msra.mxu0 %v233
  %348 = vmatprep.subr.bf16.mxu0 %v238
  %349 = vmatpush1.bf16.msra.mxu0 %v237
  %350 = vmatprep.subr.bf16.mxu0 %v242
  %351 = vmatpush1.bf16.msra.mxu0 %v241
  %352 = vmatprep.subr.bf16.mxu0 %v246
  %353 = vmatpush1.bf16.msra.mxu0 %v245
  %354 = vmatprep.subr.bf16.mxu0 %v250
  %355 = vmatpush1.bf16.msra.mxu0 %v249
  %356 = vmatprep.subr.bf16.mxu0 %v254
  %357 = vmatpush1.bf16.msra.mxu0 %v253
  %358 = vmatprep.subr.bf16.mxu0 %v258
  %359 = vmatpush1.bf16.msra.mxu0 %v257
  %360 = vmatprep.subr.bf16.mxu0 %v262
  %361 = vmatpush1.bf16.msra.mxu0 %v261
  %362 = vmatprep.subr.bf16.mxu0 %v266
  %363 = vmatpush1.bf16.msra.mxu0 %v265
  %364 = vmatprep.subr.bf16.mxu0 %v270
  %365 = vmatpush1.bf16.msra.mxu0 %v269
  %366 = vmatprep.subr.bf16.mxu0 %v334
  %367 = vmatpush1.bf16.msra.mxu0 %v331
  %368 = vmatprep.subr.bf16.mxu0 0
  %369 = vmatpush1.bf16.msra.mxu0 0
  %370 = vmatprep.subr.bf16.mxu0 0
  %371 = vmatpush1.bf16.msra.mxu0 0
  %372 = vmatprep.subr.bf16.mxu0 0
  %373 = vmatpush1.bf16.msra.mxu0 0
  %374 = vmatprep.mubr.bf16.mxu0 %v327
  %375 = vmatmul.mubr.bf16.gmra.mrb[0].mxu0 %v72
  %v376 = vpop.f32.mrb[0].mxu0
  %v377 = vadd.f32 0.0, %v376
  %v378 = vpop.f32.mrb[0].mxu0
  %v379 = vadd.f32 0.0, %v378
  %v380 = vpop.f32.mrb[0].mxu0
  %v381 = vpop.f32.mrb[0].mxu0
  %382 = vdwg.mxu0
  %383 = vmatprep.subr.bf16.mxu0 %v228
  %384 = vmatpush1.bf16.msra.mxu0 %v227
  %385 = vmatprep.subr.bf16.mxu0 %v232
  %386 = vmatpush1.bf16.msra.mxu0 %v231
  %387 = vmatprep.subr.bf16.mxu0 %v236
  %388 = vmatpush1.bf16.msra.mxu0 %v235
  %389 = vmatprep.subr.bf16.mxu0 %v240
  %390 = vmatpush1.bf16.msra.mxu0 %v239
  %391 = vmatprep.subr.bf16.mxu0 %v244
  %392 = vmatpush1.bf16.msra.mxu0 %v243
  %393 = vmatprep.subr.bf16.mxu0 %v248
  %394 = vmatpush1.bf16.msra.mxu0 %v247
  %395 = vmatprep.subr.bf16.mxu0 %v252
  %396 = vmatpush1.bf16.msra.mxu0 %v251
  %397 = vmatprep.subr.bf16.mxu0 %v256
  %398 = vmatpush1.bf16.msra.mxu0 %v255
  %399 = vmatprep.subr.bf16.mxu0 %v260
  %400 = vmatpush1.bf16.msra.mxu0 %v259
  %401 = vmatprep.subr.bf16.mxu0 %v264
  %402 = vmatpush1.bf16.msra.mxu0 %v263
  %403 = vmatprep.subr.bf16.mxu0 %v268
  %404 = vmatpush1.bf16.msra.mxu0 %v267
  %405 = vmatprep.subr.bf16.mxu0 %v272
  %406 = vmatpush1.bf16.msra.mxu0 %v271
  %407 = vmatprep.subr.bf16.mxu0 %v340
  %408 = vmatpush1.bf16.msra.mxu0 %v337
  %409 = vmatprep.subr.bf16.mxu0 0
  %410 = vmatpush1.bf16.msra.mxu0 0
  %411 = vmatprep.subr.bf16.mxu0 0
  %412 = vmatpush1.bf16.msra.mxu0 0
  %413 = vmatprep.subr.bf16.mxu0 0
  %414 = vmatpush1.bf16.msra.mxu0 0
  %415 = vmatprep.mubr.bf16.mxu0 %v327
  %416 = vmatmul.mubr.bf16.gmra.mrb[0].mxu0 %v72
  %v417 = vpop.f32.mrb[0].mxu0
  %v418 = vadd.f32 0.0, %v417
  %v419 = vpop.f32.mrb[0].mxu0
  %v420 = vadd.f32 0.0, %v419
  %v421 = vpop.f32.mrb[0].mxu0
  %v422 = vpop.f32.mrb[0].mxu0
  %423 = vdwg.mxu0
  %v424 = vadd.f32 %v377, %v379
  %v425 = vadd.f32 %v424, %v418
  %v426 = vadd.f32 %v425, %v420
  %427 = vadd.xlane.f32.xlu0 %v426
  %v428 = vpop.xlane.xlu0 %427
  %v429 = vmul.f32 %v428, 0.001953125
  %v430 = vmul.f32 %v377, %v377
  %v431 = vmul.f32 %v379, %v379
  %v432 = vmul.f32 %v418, %v418
  %v433 = vmul.f32 %v420, %v420
  %v434 = vadd.f32 %v430, %v431
  %v435 = vadd.f32 %v434, %v432
  %v436 = vadd.f32 %v435, %v433
  %437 = vadd.xlane.f32.xlu0 %v436
  %v438 = vpop.xlane.xlu0 %437
  %v439 = vmul.f32 %v438, 0.001953125
  %v440 = vmul.f32 %v429, %v429
  %v441 = vsub.f32 %v439, %v440
  %v442 = vmax.f32 %v441, 0.0
  %v443 = vld [vmem:[%s2] sm:$0xff]
  %v444 = vadd.f32 %v442, 1e-05
  %v445 = vrsqrt.pop %v444
  %v446 = vmul.f32 %v443, %v445
  %v447 = vsub.f32 %v377, %v429
  %v448 = vsub.f32 %v379, %v429
  %v449 = vsub.f32 %v418, %v429
  %v450 = vsub.f32 %v420, %v429
  %452 = vset.pattern.permute.xlu0 0
  %453 = vperm.xlu0 %452, %v446
  %v454 = vpop.permute.xlu0 %453
  %v456 = vmul.f32 %v447, %v454
  %v457 = vmul.f32 %v448, %v454
  %v458 = vmul.f32 %v449, %v454
  %v459 = vmul.f32 %v450, %v454
  %v460 = vld [vmem:[%s3] sm:$0xff]
  %462 = vset.pattern.permute.xlu0 0
  %463 = vperm.xlu0 %462, %v460
  %v464 = vpop.permute.xlu0 %463
  %v466 = vadd.f32 %v456, %v464
  %v467 = vadd.f32 %v457, %v464
  %v468 = vadd.f32 %v458, %v464
  %v469 = vadd.f32 %v459, %v464
  %vm470 = vcmp.ge.f32.partialorder %v466, 0.0
  %vm471 = vcmp.ge.f32.partialorder %v467, 0.0
  %vm472 = vcmp.ge.f32.partialorder %v468, 0.0
  %vm473 = vcmp.ge.f32.partialorder %v469, 0.0
  %v474 = vmul.f32 %v466, 0.01
  %v475 = vmul.f32 %v467, 0.01
  %v476 = vmul.f32 %v468, 0.01
  %v477 = vmul.f32 %v469, 0.01
  %v478 = vsel %vm470, %v466, %v474
  %v479 = vsel %vm471, %v467, %v475
  %v480 = vsel %vm472, %v468, %v476
  %v481 = vsel %vm473, %v469, %v477
  %v482 = vpack.c.bf16 %v478, %v478
  %v483 = vpack.c.bf16 %v479, %v479
  %v484 = vpack.c.bf16 %v480, %v480
  %v485 = vpack.c.bf16 %v481, %v481
  %v490 = vunpack.c.l.b16 %v482
  %v491 = vunpack.c.l.b16 %v483
  %v492 = vunpack.c.l.b16 %v484
  %v493 = vunpack.c.l.b16 %v485
  %v494 = vpack.c.b16 %v491, %v490
  %v495 = vpack.c.b16 %v493, %v492
  %498 = vst [vmem:[%s4] sm:$0xff] %v494
  %499 = vst [vmem:[%s4 + $0x8] sm:$0xff] %v495
  // Predicated region
  $region18: #{res_model_forward.26} parent=0 // pred_check
    _
  $region19: #{res_model_forward.26} parent=0 // pred_check_branch
    %501 = sbr.rel (0) target = $region21
  $region20: #{res_model_forward.26} parent=0 // pred_region
    _
  $region21: #{res_model_forward.26} parent=0 // pred_fallthru
    _
  // Predicated region
  $region22: #{res_model_forward.26} parent=0 // pred_check
    _
  $region23: #{res_model_forward.26} parent=0 // pred_check_branch
    %503 = sbr.rel (0) target = $region25
  $region24: #{res_model_forward.26} parent=0 // pred_region
    _
  $region25: #{res_model_forward.26} parent=0 // pred_fallthru
    _

// kernel: res_model_forward.27
$region0: #{res_model_forward.27}
  #allocation0 [shape = 'u32[]', space=smem, size = 0x4, offset = 0x4, fixed_abs, tag = 'smem constant byte address 0x4 - core index']
  #allocation1 [shape = 'u32[144,128]{1,0:T(1,128)}', space=vmem, size = 0x12000, scoped, tag = 'internal scratch']
  %s0 = inlined_call_operand.vmem [shape: bf16[8,100], index: 0, kind: input, shape index: {}]
  %s1 = inlined_call_operand.vmem [shape: bf16[100,128], index: 1, kind: input, shape index: {}]
  %s2 = inlined_call_operand.vmem [shape: f32[8,1], index: 2, kind: input, shape index: {}]
  %s3 = inlined_call_operand.vmem [shape: f32[8,1], index: 3, kind: input, shape index: {}]
  %s4 = inlined_call_operand.vmem [shape: bf16[8,128], index: 4, kind: output, shape index: {}]
  %s5 = sld [smem:[#allocation0]]
  $region26: #{res_model_forward.27} parent=0
    _
  %s7 = ssub.s32 1, %s5
  %s8 = scalar_select 0, %s7, %s5
  // Predicated region
  $region2: #{res_model_forward.27} parent=0 // pred_check
    _
  $region3: #{res_model_forward.27} parent=0 // pred_check_branch
    %10 = sbr.rel (0) target = $region5
  $region4: #{res_model_forward.27} parent=0 // pred_region
    _
  $region5: #{res_model_forward.27} parent=0 // pred_fallthru
    _
  // Predicated region
  $region6: #{res_model_forward.27} parent=0 // pred_check
    _
  $region7: #{res_model_forward.27} parent=0 // pred_check_branch
    %12 = sbr.rel (0) target = $region9
  $region8: #{res_model_forward.27} parent=0 // pred_region
    _
  $region9: #{res_model_forward.27} parent=0 // pred_fallthru
    _
  // Predicated region
  $region10: #{res_model_forward.27} parent=0 // pred_check
    _
  $region11: #{res_model_forward.27} parent=0 // pred_check_branch
    %14 = sbr.rel (0) target = $region13
  $region12: #{res_model_forward.27} parent=0 // pred_region
    _
  $region13: #{res_model_forward.27} parent=0 // pred_fallthru
    _
  // Predicated region
  $region14: #{res_model_forward.27} parent=0 // pred_check
    _
  $region15: #{res_model_forward.27} parent=0 // pred_check_branch
    %16 = sbr.rel (0) target = $region17
  $region16: #{res_model_forward.27} parent=0 // pred_region
    _
  $region17: #{res_model_forward.27} parent=0 // pred_fallthru
    _
  %v18 = vld [vmem:[%s0] sm:$0xf]
  %v19 = vld [vmem:[%s1] sm:$0xf]
  %v20 = vld [vmem:[%s1 + $0x4] sm:$0xf]
  %v21 = vld [vmem:[%s1 + $0x8] sm:$0xf]
  %v22 = vld [vmem:[%s1 + $0xc] sm:$0xf]
  %v23 = vld [vmem:[%s1 + $0x10] sm:$0xf]
  %v24 = vld [vmem:[%s1 + $0x14] sm:$0xf]
  %v25 = vld [vmem:[%s1 + $0x18] sm:$0xf]
  %v26 = vld [vmem:[%s1 + $0x1c] sm:$0xf]
  %v27 = vld [vmem:[%s1 + $0x20] sm:$0xf]
  %v28 = vld [vmem:[%s1 + $0x24] sm:$0xf]
  %v29 = vld [vmem:[%s1 + $0x28] sm:$0xf]
  %v30 = vld [vmem:[%s1 + $0x2c] sm:$0xf]
  %v31 = vld [vmem:[%s1 + $0x30] sm:$0x3]
  %v45 = vunpack.c.l.b16 %v19
  %v46 = vunpack.c.l.b16 %v20
  %v47 = vunpack.c.l.b16 %v21
  %v48 = vunpack.c.l.b16 %v22
  %v49 = vunpack.c.l.b16 %v23
  %v50 = vunpack.c.l.b16 %v24
  %v51 = vunpack.c.l.b16 %v25
  %v52 = vunpack.c.l.b16 %v26
  %v53 = vunpack.c.l.b16 %v27
  %v54 = vunpack.c.l.b16 %v28
  %v55 = vunpack.c.l.b16 %v29
  %v56 = vunpack.c.l.b16 %v30
  %v57 = vunpack.c.l.b16 %v31
  %v58 = vpack.c.b16 %v46, %v45
  %v59 = vpack.c.b16 %v48, %v47
  %v60 = vpack.c.b16 %v50, %v49
  %v61 = vpack.c.b16 %v52, %v51
  %v62 = vpack.c.b16 %v54, %v53
  %v63 = vpack.c.b16 %v56, %v55
  %v64 = vpack.c.b16 %v57, %v57
  %vm71 = vcmask 818176
  %v73 = vsel %vm71, %v18, 0
  %vm75 = vcmask 1041408
  %v77 = vsel %vm75, %v64, 0
  %79 = vmatprep.subr.bf16.mxu0 0
  %80 = vmatpush1.bf16.msra.mxu0 %v58
  %81 = vmatprep.subr.bf16.mxu0 0
  %82 = vmatpush1.bf16.msra.mxu0 %v59
  %83 = vmatprep.subr.bf16.mxu0 0
  %84 = vmatpush1.bf16.msra.mxu0 %v60
  %85 = vmatprep.subr.bf16.mxu0 0
  %86 = vmatpush1.bf16.msra.mxu0 %v61
  %87 = vmatprep.subr.bf16.mxu0 0
  %88 = vmatpush1.bf16.msra.mxu0 %v62
  %89 = vmatprep.subr.bf16.mxu0 0
  %90 = vmatpush1.bf16.msra.mxu0 %v63
  %91 = vmatprep.subr.bf16.mxu0 0
  %92 = vmatpush1.bf16.msra.mxu0 %v77
  %93 = vmatprep.subr.bf16.mxu0 0
  %94 = vmatpush1.bf16.msra.mxu0 0
  %95 = vmatprep.subr.bf16.mxu0 0
  %96 = vmatpush1.bf16.msra.mxu0 0
  %97 = vmatprep.subr.bf16.mxu0 0
  %98 = vmatpush1.bf16.msra.mxu0 0
  %99 = vmatprep.subr.bf16.mxu0 0
  %100 = vmatpush1.bf16.msra.mxu0 0
  %101 = vmatprep.subr.bf16.mxu0 0
  %102 = vmatpush1.bf16.msra.mxu0 0
  %103 = vmatprep.subr.bf16.mxu0 0
  %104 = vmatpush1.bf16.msra.mxu0 0
  %105 = vmatprep.subr.bf16.mxu0 0
  %106 = vmatpush1.bf16.msra.mxu0 0
  %107 = vmatprep.subr.bf16.mxu0 0
  %108 = vmatpush1.bf16.msra.mxu0 0
  %109 = vmatprep.subr.bf16.mxu0 0
  %110 = vmatpush1.bf16.msra.mxu0 0
  %111 = vmatprep.mubr.bf16.mxu0 0
  %112 = vmatmul.mubr.bf16.gmra.mrb[0].mxu0 %v73
  %v113 = vpop.f32.mrb[0].mxu0
  %v114 = vadd.f32 0.0, %v113
  %v115 = vpop.f32.mrb[0].mxu0
  %v116 = vpop.f32.mrb[0].mxu0
  %v117 = vpop.f32.mrb[0].mxu0
  %118 = vdwg.mxu0
  %119 = vadd.xlane.f32.xlu0 %v114
  %v120 = vpop.xlane.xlu0 %119
  %v121 = vmul.f32 %v120, 0.0078125
  %v122 = vmul.f32 %v114, %v114
  %123 = vadd.xlane.f32.xlu0 %v122
  %v124 = vpop.xlane.xlu0 %123
  %v125 = vmul.f32 %v124, 0.0078125
  %v126 = vmul.f32 %v121, %v121
  %v127 = vsub.f32 %v125, %v126
  %v128 = vmax.f32 %v127, 0.0
  %v129 = vld [vmem:[%s2] sm:$0xff]
  %v130 = vadd.f32 %v128, 1e-05
  %v131 = vrsqrt.pop %v130
  %v132 = vmul.f32 %v129, %v131
  %v133 = vsub.f32 %v114, %v121
  %135 = vset.pattern.permute.xlu0 0
  %136 = vperm.xlu0 %135, %v132
  %v137 = vpop.permute.xlu0 %136
  %v139 = vmul.f32 %v133, %v137
  %v140 = vld [vmem:[%s3] sm:$0xff]
  %142 = vset.pattern.permute.xlu0 0
  %143 = vperm.xlu0 %142, %v140
  %v144 = vpop.permute.xlu0 %143
  %v146 = vadd.f32 %v139, %v144
  %vm147 = vcmp.ge.f32.partialorder %v146, 0.0
  %v148 = vmul.f32 %v146, 0.01
  %v149 = vsel %vm147, %v146, %v148
  %v150 = vpack.c.bf16 %v149, %v149
  %151 = vst [vmem:[%s4] sm:$0xf] %v150
  // Predicated region
  $region18: #{res_model_forward.27} parent=0 // pred_check
    _
  $region19: #{res_model_forward.27} parent=0 // pred_check_branch
    %153 = sbr.rel (0) target = $region21
  $region20: #{res_model_forward.27} parent=0 // pred_region
    _
  $region21: #{res_model_forward.27} parent=0 // pred_fallthru
    _
  // Predicated region
  $region22: #{res_model_forward.27} parent=0 // pred_check
    _
  $region23: #{res_model_forward.27} parent=0 // pred_check_branch
    %155 = sbr.rel (0) target = $region25
  $region24: #{res_model_forward.27} parent=0 // pred_region
    _
  $region25: #{res_model_forward.27} parent=0 // pred_fallthru
    _

// kernel: res_model_forward.29
$region0: #{res_model_forward.29}
  #allocation0 [shape = 'u32[]', space=smem, size = 0x4, offset = 0x4, fixed_abs, tag = 'smem constant byte address 0x4 - core index']
  #allocation1 [shape = 'u32[144,128]{1,0:T(1,128)}', space=vmem, size = 0x12000, scoped, tag = 'internal scratch']
  %s0 = inlined_call_operand.vmem [shape: bf16[8,200], index: 0, kind: input, shape index: {}]
  %s1 = inlined_call_operand.vmem [shape: bf16[200,128], index: 1, kind: input, shape index: {}]
  %s2 = inlined_call_operand.vmem [shape: f32[8,1], index: 2, kind: input, shape index: {}]
  %s3 = inlined_call_operand.vmem [shape: f32[8,1], index: 3, kind: input, shape index: {}]
  %s4 = inlined_call_operand.vmem [shape: bf16[8,128], index: 4, kind: output, shape index: {}]
  %s5 = sld [smem:[#allocation0]]
  $region26: #{res_model_forward.29} parent=0
    _
  %s7 = ssub.s32 1, %s5
  %s8 = scalar_select 0, %s7, %s5
  // Predicated region
  $region2: #{res_model_forward.29} parent=0 // pred_check
    _
  $region3: #{res_model_forward.29} parent=0 // pred_check_branch
    %10 = sbr.rel (0) target = $region5
  $region4: #{res_model_forward.29} parent=0 // pred_region
    _
  $region5: #{res_model_forward.29} parent=0 // pred_fallthru
    _
  // Predicated region
  $region6: #{res_model_forward.29} parent=0 // pred_check
    _
  $region7: #{res_model_forward.29} parent=0 // pred_check_branch
    %12 = sbr.rel (0) target = $region9
  $region8: #{res_model_forward.29} parent=0 // pred_region
    _
  $region9: #{res_model_forward.29} parent=0 // pred_fallthru
    _
  // Predicated region
  $region10: #{res_model_forward.29} parent=0 // pred_check
    _
  $region11: #{res_model_forward.29} parent=0 // pred_check_branch
    %14 = sbr.rel (0) target = $region13
  $region12: #{res_model_forward.29} parent=0 // pred_region
    _
  $region13: #{res_model_forward.29} parent=0 // pred_fallthru
    _
  // Predicated region
  $region14: #{res_model_forward.29} parent=0 // pred_check
    _
  $region15: #{res_model_forward.29} parent=0 // pred_check_branch
    %16 = sbr.rel (0) target = $region17
  $region16: #{res_model_forward.29} parent=0 // pred_region
    _
  $region17: #{res_model_forward.29} parent=0 // pred_fallthru
    _
  %v18 = vld [vmem:[%s0] sm:$0xff]
  %v19 = vld [vmem:[%s1] sm:$0xf]
  %v20 = vld [vmem:[%s1 + $0x4] sm:$0xf]
  %v21 = vld [vmem:[%s1 + $0x8] sm:$0xf]
  %v22 = vld [vmem:[%s1 + $0xc] sm:$0xf]
  %v23 = vld [vmem:[%s1 + $0x10] sm:$0xf]
  %v24 = vld [vmem:[%s1 + $0x14] sm:$0xf]
  %v25 = vld [vmem:[%s1 + $0x18] sm:$0xf]
  %v26 = vld [vmem:[%s1 + $0x1c] sm:$0xf]
  %v27 = vld [vmem:[%s1 + $0x20] sm:$0xf]
  %v28 = vld [vmem:[%s1 + $0x24] sm:$0xf]
  %v29 = vld [vmem:[%s1 + $0x28] sm:$0xf]
  %v30 = vld [vmem:[%s1 + $0x2c] sm:$0xf]
  %v31 = vld [vmem:[%s1 + $0x30] sm:$0xf]
  %v32 = vld [vmem:[%s1 + $0x34] sm:$0xf]
  %v33 = vld [vmem:[%s1 + $0x38] sm:$0xf]
  %v34 = vld [vmem:[%s1 + $0x3c] sm:$0xf]
  %v35 = vld [vmem:[%s1 + $0x40] sm:$0xf]
  %v36 = vld [vmem:[%s1 + $0x44] sm:$0xf]
  %v37 = vld [vmem:[%s1 + $0x48] sm:$0xf]
  %v38 = vld [vmem:[%s1 + $0x4c] sm:$0xf]
  %v39 = vld [vmem:[%s1 + $0x50] sm:$0xf]
  %v40 = vld [vmem:[%s1 + $0x54] sm:$0xf]
  %v41 = vld [vmem:[%s1 + $0x58] sm:$0xf]
  %v42 = vld [vmem:[%s1 + $0x5c] sm:$0xf]
  %v43 = vld [vmem:[%s1 + $0x60] sm:$0xf]
  %v45 = vunpack.c.l.b16 %v18
  %v46 = vunpack.c.h.b16 %v18
  %v47 = vpack.c.b16 %v45, %v45
  %v48 = vpack.c.b16 %v46, %v46
  %v75 = vunpack.c.l.b16 %v19
  %v76 = vunpack.c.l.b16 %v20
  %v77 = vunpack.c.l.b16 %v21
  %v78 = vunpack.c.l.b16 %v22
  %v79 = vunpack.c.l.b16 %v23
  %v80 = vunpack.c.l.b16 %v24
  %v81 = vunpack.c.l.b16 %v25
  %v82 = vunpack.c.l.b16 %v26
  %v83 = vunpack.c.l.b16 %v27
  %v84 = vunpack.c.l.b16 %v28
  %v85 = vunpack.c.l.b16 %v29
  %v86 = vunpack.c.l.b16 %v30
  %v87 = vunpack.c.l.b16 %v31
  %v88 = vunpack.c.l.b16 %v32
  %v89 = vunpack.c.l.b16 %v33
  %v90 = vunpack.c.l.b16 %v34
  %v91 = vunpack.c.l.b16 %v35
  %v92 = vunpack.c.l.b16 %v36
  %v93 = vunpack.c.l.b16 %v37
  %v94 = vunpack.c.l.b16 %v38
  %v95 = vunpack.c.l.b16 %v39
  %v96 = vunpack.c.l.b16 %v40
  %v97 = vunpack.c.l.b16 %v41
  %v98 = vunpack.c.l.b16 %v42
  %v99 = vunpack.c.l.b16 %v43
  %v100 = vpack.c.b16 %v76, %v75
  %v101 = vpack.c.b16 %v78, %v77
  %v102 = vpack.c.b16 %v80, %v79
  %v103 = vpack.c.b16 %v82, %v81
  %v104 = vpack.c.b16 %v84, %v83
  %v105 = vpack.c.b16 %v86, %v85
  %v106 = vpack.c.b16 %v88, %v87
  %v107 = vpack.c.b16 %v90, %v89
  %v108 = vpack.c.b16 %v92, %v91
  %v109 = vpack.c.b16 %v94, %v93
  %v110 = vpack.c.b16 %v96, %v95
  %v111 = vpack.c.b16 %v98, %v97
  %v112 = vpack.c.b16 %v99, %v99
  %vm125 = vcmask 588800
  %v127 = vsel %vm125, %v48, 0
  %vm129 = vcmask 1043456
  %v131 = vsel %vm129, %v112, 0
  %133 = vmatprep.subr.bf16.mxu0 0
  %134 = vmatpush1.bf16.msra.mxu0 %v100
  %135 = vmatprep.subr.bf16.mxu0 0
  %136 = vmatpush1.bf16.msra.mxu0 %v101
  %137 = vmatprep.subr.bf16.mxu0 0
  %138 = vmatpush1.bf16.msra.mxu0 %v102
  %139 = vmatprep.subr.bf16.mxu0 0
  %140 = vmatpush1.bf16.msra.mxu0 %v103
  %141 = vmatprep.subr.bf16.mxu0 0
  %142 = vmatpush1.bf16.msra.mxu0 %v104
  %143 = vmatprep.subr.bf16.mxu0 0
  %144 = vmatpush1.bf16.msra.mxu0 %v105
  %145 = vmatprep.subr.bf16.mxu0 0
  %146 = vmatpush1.bf16.msra.mxu0 %v106
  %147 = vmatprep.subr.bf16.mxu0 0
  %148 = vmatpush1.bf16.msra.mxu0 %v107
  %149 = vmatprep.subr.bf16.mxu0 0
  %150 = vmatpush1.bf16.msra.mxu0 %v108
  %151 = vmatprep.subr.bf16.mxu0 0
  %152 = vmatpush1.bf16.msra.mxu0 %v109
  %153 = vmatprep.subr.bf16.mxu0 0
  %154 = vmatpush1.bf16.msra.mxu0 %v110
  %155 = vmatprep.subr.bf16.mxu0 0
  %156 = vmatpush1.bf16.msra.mxu0 %v111
  %157 = vmatprep.subr.bf16.mxu0 0
  %158 = vmatpush1.bf16.msra.mxu0 %v131
  %159 = vmatprep.subr.bf16.mxu0 0
  %160 = vmatpush1.bf16.msra.mxu0 0
  %161 = vmatprep.subr.bf16.mxu0 0
  %162 = vmatpush1.bf16.msra.mxu0 0
  %163 = vmatprep.subr.bf16.mxu0 0
  %164 = vmatpush1.bf16.msra.mxu0 0
  %165 = vmatprep.mubr.bf16.mxu0 %v127
  %166 = vmatmul.mubr.bf16.gmra.mrb[0].mxu0 %v47
  %v167 = vpop.f32.mrb[0].mxu0
  %v168 = vadd.f32 0.0, %v167
  %v169 = vpop.f32.mrb[0].mxu0
  %v170 = vpop.f32.mrb[0].mxu0
  %v171 = vpop.f32.mrb[0].mxu0
  %172 = vdwg.mxu0
  %173 = vadd.xlane.f32.xlu0 %v168
  %v174 = vpop.xlane.xlu0 %173
  %v175 = vmul.f32 %v174, 0.0078125
  %v176 = vmul.f32 %v168, %v168
  %177 = vadd.xlane.f32.xlu0 %v176
  %v178 = vpop.xlane.xlu0 %177
  %v179 = vmul.f32 %v178, 0.0078125
  %v180 = vmul.f32 %v175, %v175
  %v181 = vsub.f32 %v179, %v180
  %v182 = vmax.f32 %v181, 0.0
  %v183 = vld [vmem:[%s2] sm:$0xff]
  %v184 = vadd.f32 %v182, 1e-05
  %v185 = vrsqrt.pop %v184
  %v186 = vmul.f32 %v183, %v185
  %v187 = vsub.f32 %v168, %v175
  %189 = vset.pattern.permute.xlu0 0
  %190 = vperm.xlu0 %189, %v186
  %v191 = vpop.permute.xlu0 %190
  %v193 = vmul.f32 %v187, %v191
  %v194 = vld [vmem:[%s3] sm:$0xff]
  %196 = vset.pattern.permute.xlu0 0
  %197 = vperm.xlu0 %196, %v194
  %v198 = vpop.permute.xlu0 %197
  %v200 = vadd.f32 %v193, %v198
  %vm201 = vcmp.ge.f32.partialorder %v200, 0.0
  %v202 = vmul.f32 %v200, 0.01
  %v203 = vsel %vm201, %v200, %v202
  %v204 = vpack.c.bf16 %v203, %v203
  %205 = vst [vmem:[%s4] sm:$0xf] %v204
  // Predicated region
  $region18: #{res_model_forward.29} parent=0 // pred_check
    _
  $region19: #{res_model_forward.29} parent=0 // pred_check_branch
    %207 = sbr.rel (0) target = $region21
  $region20: #{res_model_forward.29} parent=0 // pred_region
    _
  $region21: #{res_model_forward.29} parent=0 // pred_fallthru
    _
  // Predicated region
  $region22: #{res_model_forward.29} parent=0 // pred_check
    _
  $region23: #{res_model_forward.29} parent=0 // pred_check_branch
    %209 = sbr.rel (0) target = $region25
  $region24: #{res_model_forward.29} parent=0 // pred_region
    _
  $region25: #{res_model_forward.29} parent=0 // pred_fallthru
    _

// kernel: res_model_forward.31
$region0: #{res_model_forward.31}
  #allocation0 [shape = 'u32[]', space=smem, size = 0x4, offset = 0x4, fixed_abs, tag = 'smem constant byte address 0x4 - core index']
  #allocation1 [shape = 'u32[144,128]{1,0:T(1,128)}', space=vmem, size = 0x12000, scoped, tag = 'internal scratch']
  %s0 = inlined_call_operand.vmem [shape: bf16[8,16], index: 0, kind: input, shape index: {}]
  %s1 = inlined_call_operand.vmem [shape: bf16[16,128], index: 1, kind: input, shape index: {}]
  %s2 = inlined_call_operand.vmem [shape: f32[8,1], index: 2, kind: input, shape index: {}]
  %s3 = inlined_call_operand.vmem [shape: f32[8,1], index: 3, kind: input, shape index: {}]
  %s4 = inlined_call_operand.vmem [shape: bf16[8,128], index: 4, kind: output, shape index: {}]
  %s5 = sld [smem:[#allocation0]]
  $region26: #{res_model_forward.31} parent=0
    _
  %s7 = ssub.s32 1, %s5
  %s8 = scalar_select 0, %s7, %s5
  // Predicated region
  $region2: #{res_model_forward.31} parent=0 // pred_check
    _
  $region3: #{res_model_forward.31} parent=0 // pred_check_branch
    %10 = sbr.rel (0) target = $region5
  $region4: #{res_model_forward.31} parent=0 // pred_region
    _
  $region5: #{res_model_forward.31} parent=0 // pred_fallthru
    _
  // Predicated region
  $region6: #{res_model_forward.31} parent=0 // pred_check
    _
  $region7: #{res_model_forward.31} parent=0 // pred_check_branch
    %12 = sbr.rel (0) target = $region9
  $region8: #{res_model_forward.31} parent=0 // pred_region
    _
  $region9: #{res_model_forward.31} parent=0 // pred_fallthru
    _
  // Predicated region
  $region10: #{res_model_forward.31} parent=0 // pred_check
    _
  $region11: #{res_model_forward.31} parent=0 // pred_check_branch
    %14 = sbr.rel (0) target = $region13
  $region12: #{res_model_forward.31} parent=0 // pred_region
    _
  $region13: #{res_model_forward.31} parent=0 // pred_fallthru
    _
  // Predicated region
  $region14: #{res_model_forward.31} parent=0 // pred_check
    _
  $region15: #{res_model_forward.31} parent=0 // pred_check_branch
    %16 = sbr.rel (0) target = $region17
  $region16: #{res_model_forward.31} parent=0 // pred_region
    _
  $region17: #{res_model_forward.31} parent=0 // pred_fallthru
    _
  %v18 = vld [vmem:[%s0] sm:$0xf]
  %v19 = vld [vmem:[%s1] sm:$0xf]
  %v20 = vld [vmem:[%s1 + $0x4] sm:$0xf]
  %v23 = vunpack.c.l.b16 %v19
  %v24 = vunpack.c.l.b16 %v20
  %v25 = vpack.c.b16 %v24, %v23
  %vm27 = vcmask 130048
  %v29 = vsel %vm27, %v18, 0
  %31 = vmatprep.subr.bf16.mxu0 0
  %32 = vmatpush1.bf16.msra.mxu0 %v25
  %33 = vmatprep.subr.bf16.mxu0 0
  %34 = vmatpush1.bf16.msra.mxu0 0
  %35 = vmatprep.subr.bf16.mxu0 0
  %36 = vmatpush1.bf16.msra.mxu0 0
  %37 = vmatprep.subr.bf16.mxu0 0
  %38 = vmatpush1.bf16.msra.mxu0 0
  %39 = vmatprep.subr.bf16.mxu0 0
  %40 = vmatpush1.bf16.msra.mxu0 0
  %41 = vmatprep.subr.bf16.mxu0 0
  %42 = vmatpush1.bf16.msra.mxu0 0
  %43 = vmatprep.subr.bf16.mxu0 0
  %44 = vmatpush1.bf16.msra.mxu0 0
  %45 = vmatprep.subr.bf16.mxu0 0
  %46 = vmatpush1.bf16.msra.mxu0 0
  %47 = vmatprep.subr.bf16.mxu0 0
  %48 = vmatpush1.bf16.msra.mxu0 0
  %49 = vmatprep.subr.bf16.mxu0 0
  %50 = vmatpush1.bf16.msra.mxu0 0
  %51 = vmatprep.subr.bf16.mxu0 0
  %52 = vmatpush1.bf16.msra.mxu0 0
  %53 = vmatprep.subr.bf16.mxu0 0
  %54 = vmatpush1.bf16.msra.mxu0 0
  %55 = vmatprep.subr.bf16.mxu0 0
  %56 = vmatpush1.bf16.msra.mxu0 0
  %57 = vmatprep.subr.bf16.mxu0 0
  %58 = vmatpush1.bf16.msra.mxu0 0
  %59 = vmatprep.subr.bf16.mxu0 0
  %60 = vmatpush1.bf16.msra.mxu0 0
  %61 = vmatprep.subr.bf16.mxu0 0
  %62 = vmatpush1.bf16.msra.mxu0 0
  %63 = vmatprep.mubr.bf16.mxu0 0
  %64 = vmatmul.mubr.bf16.gmra.mrb[0].mxu0 %v29
  %v65 = vpop.f32.mrb[0].mxu0
  %v66 = vadd.f32 0.0, %v65
  %v67 = vpop.f32.mrb[0].mxu0
  %v68 = vpop.f32.mrb[0].mxu0
  %v69 = vpop.f32.mrb[0].mxu0
  %70 = vdwg.mxu0
  %71 = vadd.xlane.f32.xlu0 %v66
  %v72 = vpop.xlane.xlu0 %71
  %v73 = vmul.f32 %v72, 0.0078125
  %v74 = vmul.f32 %v66, %v66
  %75 = vadd.xlane.f32.xlu0 %v74
  %v76 = vpop.xlane.xlu0 %75
  %v77 = vmul.f32 %v76, 0.0078125
  %v78 = vmul.f32 %v73, %v73
  %v79 = vsub.f32 %v77, %v78
  %v80 = vmax.f32 %v79, 0.0
  %v81 = vld [vmem:[%s2] sm:$0xff]
  %v82 = vadd.f32 %v80, 1e-05
  %v83 = vrsqrt.pop %v82
  %v84 = vmul.f32 %v81, %v83
  %v85 = vsub.f32 %v66, %v73
  %87 = vset.pattern.permute.xlu0 0
  %88 = vperm.xlu0 %87, %v84
  %v89 = vpop.permute.xlu0 %88
  %v91 = vmul.f32 %v85, %v89
  %v92 = vld [vmem:[%s3] sm:$0xff]
  %94 = vset.pattern.permute.xlu0 0
  %95 = vperm.xlu0 %94, %v92
  %v96 = vpop.permute.xlu0 %95
  %v98 = vadd.f32 %v91, %v96
  %vm99 = vcmp.ge.f32.partialorder %v98, 0.0
  %v100 = vmul.f32 %v98, 0.01
  %v101 = vsel %vm99, %v98, %v100
  %v102 = vpack.c.bf16 %v101, %v101
  %103 = vst [vmem:[%s4] sm:$0xf] %v102
  // Predicated region
  $region18: #{res_model_forward.31} parent=0 // pred_check
    _
  $region19: #{res_model_forward.31} parent=0 // pred_check_branch
    %105 = sbr.rel (0) target = $region21
  $region20: #{res_model_forward.31} parent=0 // pred_region
    _
  $region21: #{res_model_forward.31} parent=0 // pred_fallthru
    _
  // Predicated region
  $region22: #{res_model_forward.31} parent=0 // pred_check
    _
  $region23: #{res_model_forward.31} parent=0 // pred_check_branch
    %107 = sbr.rel (0) target = $region25
  $region24: #{res_model_forward.31} parent=0 // pred_region
    _
  $region25: #{res_model_forward.31} parent=0 // pred_fallthru
    _

// kernel: res_model_forward.32
$region0: #{res_model_forward.32}
  #allocation0 [shape = 'u32[]', space=smem, size = 0x4, offset = 0x4, fixed_abs, tag = 'smem constant byte address 0x4 - core index']
  #allocation1 [shape = 'u32[144,128]{1,0:T(1,128)}', space=vmem, size = 0x12000, scoped, tag = 'internal scratch']
  %s0 = inlined_call_operand.vmem [shape: bf16[32,72], index: 0, kind: input, shape index: {}]
  %s1 = inlined_call_operand.vmem [shape: bf16[72,128], index: 1, kind: input, shape index: {}]
  %s2 = inlined_call_operand.vmem [shape: f32[32,1], index: 2, kind: input, shape index: {}]
  %s3 = inlined_call_operand.vmem [shape: bf16[32,128], index: 3, kind: output, shape index: {}]
  %s4 = sld [smem:[#allocation0]]
  $region22: #{res_model_forward.32} parent=0
    _
  %s6 = ssub.s32 1, %s4
  %s7 = scalar_select 0, %s6, %s4
  // Predicated region
  $region2: #{res_model_forward.32} parent=0 // pred_check
    _
  $region3: #{res_model_forward.32} parent=0 // pred_check_branch
    %9 = sbr.rel (0) target = $region5
  $region4: #{res_model_forward.32} parent=0 // pred_region
    _
  $region5: #{res_model_forward.32} parent=0 // pred_fallthru
    _
  // Predicated region
  $region6: #{res_model_forward.32} parent=0 // pred_check
    _
  $region7: #{res_model_forward.32} parent=0 // pred_check_branch
    %11 = sbr.rel (0) target = $region9
  $region8: #{res_model_forward.32} parent=0 // pred_region
    _
  $region9: #{res_model_forward.32} parent=0 // pred_fallthru
    _
  // Predicated region
  $region10: #{res_model_forward.32} parent=0 // pred_check
    _
  $region11: #{res_model_forward.32} parent=0 // pred_check_branch
    %13 = sbr.rel (0) target = $region13
  $region12: #{res_model_forward.32} parent=0 // pred_region
    _
  $region13: #{res_model_forward.32} parent=0 // pred_fallthru
    _
  %v15 = vld [vmem:[%s0] sm:$0xf]
  %v16 = vld [vmem:[%s0 + $0x4] sm:$0xf]
  %v17 = vld [vmem:[%s0 + $0x8] sm:$0xf]
  %v18 = vld [vmem:[%s0 + $0xc] sm:$0xf]
  %v19 = vld [vmem:[%s1] sm:$0xf]
  %v20 = vld [vmem:[%s1 + $0x4] sm:$0xf]
  %v21 = vld [vmem:[%s1 + $0x8] sm:$0xf]
  %v22 = vld [vmem:[%s1 + $0xc] sm:$0xf]
  %v23 = vld [vmem:[%s1 + $0x10] sm:$0xf]
  %v24 = vld [vmem:[%s1 + $0x14] sm:$0xf]
  %v25 = vld [vmem:[%s1 + $0x18] sm:$0xf]
  %v26 = vld [vmem:[%s1 + $0x1c] sm:$0xf]
  %v27 = vld [vmem:[%s1 + $0x20] sm:$0xf]
  %v28 = vld [vmem:[%s2] sm:$0xff]
  %v29 = vld [vmem:[%s2 + $0x8] sm:$0xff]
  %v30 = vld [vmem:[%s2 + $0x10] sm:$0xff]
  %v31 = vld [vmem:[%s2 + $0x18] sm:$0xff]
  %33 = vset.pattern.permute.xlu0 0
  %34 = vperm.xlu0 %33, %v28
  %v35 = vpop.permute.xlu0 %34
  %38 = vset.pattern.permute.xlu0 0
  %39 = vperm.xlu0 %38, %v29
  %v40 = vpop.permute.xlu0 %39
  %43 = vset.pattern.permute.xlu0 0
  %44 = vperm.xlu0 %43, %v30
  %v45 = vpop.permute.xlu0 %44
  %48 = vset.pattern.permute.xlu0 0
  %49 = vperm.xlu0 %48, %v31
  %v50 = vpop.permute.xlu0 %49
  %v56 = vunpack.c.l.b16 %v15
  %v57 = vunpack.c.l.b16 %v16
  %v58 = vunpack.c.l.b16 %v17
  %v59 = vunpack.c.l.b16 %v18
  %v60 = vpack.c.b16 %v57, %v56
  %v61 = vpack.c.b16 %v59, %v58
  %v71 = vunpack.c.l.b16 %v19
  %v72 = vunpack.c.l.b16 %v20
  %v73 = vunpack.c.l.b16 %v21
  %v74 = vunpack.c.l.b16 %v22
  %v75 = vunpack.c.l.b16 %v23
  %v76 = vunpack.c.l.b16 %v24
  %v77 = vunpack.c.l.b16 %v25
  %v78 = vunpack.c.l.b16 %v26
  %v79 = vunpack.c.l.b16 %v27
  %v80 = vpack.c.b16 %v72, %v71
  %v81 = vpack.c.b16 %v74, %v73
  %v82 = vpack.c.b16 %v76, %v75
  %v83 = vpack.c.b16 %v78, %v77
  %v84 = vpack.c.b16 %v79, %v79
  %vm89 = vcmask 588800
  %v91 = vsel %vm89, %v60, 0
  %v94 = vsel %vm89, %v61, 0
  %vm96 = vcmask 1043456
  %v98 = vsel %vm96, %v84, 0
  %100 = vmatprep.subr.bf16.mxu0 0
  %101 = vmatpush1.bf16.msra.mxu0 %v80
  %102 = vmatprep.subr.bf16.mxu0 0
  %103 = vmatpush1.bf16.msra.mxu0 %v81
  %104 = vmatprep.subr.bf16.mxu0 0
  %105 = vmatpush1.bf16.msra.mxu0 %v82
  %106 = vmatprep.subr.bf16.mxu0 0
  %107 = vmatpush1.bf16.msra.mxu0 %v83
  %108 = vmatprep.subr.bf16.mxu0 0
  %109 = vmatpush1.bf16.msra.mxu0 %v98
  %110 = vmatprep.subr.bf16.mxu0 0
  %111 = vmatpush1.bf16.msra.mxu0 0
  %112 = vmatprep.subr.bf16.mxu0 0
  %113 = vmatpush1.bf16.msra.mxu0 0
  %114 = vmatprep.subr.bf16.mxu0 0
  %115 = vmatpush1.bf16.msra.mxu0 0
  %116 = vmatprep.subr.bf16.mxu0 0
  %117 = vmatpush1.bf16.msra.mxu0 0
  %118 = vmatprep.subr.bf16.mxu0 0
  %119 = vmatpush1.bf16.msra.mxu0 0
  %120 = vmatprep.subr.bf16.mxu0 0
  %121 = vmatpush1.bf16.msra.mxu0 0
  %122 = vmatprep.subr.bf16.mxu0 0
  %123 = vmatpush1.bf16.msra.mxu0 0
  %124 = vmatprep.subr.bf16.mxu0 0
  %125 = vmatpush1.bf16.msra.mxu0 0
  %126 = vmatprep.subr.bf16.mxu0 0
  %127 = vmatpush1.bf16.msra.mxu0 0
  %128 = vmatprep.subr.bf16.mxu0 0
  %129 = vmatpush1.bf16.msra.mxu0 0
  %130 = vmatprep.subr.bf16.mxu0 0
  %131 = vmatpush1.bf16.msra.mxu0 0
  %132 = vmatprep.mubr.bf16.mxu0 0
  %133 = vmatmul.mubr.bf16.gmra.mrb[0].mxu0 %v91
  %v134 = vpop.f32.mrb[0].mxu0
  %v135 = vadd.f32 %v35, %v134
  %v136 = vpop.f32.mrb[0].mxu0
  %v137 = vpop.f32.mrb[0].mxu0
  %v138 = vadd.f32 %v40, %v137
  %v139 = vpop.f32.mrb[0].mxu0
  %140 = vmatprep.mubr.bf16.mxu0 0
  %141 = vmatmul.mubr.bf16.gmra.mrb[0].mxu0 %v94
  %v142 = vpop.f32.mrb[0].mxu0
  %v143 = vadd.f32 %v45, %v142
  %v144 = vpop.f32.mrb[0].mxu0
  %v145 = vpop.f32.mrb[0].mxu0
  %v146 = vadd.f32 %v50, %v145
  %v147 = vpop.f32.mrb[0].mxu0
  %148 = vdwg.mxu0
  %v149 = vpack.c.bf16 %v138, %v135
  %v150 = vpack.c.bf16 %v146, %v143
  %v153 = vunpack.c.l.b16 %v149
  %v154 = vunpack.c.h.b16 %v149
  %v155 = vunpack.c.l.b16 %v150
  %v156 = vunpack.c.h.b16 %v150
  %v157 = vpack.c.b16 %v153, %v153
  %v158 = vpack.c.b16 %v154, %v154
  %v159 = vpack.c.b16 %v155, %v155
  %v160 = vpack.c.b16 %v156, %v156
  %165 = vst [vmem:[%s3] sm:$0xf] %v157
  %166 = vst [vmem:[%s3 + $0x4] sm:$0xf] %v158
  %167 = vst [vmem:[%s3 + $0x8] sm:$0xf] %v159
  %168 = vst [vmem:[%s3 + $0xc] sm:$0xf] %v160
  // Predicated region
  $region14: #{res_model_forward.32} parent=0 // pred_check
    _
  $region15: #{res_model_forward.32} parent=0 // pred_check_branch
    %170 = sbr.rel (0) target = $region17
  $region16: #{res_model_forward.32} parent=0 // pred_region
    _
  $region17: #{res_model_forward.32} parent=0 // pred_fallthru
    _
  // Predicated region
  $region18: #{res_model_forward.32} parent=0 // pred_check
    _
  $region19: #{res_model_forward.32} parent=0 // pred_check_branch
    %172 = sbr.rel (0) target = $region21
  $region20: #{res_model_forward.32} parent=0 // pred_region
    _
  $region21: #{res_model_forward.32} parent=0 // pred_fallthru
    _

// kernel: res_model_forward.33
$region0: #{res_model_forward.33}
  #allocation0 [shape = 'u32[]', space=smem, size = 0x4, offset = 0x4, fixed_abs, tag = 'smem constant byte address 0x4 - core index']
  #allocation1 [shape = 'u32[144,128]{1,0:T(1,128)}', space=vmem, size = 0x12000, scoped, tag = 'internal scratch']
  %s0 = inlined_call_operand.vmem [shape: bf16[8,72], index: 0, kind: input, shape index: {}]
  %s1 = inlined_call_operand.vmem [shape: bf16[72,512], index: 1, kind: input, shape index: {}]
  %s2 = inlined_call_operand.vmem [shape: f32[8,1], index: 2, kind: input, shape index: {}]
  %s3 = inlined_call_operand.vmem [shape: f32[8,1], index: 3, kind: input, shape index: {}]
  %s4 = inlined_call_operand.vmem [shape: bf16[8,512], index: 4, kind: input, shape index: {}]
  %s5 = inlined_call_operand.vmem [shape: bf16[8,512], index: 5, kind: output, shape index: {}]
  %s6 = sld [smem:[#allocation0]]
  $region30: #{res_model_forward.33} parent=0
    _
  %s8 = ssub.s32 1, %s6
  %s9 = scalar_select 0, %s8, %s6
  // Predicated region
  $region2: #{res_model_forward.33} parent=0 // pred_check
    _
  $region3: #{res_model_forward.33} parent=0 // pred_check_branch
    %11 = sbr.rel (0) target = $region5
  $region4: #{res_model_forward.33} parent=0 // pred_region
    _
  $region5: #{res_model_forward.33} parent=0 // pred_fallthru
    _
  // Predicated region
  $region6: #{res_model_forward.33} parent=0 // pred_check
    _
  $region7: #{res_model_forward.33} parent=0 // pred_check_branch
    %13 = sbr.rel (0) target = $region9
  $region8: #{res_model_forward.33} parent=0 // pred_region
    _
  $region9: #{res_model_forward.33} parent=0 // pred_fallthru
    _
  // Predicated region
  $region10: #{res_model_forward.33} parent=0 // pred_check
    _
  $region11: #{res_model_forward.33} parent=0 // pred_check_branch
    %15 = sbr.rel (0) target = $region13
  $region12: #{res_model_forward.33} parent=0 // pred_region
    _
  $region13: #{res_model_forward.33} parent=0 // pred_fallthru
    _
  // Predicated region
  $region14: #{res_model_forward.33} parent=0 // pred_check
    _
  $region15: #{res_model_forward.33} parent=0 // pred_check_branch
    %17 = sbr.rel (0) target = $region17
  $region16: #{res_model_forward.33} parent=0 // pred_region
    _
  $region17: #{res_model_forward.33} parent=0 // pred_fallthru
    _
  // Predicated region
  $region18: #{res_model_forward.33} parent=0 // pred_check
    _
  $region19: #{res_model_forward.33} parent=0 // pred_check_branch
    %19 = sbr.rel (0) target = $region21
  $region20: #{res_model_forward.33} parent=0 // pred_region
    _
  $region21: #{res_model_forward.33} parent=0 // pred_fallthru
    _
  %v21 = vld [vmem:[%s0] sm:$0xf]
  %v22 = vld [vmem:[%s1] sm:$0xff]
  %v23 = vld [vmem:[%s1 + $0x8] sm:$0xff]
  %v24 = vld [vmem:[%s1 + $0x10] sm:$0xff]
  %v25 = vld [vmem:[%s1 + $0x18] sm:$0xff]
  %v26 = vld [vmem:[%s1 + $0x20] sm:$0xff]
  %v27 = vld [vmem:[%s1 + $0x28] sm:$0xff]
  %v28 = vld [vmem:[%s1 + $0x30] sm:$0xff]
  %v29 = vld [vmem:[%s1 + $0x38] sm:$0xff]
  %v30 = vld [vmem:[%s1 + $0x40] sm:$0xff]
  %v31 = vld [vmem:[%s1 + $0x48] sm:$0xff]
  %v32 = vld [vmem:[%s1 + $0x50] sm:$0xff]
  %v33 = vld [vmem:[%s1 + $0x58] sm:$0xff]
  %v34 = vld [vmem:[%s1 + $0x60] sm:$0xff]
  %v35 = vld [vmem:[%s1 + $0x68] sm:$0xff]
  %v36 = vld [vmem:[%s1 + $0x70] sm:$0xff]
  %v37 = vld [vmem:[%s1 + $0x78] sm:$0xff]
  %v38 = vld [vmem:[%s1 + $0x80] sm:$0xff]
  %v39 = vld [vmem:[%s1 + $0x88] sm:$0xff]
  %v58 = vunpack.c.l.b16 %v22
  %v59 = vunpack.c.h.b16 %v22
  %v60 = vunpack.c.l.b16 %v23
  %v61 = vunpack.c.h.b16 %v23
  %v62 = vunpack.c.l.b16 %v24
  %v63 = vunpack.c.h.b16 %v24
  %v64 = vunpack.c.l.b16 %v25
  %v65 = vunpack.c.h.b16 %v25
  %v66 = vunpack.c.l.b16 %v26
  %v67 = vunpack.c.h.b16 %v26
  %v68 = vunpack.c.l.b16 %v27
  %v69 = vunpack.c.h.b16 %v27
  %v70 = vunpack.c.l.b16 %v28
  %v71 = vunpack.c.h.b16 %v28
  %v72 = vunpack.c.l.b16 %v29
  %v73 = vunpack.c.h.b16 %v29
  %v74 = vunpack.c.l.b16 %v30
  %v75 = vunpack.c.h.b16 %v30
  %v76 = vunpack.c.l.b16 %v31
  %v77 = vunpack.c.h.b16 %v31
  %v78 = vunpack.c.l.b16 %v32
  %v79 = vunpack.c.h.b16 %v32
  %v80 = vunpack.c.l.b16 %v33
  %v81 = vunpack.c.h.b16 %v33
  %v82 = vunpack.c.l.b16 %v34
  %v83 = vunpack.c.h.b16 %v34
  %v84 = vunpack.c.l.b16 %v35
  %v85 = vunpack.c.h.b16 %v35
  %v86 = vunpack.c.l.b16 %v36
  %v87 = vunpack.c.h.b16 %v36
  %v88 = vunpack.c.l.b16 %v37
  %v89 = vunpack.c.h.b16 %v37
  %v90 = vunpack.c.l.b16 %v38
  %v91 = vunpack.c.h.b16 %v38
  %v92 = vunpack.c.l.b16 %v39
  %v93 = vunpack.c.h.b16 %v39
  %v94 = vpack.c.b16 %v62, %v58
  %v95 = vpack.c.b16 %v63, %v59
  %v96 = vpack.c.b16 %v64, %v60
  %v97 = vpack.c.b16 %v65, %v61
  %v98 = vpack.c.b16 %v70, %v66
  %v99 = vpack.c.b16 %v71, %v67
  %v100 = vpack.c.b16 %v72, %v68
  %v101 = vpack.c.b16 %v73, %v69
  %v102 = vpack.c.b16 %v78, %v74
  %v103 = vpack.c.b16 %v79, %v75
  %v104 = vpack.c.b16 %v80, %v76
  %v105 = vpack.c.b16 %v81, %v77
  %v106 = vpack.c.b16 %v86, %v82
  %v107 = vpack.c.b16 %v87, %v83
  %v108 = vpack.c.b16 %v88, %v84
  %v109 = vpack.c.b16 %v89, %v85
  %v110 = vpack.c.b16 %v90, %v90
  %v111 = vpack.c.b16 %v91, %v91
  %v112 = vpack.c.b16 %v92, %v92
  %v113 = vpack.c.b16 %v93, %v93
  %vm130 = vcmask 588800
  %v132 = vsel %vm130, %v21, 0
  %vm134 = vcmask 1043456
  %v136 = vsel %vm134, %v110, 0
  %v139 = vsel %vm134, %v111, 0
  %v142 = vsel %vm134, %v112, 0
  %v145 = vsel %vm134, %v113, 0
  %147 = vmatprep.subr.bf16.mxu0 %v95
  %148 = vmatpush1.bf16.msra.mxu0 %v94
  %149 = vmatprep.subr.bf16.mxu0 %v99
  %150 = vmatpush1.bf16.msra.mxu0 %v98
  %151 = vmatprep.subr.bf16.mxu0 %v103
  %152 = vmatpush1.bf16.msra.mxu0 %v102
  %153 = vmatprep.subr.bf16.mxu0 %v107
  %154 = vmatpush1.bf16.msra.mxu0 %v106
  %155 = vmatprep.subr.bf16.mxu0 %v139
  %156 = vmatpush1.bf16.msra.mxu0 %v136
  %157 = vmatprep.subr.bf16.mxu0 0
  %158 = vmatpush1.bf16.msra.mxu0 0
  %159 = vmatprep.subr.bf16.mxu0 0
  %160 = vmatpush1.bf16.msra.mxu0 0
  %161 = vmatprep.subr.bf16.mxu0 0
  %162 = vmatpush1.bf16.msra.mxu0 0
  %163 = vmatprep.subr.bf16.mxu0 0
  %164 = vmatpush1.bf16.msra.mxu0 0
  %165 = vmatprep.subr.bf16.mxu0 0
  %166 = vmatpush1.bf16.msra.mxu0 0
  %167 = vmatprep.subr.bf16.mxu0 0
  %168 = vmatpush1.bf16.msra.mxu0 0
  %169 = vmatprep.subr.bf16.mxu0 0
  %170 = vmatpush1.bf16.msra.mxu0 0
  %171 = vmatprep.subr.bf16.mxu0 0
  %172 = vmatpush1.bf16.msra.mxu0 0
  %173 = vmatprep.subr.bf16.mxu0 0
  %174 = vmatpush1.bf16.msra.mxu0 0
  %175 = vmatprep.subr.bf16.mxu0 0
  %176 = vmatpush1.bf16.msra.mxu0 0
  %177 = vmatprep.subr.bf16.mxu0 0
  %178 = vmatpush1.bf16.msra.mxu0 0
  %179 = vmatprep.mubr.bf16.mxu0 0
  %180 = vmatmul.mubr.bf16.gmra.mrb[0].mxu0 %v132
  %v181 = vpop.f32.mrb[0].mxu0
  %v182 = vadd.f32 0.0, %v181
  %v183 = vpop.f32.mrb[0].mxu0
  %v184 = vadd.f32 0.0, %v183
  %v185 = vpop.f32.mrb[0].mxu0
  %v186 = vpop.f32.mrb[0].mxu0
  %187 = vdwg.mxu0
  %188 = vmatprep.subr.bf16.mxu0 %v97
  %189 = vmatpush1.bf16.msra.mxu0 %v96
  %190 = vmatprep.subr.bf16.mxu0 %v101
  %191 = vmatpush1.bf16.msra.mxu0 %v100
  %192 = vmatprep.subr.bf16.mxu0 %v105
  %193 = vmatpush1.bf16.msra.mxu0 %v104
  %194 = vmatprep.subr.bf16.mxu0 %v109
  %195 = vmatpush1.bf16.msra.mxu0 %v108
  %196 = vmatprep.subr.bf16.mxu0 %v145
  %197 = vmatpush1.bf16.msra.mxu0 %v142
  %198 = vmatprep.subr.bf16.mxu0 0
  %199 = vmatpush1.bf16.msra.mxu0 0
  %200 = vmatprep.subr.bf16.mxu0 0
  %201 = vmatpush1.bf16.msra.mxu0 0
  %202 = vmatprep.subr.bf16.mxu0 0
  %203 = vmatpush1.bf16.msra.mxu0 0
  %204 = vmatprep.subr.bf16.mxu0 0
  %205 = vmatpush1.bf16.msra.mxu0 0
  %206 = vmatprep.subr.bf16.mxu0 0
  %207 = vmatpush1.bf16.msra.mxu0 0
  %208 = vmatprep.subr.bf16.mxu0 0
  %209 = vmatpush1.bf16.msra.mxu0 0
  %210 = vmatprep.subr.bf16.mxu0 0
  %211 = vmatpush1.bf16.msra.mxu0 0
  %212 = vmatprep.subr.bf16.mxu0 0
  %213 = vmatpush1.bf16.msra.mxu0 0
  %214 = vmatprep.subr.bf16.mxu0 0
  %215 = vmatpush1.bf16.msra.mxu0 0
  %216 = vmatprep.subr.bf16.mxu0 0
  %217 = vmatpush1.bf16.msra.mxu0 0
  %218 = vmatprep.subr.bf16.mxu0 0
  %219 = vmatpush1.bf16.msra.mxu0 0
  %220 = vmatprep.mubr.bf16.mxu0 0
  %221 = vmatmul.mubr.bf16.gmra.mrb[0].mxu0 %v132
  %v222 = vpop.f32.mrb[0].mxu0
  %v223 = vadd.f32 0.0, %v222
  %v224 = vpop.f32.mrb[0].mxu0
  %v225 = vadd.f32 0.0, %v224
  %v226 = vpop.f32.mrb[0].mxu0
  %v227 = vpop.f32.mrb[0].mxu0
  %228 = vdwg.mxu0
  %v229 = vadd.f32 %v182, %v184
  %v230 = vadd.f32 %v229, %v223
  %v231 = vadd.f32 %v230, %v225
  %232 = vadd.xlane.f32.xlu0 %v231
  %v233 = vpop.xlane.xlu0 %232
  %v234 = vmul.f32 %v233, 0.001953125
  %v235 = vmul.f32 %v182, %v182
  %v236 = vmul.f32 %v184, %v184
  %v237 = vmul.f32 %v223, %v223
  %v238 = vmul.f32 %v225, %v225
  %v239 = vadd.f32 %v235, %v236
  %v240 = vadd.f32 %v239, %v237
  %v241 = vadd.f32 %v240, %v238
  %242 = vadd.xlane.f32.xlu0 %v241
  %v243 = vpop.xlane.xlu0 %242
  %v244 = vmul.f32 %v243, 0.001953125
  %v245 = vmul.f32 %v234, %v234
  %v246 = vsub.f32 %v244, %v245
  %v247 = vmax.f32 %v246, 0.0
  %v248 = vld [vmem:[%s2] sm:$0xff]
  %v249 = vadd.f32 %v247, 1e-05
  %v250 = vrsqrt.pop %v249
  %v251 = vmul.f32 %v248, %v250
  %v252 = vsub.f32 %v182, %v234
  %v253 = vsub.f32 %v184, %v234
  %v254 = vsub.f32 %v223, %v234
  %v255 = vsub.f32 %v225, %v234
  %257 = vset.pattern.permute.xlu0 0
  %258 = vperm.xlu0 %257, %v251
  %v259 = vpop.permute.xlu0 %258
  %v261 = vmul.f32 %v252, %v259
  %v262 = vmul.f32 %v253, %v259
  %v263 = vmul.f32 %v254, %v259
  %v264 = vmul.f32 %v255, %v259
  %v265 = vld [vmem:[%s3] sm:$0xff]
  %267 = vset.pattern.permute.xlu0 0
  %268 = vperm.xlu0 %267, %v265
  %v269 = vpop.permute.xlu0 %268
  %v271 = vadd.f32 %v261, %v269
  %v272 = vadd.f32 %v262, %v269
  %v273 = vadd.f32 %v263, %v269
  %v274 = vadd.f32 %v264, %v269
  %v275 = vld [vmem:[%s4] sm:$0xff]
  %v276 = vld [vmem:[%s4 + $0x8] sm:$0xff]
  %v277 = vunpack.c.l.bf16 %v275
  %v278 = vunpack.c.h.bf16 %v275
  %v279 = vunpack.c.l.bf16 %v276
  %v280 = vunpack.c.h.bf16 %v276
  %v281 = vadd.f32 %v271, %v277
  %v282 = vadd.f32 %v272, %v278
  %v283 = vadd.f32 %v273, %v279
  %v284 = vadd.f32 %v274, %v280
  %v285 = vpack.c.bf16 %v281, %v281
  %v286 = vpack.c.bf16 %v282, %v282
  %v287 = vpack.c.bf16 %v283, %v283
  %v288 = vpack.c.bf16 %v284, %v284
  %v293 = vunpack.c.l.b16 %v285
  %v294 = vunpack.c.l.b16 %v286
  %v295 = vunpack.c.l.b16 %v287
  %v296 = vunpack.c.l.b16 %v288
  %v297 = vpack.c.b16 %v294, %v293
  %v298 = vpack.c.b16 %v296, %v295
  %301 = vst [vmem:[%s5] sm:$0xff] %v297
  %302 = vst [vmem:[%s5 + $0x8] sm:$0xff] %v298
  // Predicated region
  $region22: #{res_model_forward.33} parent=0 // pred_check
    _
  $region23: #{res_model_forward.33} parent=0 // pred_check_branch
    %304 = sbr.rel (0) target = $region25
  $region24: #{res_model_forward.33} parent=0 // pred_region
    _
  $region25: #{res_model_forward.33} parent=0 // pred_fallthru
    _
  // Predicated region
  $region26: #{res_model_forward.33} parent=0 // pred_check
    _
  $region27: #{res_model_forward.33} parent=0 // pred_check_branch
    %306 = sbr.rel (0) target = $region29
  $region28: #{res_model_forward.33} parent=0 // pred_region
    _
  $region29: #{res_model_forward.33} parent=0 // pred_fallthru
    _

// kernel: res_model_forward.35
$region0: #{res_model_forward.35}
  #allocation0 [shape = 'u32[]', space=smem, size = 0x4, offset = 0x4, fixed_abs, tag = 'smem constant byte address 0x4 - core index']
  #allocation1 [shape = 'u32[144,128]{1,0:T(1,128)}', space=vmem, size = 0x12000, scoped, tag = 'internal scratch']
  %s0 = inlined_call_operand.vmem [shape: bf16[8,8], index: 0, kind: input, shape index: {}]
  %s1 = inlined_call_operand.vmem [shape: bf16[8,512], index: 1, kind: input, shape index: {}]
  %s2 = inlined_call_operand.vmem [shape: f32[8,1], index: 2, kind: input, shape index: {}]
  %s3 = inlined_call_operand.vmem [shape: f32[8,1], index: 3, kind: input, shape index: {}]
  %s4 = inlined_call_operand.vmem [shape: f32[8,512], index: 4, kind: input, shape index: {}]
  %s5 = inlined_call_operand.vmem [shape: bf16[8,512], index: 5, kind: output, shape index: {}]
  %s6 = sld [smem:[#allocation0]]
  $region30: #{res_model_forward.35} parent=0
    _
  %s8 = ssub.s32 1, %s6
  %s9 = scalar_select 0, %s8, %s6
  // Predicated region
  $region2: #{res_model_forward.35} parent=0 // pred_check
    _
  $region3: #{res_model_forward.35} parent=0 // pred_check_branch
    %11 = sbr.rel (0) target = $region5
  $region4: #{res_model_forward.35} parent=0 // pred_region
    _
  $region5: #{res_model_forward.35} parent=0 // pred_fallthru
    _
  // Predicated region
  $region6: #{res_model_forward.35} parent=0 // pred_check
    _
  $region7: #{res_model_forward.35} parent=0 // pred_check_branch
    %13 = sbr.rel (0) target = $region9
  $region8: #{res_model_forward.35} parent=0 // pred_region
    _
  $region9: #{res_model_forward.35} parent=0 // pred_fallthru
    _
  // Predicated region
  $region10: #{res_model_forward.35} parent=0 // pred_check
    _
  $region11: #{res_model_forward.35} parent=0 // pred_check_branch
    %15 = sbr.rel (0) target = $region13
  $region12: #{res_model_forward.35} parent=0 // pred_region
    _
  $region13: #{res_model_forward.35} parent=0 // pred_fallthru
    _
  // Predicated region
  $region14: #{res_model_forward.35} parent=0 // pred_check
    _
  $region15: #{res_model_forward.35} parent=0 // pred_check_branch
    %17 = sbr.rel (0) target = $region17
  $region16: #{res_model_forward.35} parent=0 // pred_region
    _
  $region17: #{res_model_forward.35} parent=0 // pred_fallthru
    _
  // Predicated region
  $region18: #{res_model_forward.35} parent=0 // pred_check
    _
  $region19: #{res_model_forward.35} parent=0 // pred_check_branch
    %19 = sbr.rel (0) target = $region21
  $region20: #{res_model_forward.35} parent=0 // pred_region
    _
  $region21: #{res_model_forward.35} parent=0 // pred_fallthru
    _
  %v21 = vld [vmem:[%s0] sm:$0xf]
  %v22 = vld [vmem:[%s1] sm:$0xff]
  %v23 = vld [vmem:[%s1 + $0x8] sm:$0xff]
  %v26 = vunpack.c.l.b16 %v22
  %v27 = vunpack.c.h.b16 %v22
  %v28 = vunpack.c.l.b16 %v23
  %v29 = vunpack.c.h.b16 %v23
  %v30 = vpack.c.b16 %v26, %v26
  %v31 = vpack.c.b16 %v27, %v27
  %v32 = vpack.c.b16 %v28, %v28
  %v33 = vpack.c.b16 %v29, %v29
  %vm34 = vcmask 64512
  %v36 = vsel %vm34, %v21, 0
  %vm38 = vcmask 1043456
  %v40 = vsel %vm38, %v30, 0
  %v43 = vsel %vm38, %v31, 0
  %v46 = vsel %vm38, %v32, 0
  %v49 = vsel %vm38, %v33, 0
  %51 = vmatprep.subr.bf16.mxu0 %v43
  %52 = vmatpush1.bf16.msra.mxu0 %v40
  %53 = vmatprep.subr.bf16.mxu0 0
  %54 = vmatpush1.bf16.msra.mxu0 0
  %55 = vmatprep.subr.bf16.mxu0 0
  %56 = vmatpush1.bf16.msra.mxu0 0
  %57 = vmatprep.subr.bf16.mxu0 0
  %58 = vmatpush1.bf16.msra.mxu0 0
  %59 = vmatprep.subr.bf16.mxu0 0
  %60 = vmatpush1.bf16.msra.mxu0 0
  %61 = vmatprep.subr.bf16.mxu0 0
  %62 = vmatpush1.bf16.msra.mxu0 0
  %63 = vmatprep.subr.bf16.mxu0 0
  %64 = vmatpush1.bf16.msra.mxu0 0
  %65 = vmatprep.subr.bf16.mxu0 0
  %66 = vmatpush1.bf16.msra.mxu0 0
  %67 = vmatprep.subr.bf16.mxu0 0
  %68 = vmatpush1.bf16.msra.mxu0 0
  %69 = vmatprep.subr.bf16.mxu0 0
  %70 = vmatpush1.bf16.msra.mxu0 0
  %71 = vmatprep.subr.bf16.mxu0 0
  %72 = vmatpush1.bf16.msra.mxu0 0
  %73 = vmatprep.subr.bf16.mxu0 0
  %74 = vmatpush1.bf16.msra.mxu0 0
  %75 = vmatprep.subr.bf16.mxu0 0
  %76 = vmatpush1.bf16.msra.mxu0 0
  %77 = vmatprep.subr.bf16.mxu0 0
  %78 = vmatpush1.bf16.msra.mxu0 0
  %79 = vmatprep.subr.bf16.mxu0 0
  %80 = vmatpush1.bf16.msra.mxu0 0
  %81 = vmatprep.subr.bf16.mxu0 0
  %82 = vmatpush1.bf16.msra.mxu0 0
  %83 = vmatprep.mubr.bf16.mxu0 0
  %84 = vmatmul.mubr.bf16.gmra.mrb[0].mxu0 %v36
  %v85 = vpop.f32.mrb[0].mxu0
  %v86 = vadd.f32 0.0, %v85
  %v87 = vpop.f32.mrb[0].mxu0
  %v88 = vadd.f32 0.0, %v87
  %v89 = vpop.f32.mrb[0].mxu0
  %v90 = vpop.f32.mrb[0].mxu0
  %91 = vdwg.mxu0
  %92 = vmatprep.subr.bf16.mxu0 %v49
  %93 = vmatpush1.bf16.msra.mxu0 %v46
  %94 = vmatprep.subr.bf16.mxu0 0
  %95 = vmatpush1.bf16.msra.mxu0 0
  %96 = vmatprep.subr.bf16.mxu0 0
  %97 = vmatpush1.bf16.msra.mxu0 0
  %98 = vmatprep.subr.bf16.mxu0 0
  %99 = vmatpush1.bf16.msra.mxu0 0
  %100 = vmatprep.subr.bf16.mxu0 0
  %101 = vmatpush1.bf16.msra.mxu0 0
  %102 = vmatprep.subr.bf16.mxu0 0
  %103 = vmatpush1.bf16.msra.mxu0 0
  %104 = vmatprep.subr.bf16.mxu0 0
  %105 = vmatpush1.bf16.msra.mxu0 0
  %106 = vmatprep.subr.bf16.mxu0 0
  %107 = vmatpush1.bf16.msra.mxu0 0
  %108 = vmatprep.subr.bf16.mxu0 0
  %109 = vmatpush1.bf16.msra.mxu0 0
  %110 = vmatprep.subr.bf16.mxu0 0
  %111 = vmatpush1.bf16.msra.mxu0 0
  %112 = vmatprep.subr.bf16.mxu0 0
  %113 = vmatpush1.bf16.msra.mxu0 0
  %114 = vmatprep.subr.bf16.mxu0 0
  %115 = vmatpush1.bf16.msra.mxu0 0
  %116 = vmatprep.subr.bf16.mxu0 0
  %117 = vmatpush1.bf16.msra.mxu0 0
  %118 = vmatprep.subr.bf16.mxu0 0
  %119 = vmatpush1.bf16.msra.mxu0 0
  %120 = vmatprep.subr.bf16.mxu0 0
  %121 = vmatpush1.bf16.msra.mxu0 0
  %122 = vmatprep.subr.bf16.mxu0 0
  %123 = vmatpush1.bf16.msra.mxu0 0
  %124 = vmatprep.mubr.bf16.mxu0 0
  %125 = vmatmul.mubr.bf16.gmra.mrb[0].mxu0 %v36
  %v126 = vpop.f32.mrb[0].mxu0
  %v127 = vadd.f32 0.0, %v126
  %v128 = vpop.f32.mrb[0].mxu0
  %v129 = vadd.f32 0.0, %v128
  %v130 = vpop.f32.mrb[0].mxu0
  %v131 = vpop.f32.mrb[0].mxu0
  %132 = vdwg.mxu0
  %v133 = vadd.f32 %v86, %v88
  %v134 = vadd.f32 %v133, %v127
  %v135 = vadd.f32 %v134, %v129
  %136 = vadd.xlane.f32.xlu0 %v135
  %v137 = vpop.xlane.xlu0 %136
  %v138 = vmul.f32 %v137, 0.001953125
  %v139 = vmul.f32 %v86, %v86
  %v140 = vmul.f32 %v88, %v88
  %v141 = vmul.f32 %v127, %v127
  %v142 = vmul.f32 %v129, %v129
  %v143 = vadd.f32 %v139, %v140
  %v144 = vadd.f32 %v143, %v141
  %v145 = vadd.f32 %v144, %v142
  %146 = vadd.xlane.f32.xlu0 %v145
  %v147 = vpop.xlane.xlu0 %146
  %v148 = vmul.f32 %v147, 0.001953125
  %v149 = vmul.f32 %v138, %v138
  %v150 = vsub.f32 %v148, %v149
  %v151 = vmax.f32 %v150, 0.0
  %v152 = vld [vmem:[%s2] sm:$0xff]
  %v153 = vadd.f32 %v151, 1e-05
  %v154 = vrsqrt.pop %v153
  %v155 = vmul.f32 %v152, %v154
  %v156 = vsub.f32 %v86, %v138
  %v157 = vsub.f32 %v88, %v138
  %v158 = vsub.f32 %v127, %v138
  %v159 = vsub.f32 %v129, %v138
  %161 = vset.pattern.permute.xlu0 0
  %162 = vperm.xlu0 %161, %v155
  %v163 = vpop.permute.xlu0 %162
  %v165 = vmul.f32 %v156, %v163
  %v166 = vmul.f32 %v157, %v163
  %v167 = vmul.f32 %v158, %v163
  %v168 = vmul.f32 %v159, %v163
  %v169 = vld [vmem:[%s3] sm:$0xff]
  %171 = vset.pattern.permute.xlu0 0
  %172 = vperm.xlu0 %171, %v169
  %v173 = vpop.permute.xlu0 %172
  %v175 = vadd.f32 %v165, %v173
  %v176 = vadd.f32 %v166, %v173
  %v177 = vadd.f32 %v167, %v173
  %v178 = vadd.f32 %v168, %v173
  %v179 = vld [vmem:[%s4] sm:$0xff]
  %v180 = vld [vmem:[%s4 + $0x8] sm:$0xff]
  %v181 = vld [vmem:[%s4 + $0x10] sm:$0xff]
  %v182 = vld [vmem:[%s4 + $0x18] sm:$0xff]
  %v183 = vadd.f32 %v175, %v179
  %v184 = vadd.f32 %v176, %v180
  %v185 = vadd.f32 %v177, %v181
  %v186 = vadd.f32 %v178, %v182
  %v187 = vpack.c.bf16 %v183, %v183
  %v188 = vpack.c.bf16 %v184, %v184
  %v189 = vpack.c.bf16 %v185, %v185
  %v190 = vpack.c.bf16 %v186, %v186
  %v195 = vunpack.c.l.b16 %v187
  %v196 = vunpack.c.l.b16 %v188
  %v197 = vunpack.c.l.b16 %v189
  %v198 = vunpack.c.l.b16 %v190
  %v199 = vpack.c.b16 %v196, %v195
  %v200 = vpack.c.b16 %v198, %v197
  %203 = vst [vmem:[%s5] sm:$0xff] %v199
  %204 = vst [vmem:[%s5 + $0x8] sm:$0xff] %v200
  // Predicated region
  $region22: #{res_model_forward.35} parent=0 // pred_check
    _
  $region23: #{res_model_forward.35} parent=0 // pred_check_branch
    %206 = sbr.rel (0) target = $region25
  $region24: #{res_model_forward.35} parent=0 // pred_region
    _
  $region25: #{res_model_forward.35} parent=0 // pred_fallthru
    _
  // Predicated region
  $region26: #{res_model_forward.35} parent=0 // pred_check
    _
  $region27: #{res_model_forward.35} parent=0 // pred_check_branch
    %208 = sbr.rel (0) target = $region29
  $region28: #{res_model_forward.35} parent=0 // pred_region
    _
  $region29: #{res_model_forward.35} parent=0 // pred_fallthru
    _

// kernel: res_model_forward.34
$region0: #{res_model_forward.34}
  #allocation0 [shape = 'u32[]', space=smem, size = 0x4, offset = 0x4, fixed_abs, tag = 'smem constant byte address 0x4 - core index']
  #allocation1 [shape = 'u32[144,128]{1,0:T(1,128)}', space=vmem, size = 0x12000, scoped, tag = 'internal scratch']
  %s0 = inlined_call_operand.vmem [shape: bf16[8,8], index: 0, kind: input, shape index: {}]
  %s1 = inlined_call_operand.vmem [shape: bf16[8,512], index: 1, kind: input, shape index: {}]
  %s2 = inlined_call_operand.vmem [shape: f32[8,1], index: 2, kind: input, shape index: {}]
  %s3 = inlined_call_operand.vmem [shape: f32[8,1], index: 3, kind: input, shape index: {}]
  %s4 = inlined_call_operand.vmem [shape: f32[8,512], index: 4, kind: output, shape index: {}]
  %s5 = sld [smem:[#allocation0]]
  $region26: #{res_model_forward.34} parent=0
    _
  %s7 = ssub.s32 1, %s5
  %s8 = scalar_select 0, %s7, %s5
  // Predicated region
  $region2: #{res_model_forward.34} parent=0 // pred_check
    _
  $region3: #{res_model_forward.34} parent=0 // pred_check_branch
    %10 = sbr.rel (0) target = $region5
  $region4: #{res_model_forward.34} parent=0 // pred_region
    _
  $region5: #{res_model_forward.34} parent=0 // pred_fallthru
    _
  // Predicated region
  $region6: #{res_model_forward.34} parent=0 // pred_check
    _
  $region7: #{res_model_forward.34} parent=0 // pred_check_branch
    %12 = sbr.rel (0) target = $region9
  $region8: #{res_model_forward.34} parent=0 // pred_region
    _
  $region9: #{res_model_forward.34} parent=0 // pred_fallthru
    _
  // Predicated region
  $region10: #{res_model_forward.34} parent=0 // pred_check
    _
  $region11: #{res_model_forward.34} parent=0 // pred_check_branch
    %14 = sbr.rel (0) target = $region13
  $region12: #{res_model_forward.34} parent=0 // pred_region
    _
  $region13: #{res_model_forward.34} parent=0 // pred_fallthru
    _
  // Predicated region
  $region14: #{res_model_forward.34} parent=0 // pred_check
    _
  $region15: #{res_model_forward.34} parent=0 // pred_check_branch
    %16 = sbr.rel (0) target = $region17
  $region16: #{res_model_forward.34} parent=0 // pred_region
    _
  $region17: #{res_model_forward.34} parent=0 // pred_fallthru
    _
  %v18 = vld [vmem:[%s0] sm:$0xf]
  %v19 = vld [vmem:[%s1] sm:$0xff]
  %v20 = vld [vmem:[%s1 + $0x8] sm:$0xff]
  %v23 = vunpack.c.l.b16 %v19
  %v24 = vunpack.c.h.b16 %v19
  %v25 = vunpack.c.l.b16 %v20
  %v26 = vunpack.c.h.b16 %v20
  %v27 = vpack.c.b16 %v23, %v23
  %v28 = vpack.c.b16 %v24, %v24
  %v29 = vpack.c.b16 %v25, %v25
  %v30 = vpack.c.b16 %v26, %v26
  %vm31 = vcmask 64512
  %v33 = vsel %vm31, %v18, 0
  %vm35 = vcmask 1043456
  %v37 = vsel %vm35, %v27, 0
  %v40 = vsel %vm35, %v28, 0
  %v43 = vsel %vm35, %v29, 0
  %v46 = vsel %vm35, %v30, 0
  %48 = vmatprep.subr.bf16.mxu0 %v40
  %49 = vmatpush1.bf16.msra.mxu0 %v37
  %50 = vmatprep.subr.bf16.mxu0 0
  %51 = vmatpush1.bf16.msra.mxu0 0
  %52 = vmatprep.subr.bf16.mxu0 0
  %53 = vmatpush1.bf16.msra.mxu0 0
  %54 = vmatprep.subr.bf16.mxu0 0
  %55 = vmatpush1.bf16.msra.mxu0 0
  %56 = vmatprep.subr.bf16.mxu0 0
  %57 = vmatpush1.bf16.msra.mxu0 0
  %58 = vmatprep.subr.bf16.mxu0 0
  %59 = vmatpush1.bf16.msra.mxu0 0
  %60 = vmatprep.subr.bf16.mxu0 0
  %61 = vmatpush1.bf16.msra.mxu0 0
  %62 = vmatprep.subr.bf16.mxu0 0
  %63 = vmatpush1.bf16.msra.mxu0 0
  %64 = vmatprep.subr.bf16.mxu0 0
  %65 = vmatpush1.bf16.msra.mxu0 0
  %66 = vmatprep.subr.bf16.mxu0 0
  %67 = vmatpush1.bf16.msra.mxu0 0
  %68 = vmatprep.subr.bf16.mxu0 0
  %69 = vmatpush1.bf16.msra.mxu0 0
  %70 = vmatprep.subr.bf16.mxu0 0
  %71 = vmatpush1.bf16.msra.mxu0 0
  %72 = vmatprep.subr.bf16.mxu0 0
  %73 = vmatpush1.bf16.msra.mxu0 0
  %74 = vmatprep.subr.bf16.mxu0 0
  %75 = vmatpush1.bf16.msra.mxu0 0
  %76 = vmatprep.subr.bf16.mxu0 0
  %77 = vmatpush1.bf16.msra.mxu0 0
  %78 = vmatprep.subr.bf16.mxu0 0
  %79 = vmatpush1.bf16.msra.mxu0 0
  %80 = vmatprep.mubr.bf16.mxu0 0
  %81 = vmatmul.mubr.bf16.gmra.mrb[0].mxu0 %v33
  %v82 = vpop.f32.mrb[0].mxu0
  %v83 = vadd.f32 0.0, %v82
  %v84 = vpop.f32.mrb[0].mxu0
  %v85 = vadd.f32 0.0, %v84
  %v86 = vpop.f32.mrb[0].mxu0
  %v87 = vpop.f32.mrb[0].mxu0
  %88 = vdwg.mxu0
  %89 = vmatprep.subr.bf16.mxu0 %v46
  %90 = vmatpush1.bf16.msra.mxu0 %v43
  %91 = vmatprep.subr.bf16.mxu0 0
  %92 = vmatpush1.bf16.msra.mxu0 0
  %93 = vmatprep.subr.bf16.mxu0 0
  %94 = vmatpush1.bf16.msra.mxu0 0
  %95 = vmatprep.subr.bf16.mxu0 0
  %96 = vmatpush1.bf16.msra.mxu0 0
  %97 = vmatprep.subr.bf16.mxu0 0
  %98 = vmatpush1.bf16.msra.mxu0 0
  %99 = vmatprep.subr.bf16.mxu0 0
  %100 = vmatpush1.bf16.msra.mxu0 0
  %101 = vmatprep.subr.bf16.mxu0 0
  %102 = vmatpush1.bf16.msra.mxu0 0
  %103 = vmatprep.subr.bf16.mxu0 0
  %104 = vmatpush1.bf16.msra.mxu0 0
  %105 = vmatprep.subr.bf16.mxu0 0
  %106 = vmatpush1.bf16.msra.mxu0 0
  %107 = vmatprep.subr.bf16.mxu0 0
  %108 = vmatpush1.bf16.msra.mxu0 0
  %109 = vmatprep.subr.bf16.mxu0 0
  %110 = vmatpush1.bf16.msra.mxu0 0
  %111 = vmatprep.subr.bf16.mxu0 0
  %112 = vmatpush1.bf16.msra.mxu0 0
  %113 = vmatprep.subr.bf16.mxu0 0
  %114 = vmatpush1.bf16.msra.mxu0 0
  %115 = vmatprep.subr.bf16.mxu0 0
  %116 = vmatpush1.bf16.msra.mxu0 0
  %117 = vmatprep.subr.bf16.mxu0 0
  %118 = vmatpush1.bf16.msra.mxu0 0
  %119 = vmatprep.subr.bf16.mxu0 0
  %120 = vmatpush1.bf16.msra.mxu0 0
  %121 = vmatprep.mubr.bf16.mxu0 0
  %122 = vmatmul.mubr.bf16.gmra.mrb[0].mxu0 %v33
  %v123 = vpop.f32.mrb[0].mxu0
  %v124 = vadd.f32 0.0, %v123
  %v125 = vpop.f32.mrb[0].mxu0
  %v126 = vadd.f32 0.0, %v125
  %v127 = vpop.f32.mrb[0].mxu0
  %v128 = vpop.f32.mrb[0].mxu0
  %129 = vdwg.mxu0
  %v130 = vadd.f32 %v83, %v85
  %v131 = vadd.f32 %v130, %v124
  %v132 = vadd.f32 %v131, %v126
  %133 = vadd.xlane.f32.xlu0 %v132
  %v134 = vpop.xlane.xlu0 %133
  %v135 = vmul.f32 %v134, 0.001953125
  %v136 = vmul.f32 %v83, %v83
  %v137 = vmul.f32 %v85, %v85
  %v138 = vmul.f32 %v124, %v124
  %v139 = vmul.f32 %v126, %v126
  %v140 = vadd.f32 %v136, %v137
  %v141 = vadd.f32 %v140, %v138
  %v142 = vadd.f32 %v141, %v139
  %143 = vadd.xlane.f32.xlu0 %v142
  %v144 = vpop.xlane.xlu0 %143
  %v145 = vmul.f32 %v144, 0.001953125
  %v146 = vmul.f32 %v135, %v135
  %v147 = vsub.f32 %v145, %v146
  %v148 = vmax.f32 %v147, 0.0
  %v149 = vld [vmem:[%s2] sm:$0xff]
  %v150 = vadd.f32 %v148, 1e-05
  %v151 = vrsqrt.pop %v150
  %v152 = vmul.f32 %v149, %v151
  %v153 = vsub.f32 %v83, %v135
  %v154 = vsub.f32 %v85, %v135
  %v155 = vsub.f32 %v124, %v135
  %v156 = vsub.f32 %v126, %v135
  %158 = vset.pattern.permute.xlu0 0
  %159 = vperm.xlu0 %158, %v152
  %v160 = vpop.permute.xlu0 %159
  %v162 = vmul.f32 %v153, %v160
  %v163 = vmul.f32 %v154, %v160
  %v164 = vmul.f32 %v155, %v160
  %v165 = vmul.f32 %v156, %v160
  %v166 = vld [vmem:[%s3] sm:$0xff]
  %168 = vset.pattern.permute.xlu0 0
  %169 = vperm.xlu0 %168, %v166
  %v170 = vpop.permute.xlu0 %169
  %v172 = vadd.f32 %v162, %v170
  %v173 = vadd.f32 %v163, %v170
  %v174 = vadd.f32 %v164, %v170
  %v175 = vadd.f32 %v165, %v170
  %176 = vst [vmem:[%s4] sm:$0xff] %v172
  %177 = vst [vmem:[%s4 + $0x8] sm:$0xff] %v173
  %178 = vst [vmem:[%s4 + $0x10] sm:$0xff] %v174
  %179 = vst [vmem:[%s4 + $0x18] sm:$0xff] %v175
  // Predicated region
  $region18: #{res_model_forward.34} parent=0 // pred_check
    _
  $region19: #{res_model_forward.34} parent=0 // pred_check_branch
    %181 = sbr.rel (0) target = $region21
  $region20: #{res_model_forward.34} parent=0 // pred_region
    _
  $region21: #{res_model_forward.34} parent=0 // pred_fallthru
    _
  // Predicated region
  $region22: #{res_model_forward.34} parent=0 // pred_check
    _
  $region23: #{res_model_forward.34} parent=0 // pred_check_branch
    %183 = sbr.rel (0) target = $region25
  $region24: #{res_model_forward.34} parent=0 // pred_region
    _
  $region25: #{res_model_forward.34} parent=0 // pred_fallthru
    _

// kernel: res_model_forward.47
$region0: #{res_model_forward.47}
  #allocation0 [shape = 'u32[]', space=smem, size = 0x4, offset = 0x4, fixed_abs, tag = 'smem constant byte address 0x4 - core index']
  #allocation1 [shape = 'u32[144,128]{1,0:T(1,128)}', space=vmem, size = 0x12000, scoped, tag = 'internal scratch']
  %s0 = inlined_call_operand.vmem [shape: bf16[4,72], index: 0, kind: input, shape index: {}]
  %s1 = inlined_call_operand.vmem [shape: bf16[72,512], index: 1, kind: input, shape index: {}]
  %s2 = inlined_call_operand.vmem [shape: f32[4,1], index: 2, kind: input, shape index: {}]
  %s3 = inlined_call_operand.vmem [shape: f32[4,1], index: 3, kind: input, shape index: {}]
  %s4 = inlined_call_operand.vmem [shape: f32[4,512], index: 4, kind: input, shape index: {}]
  %s5 = inlined_call_operand.vmem [shape: f32[4,512], index: 5, kind: output, shape index: {}]
  %s6 = sld [smem:[#allocation0]]
  $region30: #{res_model_forward.47} parent=0
    _
  %s8 = ssub.s32 1, %s6
  %s9 = scalar_select 0, %s8, %s6
  // Predicated region
  $region2: #{res_model_forward.47} parent=0 // pred_check
    _
  $region3: #{res_model_forward.47} parent=0 // pred_check_branch
    %11 = sbr.rel (0) target = $region5
  $region4: #{res_model_forward.47} parent=0 // pred_region
    _
  $region5: #{res_model_forward.47} parent=0 // pred_fallthru
    _
  // Predicated region
  $region6: #{res_model_forward.47} parent=0 // pred_check
    _
  $region7: #{res_model_forward.47} parent=0 // pred_check_branch
    %13 = sbr.rel (0) target = $region9
  $region8: #{res_model_forward.47} parent=0 // pred_region
    _
  $region9: #{res_model_forward.47} parent=0 // pred_fallthru
    _
  // Predicated region
  $region10: #{res_model_forward.47} parent=0 // pred_check
    _
  $region11: #{res_model_forward.47} parent=0 // pred_check_branch
    %15 = sbr.rel (0) target = $region13
  $region12: #{res_model_forward.47} parent=0 // pred_region
    _
  $region13: #{res_model_forward.47} parent=0 // pred_fallthru
    _
  // Predicated region
  $region14: #{res_model_forward.47} parent=0 // pred_check
    _
  $region15: #{res_model_forward.47} parent=0 // pred_check_branch
    %17 = sbr.rel (0) target = $region17
  $region16: #{res_model_forward.47} parent=0 // pred_region
    _
  $region17: #{res_model_forward.47} parent=0 // pred_fallthru
    _
  // Predicated region
  $region18: #{res_model_forward.47} parent=0 // pred_check
    _
  $region19: #{res_model_forward.47} parent=0 // pred_check_branch
    %19 = sbr.rel (0) target = $region21
  $region20: #{res_model_forward.47} parent=0 // pred_region
    _
  $region21: #{res_model_forward.47} parent=0 // pred_fallthru
    _
  %v21 = vld [vmem:[%s0] sm:$0x3]
  %v22 = vld [vmem:[%s1] sm:$0xff]
  %v23 = vld [vmem:[%s1 + $0x8] sm:$0xff]
  %v24 = vld [vmem:[%s1 + $0x10] sm:$0xff]
  %v25 = vld [vmem:[%s1 + $0x18] sm:$0xff]
  %v26 = vld [vmem:[%s1 + $0x20] sm:$0xff]
  %v27 = vld [vmem:[%s1 + $0x28] sm:$0xff]
  %v28 = vld [vmem:[%s1 + $0x30] sm:$0xff]
  %v29 = vld [vmem:[%s1 + $0x38] sm:$0xff]
  %v30 = vld [vmem:[%s1 + $0x40] sm:$0xff]
  %v31 = vld [vmem:[%s1 + $0x48] sm:$0xff]
  %v32 = vld [vmem:[%s1 + $0x50] sm:$0xff]
  %v33 = vld [vmem:[%s1 + $0x58] sm:$0xff]
  %v34 = vld [vmem:[%s1 + $0x60] sm:$0xff]
  %v35 = vld [vmem:[%s1 + $0x68] sm:$0xff]
  %v36 = vld [vmem:[%s1 + $0x70] sm:$0xff]
  %v37 = vld [vmem:[%s1 + $0x78] sm:$0xff]
  %v38 = vld [vmem:[%s1 + $0x80] sm:$0xff]
  %v39 = vld [vmem:[%s1 + $0x88] sm:$0xff]
  %v58 = vunpack.c.l.b16 %v22
  %v59 = vunpack.c.h.b16 %v22
  %v60 = vunpack.c.l.b16 %v23
  %v61 = vunpack.c.h.b16 %v23
  %v62 = vunpack.c.l.b16 %v24
  %v63 = vunpack.c.h.b16 %v24
  %v64 = vunpack.c.l.b16 %v25
  %v65 = vunpack.c.h.b16 %v25
  %v66 = vunpack.c.l.b16 %v26
  %v67 = vunpack.c.h.b16 %v26
  %v68 = vunpack.c.l.b16 %v27
  %v69 = vunpack.c.h.b16 %v27
  %v70 = vunpack.c.l.b16 %v28
  %v71 = vunpack.c.h.b16 %v28
  %v72 = vunpack.c.l.b16 %v29
  %v73 = vunpack.c.h.b16 %v29
  %v74 = vunpack.c.l.b16 %v30
  %v75 = vunpack.c.h.b16 %v30
  %v76 = vunpack.c.l.b16 %v31
  %v77 = vunpack.c.h.b16 %v31
  %v78 = vunpack.c.l.b16 %v32
  %v79 = vunpack.c.h.b16 %v32
  %v80 = vunpack.c.l.b16 %v33
  %v81 = vunpack.c.h.b16 %v33
  %v82 = vunpack.c.l.b16 %v34
  %v83 = vunpack.c.h.b16 %v34
  %v84 = vunpack.c.l.b16 %v35
  %v85 = vunpack.c.h.b16 %v35
  %v86 = vunpack.c.l.b16 %v36
  %v87 = vunpack.c.h.b16 %v36
  %v88 = vunpack.c.l.b16 %v37
  %v89 = vunpack.c.h.b16 %v37
  %v90 = vunpack.c.l.b16 %v38
  %v91 = vunpack.c.h.b16 %v38
  %v92 = vunpack.c.l.b16 %v39
  %v93 = vunpack.c.h.b16 %v39
  %v94 = vpack.c.b16 %v62, %v58
  %v95 = vpack.c.b16 %v63, %v59
  %v96 = vpack.c.b16 %v64, %v60
  %v97 = vpack.c.b16 %v65, %v61
  %v98 = vpack.c.b16 %v70, %v66
  %v99 = vpack.c.b16 %v71, %v67
  %v100 = vpack.c.b16 %v72, %v68
  %v101 = vpack.c.b16 %v73, %v69
  %v102 = vpack.c.b16 %v78, %v74
  %v103 = vpack.c.b16 %v79, %v75
  %v104 = vpack.c.b16 %v80, %v76
  %v105 = vpack.c.b16 %v81, %v77
  %v106 = vpack.c.b16 %v86, %v82
  %v107 = vpack.c.b16 %v87, %v83
  %v108 = vpack.c.b16 %v88, %v84
  %v109 = vpack.c.b16 %v89, %v85
  %v110 = vpack.c.b16 %v90, %v90
  %v111 = vpack.c.b16 %v91, %v91
  %v112 = vpack.c.b16 %v92, %v92
  %v113 = vpack.c.b16 %v93, %v93
  %vm130 = vcmask 588800
  %v132 = vsel %vm130, %v21, 0
  %vm134 = vcmask 1043456
  %v136 = vsel %vm134, %v110, 0
  %v139 = vsel %vm134, %v111, 0
  %v142 = vsel %vm134, %v112, 0
  %v145 = vsel %vm134, %v113, 0
  %147 = vmatprep.subr.bf16.mxu0 %v95
  %148 = vmatpush1.bf16.msra.mxu0 %v94
  %149 = vmatprep.subr.bf16.mxu0 %v99
  %150 = vmatpush1.bf16.msra.mxu0 %v98
  %151 = vmatprep.subr.bf16.mxu0 %v103
  %152 = vmatpush1.bf16.msra.mxu0 %v102
  %153 = vmatprep.subr.bf16.mxu0 %v107
  %154 = vmatpush1.bf16.msra.mxu0 %v106
  %155 = vmatprep.subr.bf16.mxu0 %v139
  %156 = vmatpush1.bf16.msra.mxu0 %v136
  %157 = vmatprep.subr.bf16.mxu0 0
  %158 = vmatpush1.bf16.msra.mxu0 0
  %159 = vmatprep.subr.bf16.mxu0 0
  %160 = vmatpush1.bf16.msra.mxu0 0
  %161 = vmatprep.subr.bf16.mxu0 0
  %162 = vmatpush1.bf16.msra.mxu0 0
  %163 = vmatprep.subr.bf16.mxu0 0
  %164 = vmatpush1.bf16.msra.mxu0 0
  %165 = vmatprep.subr.bf16.mxu0 0
  %166 = vmatpush1.bf16.msra.mxu0 0
  %167 = vmatprep.subr.bf16.mxu0 0
  %168 = vmatpush1.bf16.msra.mxu0 0
  %169 = vmatprep.subr.bf16.mxu0 0
  %170 = vmatpush1.bf16.msra.mxu0 0
  %171 = vmatprep.subr.bf16.mxu0 0
  %172 = vmatpush1.bf16.msra.mxu0 0
  %173 = vmatprep.subr.bf16.mxu0 0
  %174 = vmatpush1.bf16.msra.mxu0 0
  %175 = vmatprep.subr.bf16.mxu0 0
  %176 = vmatpush1.bf16.msra.mxu0 0
  %177 = vmatprep.subr.bf16.mxu0 0
  %178 = vmatpush1.bf16.msra.mxu0 0
  %179 = vmatprep.mubr.bf16.mxu0 0
  %180 = vmatmul.mubr.bf16.gmra.mrb[0].mxu0 %v132
  %v181 = vpop.f32.mrb[0].mxu0
  %v182 = vadd.f32 0.0, %v181
  %v183 = vpop.f32.mrb[0].mxu0
  %v184 = vadd.f32 0.0, %v183
  %v185 = vpop.f32.mrb[0].mxu0
  %v186 = vpop.f32.mrb[0].mxu0
  %187 = vdwg.mxu0
  %188 = vmatprep.subr.bf16.mxu0 %v97
  %189 = vmatpush1.bf16.msra.mxu0 %v96
  %190 = vmatprep.subr.bf16.mxu0 %v101
  %191 = vmatpush1.bf16.msra.mxu0 %v100
  %192 = vmatprep.subr.bf16.mxu0 %v105
  %193 = vmatpush1.bf16.msra.mxu0 %v104
  %194 = vmatprep.subr.bf16.mxu0 %v109
  %195 = vmatpush1.bf16.msra.mxu0 %v108
  %196 = vmatprep.subr.bf16.mxu0 %v145
  %197 = vmatpush1.bf16.msra.mxu0 %v142
  %198 = vmatprep.subr.bf16.mxu0 0
  %199 = vmatpush1.bf16.msra.mxu0 0
  %200 = vmatprep.subr.bf16.mxu0 0
  %201 = vmatpush1.bf16.msra.mxu0 0
  %202 = vmatprep.subr.bf16.mxu0 0
  %203 = vmatpush1.bf16.msra.mxu0 0
  %204 = vmatprep.subr.bf16.mxu0 0
  %205 = vmatpush1.bf16.msra.mxu0 0
  %206 = vmatprep.subr.bf16.mxu0 0
  %207 = vmatpush1.bf16.msra.mxu0 0
  %208 = vmatprep.subr.bf16.mxu0 0
  %209 = vmatpush1.bf16.msra.mxu0 0
  %210 = vmatprep.subr.bf16.mxu0 0
  %211 = vmatpush1.bf16.msra.mxu0 0
  %212 = vmatprep.subr.bf16.mxu0 0
  %213 = vmatpush1.bf16.msra.mxu0 0
  %214 = vmatprep.subr.bf16.mxu0 0
  %215 = vmatpush1.bf16.msra.mxu0 0
  %216 = vmatprep.subr.bf16.mxu0 0
  %217 = vmatpush1.bf16.msra.mxu0 0
  %218 = vmatprep.subr.bf16.mxu0 0
  %219 = vmatpush1.bf16.msra.mxu0 0
  %220 = vmatprep.mubr.bf16.mxu0 0
  %221 = vmatmul.mubr.bf16.gmra.mrb[0].mxu0 %v132
  %v222 = vpop.f32.mrb[0].mxu0
  %v223 = vadd.f32 0.0, %v222
  %v224 = vpop.f32.mrb[0].mxu0
  %v225 = vadd.f32 0.0, %v224
  %v226 = vpop.f32.mrb[0].mxu0
  %v227 = vpop.f32.mrb[0].mxu0
  %228 = vdwg.mxu0
  %v229 = vsel %vm134, %v182, 0.0
  %v230 = vsel %vm134, %v184, 0.0
  %v231 = vadd.f32 %v229, %v230
  %v232 = vsel %vm134, %v223, 0.0
  %v233 = vadd.f32 %v231, %v232
  %v234 = vsel %vm134, %v225, 0.0
  %v235 = vadd.f32 %v233, %v234
  %236 = vadd.xlane.f32.xlu0 %v235
  %v237 = vpop.xlane.xlu0 %236
  %v238 = vmul.f32 %v237, 0.001953125
  %v239 = vmul.f32 %v182, %v182
  %v240 = vmul.f32 %v184, %v184
  %v241 = vmul.f32 %v223, %v223
  %v242 = vmul.f32 %v225, %v225
  %v243 = vsel %vm134, %v239, 0.0
  %v244 = vsel %vm134, %v240, 0.0
  %v245 = vadd.f32 %v243, %v244
  %v246 = vsel %vm134, %v241, 0.0
  %v247 = vadd.f32 %v245, %v246
  %v248 = vsel %vm134, %v242, 0.0
  %v249 = vadd.f32 %v247, %v248
  %250 = vadd.xlane.f32.xlu0 %v249
  %v251 = vpop.xlane.xlu0 %250
  %v252 = vmul.f32 %v251, 0.001953125
  %v253 = vmul.f32 %v238, %v238
  %v254 = vsub.f32 %v252, %v253
  %v255 = vmax.f32 %v254, 0.0
  %v256 = vld [vmem:[%s2] sm:$0xf]
  %v257 = vadd.f32 %v255, 1e-05
  %v258 = vrsqrt.pop %v257
  %v259 = vmul.f32 %v256, %v258
  %v260 = vsub.f32 %v182, %v238
  %v261 = vsub.f32 %v184, %v238
  %v262 = vsub.f32 %v223, %v238
  %v263 = vsub.f32 %v225, %v238
  %265 = vset.pattern.permute.xlu0 0
  %266 = vperm.xlu0 %265, %v259
  %v267 = vpop.permute.xlu0 %266
  %v269 = vmul.f32 %v260, %v267
  %v270 = vmul.f32 %v261, %v267
  %v271 = vmul.f32 %v262, %v267
  %v272 = vmul.f32 %v263, %v267
  %v273 = vld [vmem:[%s3] sm:$0xf]
  %275 = vset.pattern.permute.xlu0 0
  %276 = vperm.xlu0 %275, %v273
  %v277 = vpop.permute.xlu0 %276
  %v279 = vadd.f32 %v269, %v277
  %v280 = vadd.f32 %v270, %v277
  %v281 = vadd.f32 %v271, %v277
  %v282 = vadd.f32 %v272, %v277
  %v283 = vld [vmem:[%s4] sm:$0xff]
  %v284 = vld [vmem:[%s4 + $0x8] sm:$0xff]
  %v287 = vcombine.high %v283, %v283
  %v288 = vcombine.high %v284, %v284
  %v291 = vadd.f32 %v279, %v283
  %v292 = vadd.f32 %v280, %v287
  %v293 = vadd.f32 %v281, %v284
  %v294 = vadd.f32 %v282, %v288
  %v299 = vcombine.low %v291, %v292
  %v300 = vcombine.low %v293, %v294
  %303 = vst [vmem:[%s5] sm:$0xff] %v299
  %304 = vst [vmem:[%s5 + $0x8] sm:$0xff] %v300
  // Predicated region
  $region22: #{res_model_forward.47} parent=0 // pred_check
    _
  $region23: #{res_model_forward.47} parent=0 // pred_check_branch
    %306 = sbr.rel (0) target = $region25
  $region24: #{res_model_forward.47} parent=0 // pred_region
    _
  $region25: #{res_model_forward.47} parent=0 // pred_fallthru
    _
  // Predicated region
  $region26: #{res_model_forward.47} parent=0 // pred_check
    _
  $region27: #{res_model_forward.47} parent=0 // pred_check_branch
    %308 = sbr.rel (0) target = $region29
  $region28: #{res_model_forward.47} parent=0 // pred_region
    _
  $region29: #{res_model_forward.47} parent=0 // pred_fallthru
    _

</llo_original>
